<compile_context>
chip_gen: v7x
topology: tpu7x:2x2x1
jax: 0.10.0
libtpu: 0.0.40
codegen_flags: <defaults>
</compile_context>

<pallas_src>
import functools

import numpy as np
import jax
import jax.numpy as jnp
from jax import lax
from jax.experimental import pallas as pl
from jax.experimental.pallas import tpu as pltpu

# Per-image canvas extents (lane-padded to multiples of 128).
_WA, _PA = 32, 28 * 32      # stage A canvas: 28 rows x 32 cols = 896 lanes
_WB, _PB = 16, 16 * 16      # stage B canvas: 16 rows x 16 cols = 256 lanes
_TB_MAX = 32                # images per grid step (VMEM budget for v7x)


# ------------------------------ fused kernel --------------------------------

def _model3_kernel(x_ref, w1_ref, c1_ref, w2_ref, c2_ref, w3_ref, c3_ref,
                   sel_ref, w4_ref, c4_ref, w5_ref, c5_ref, w6_ref, c6_ref,
                   w7_ref, c7_ref, gap_ref, w8_ref, o_ref, *, tb):
    f32, bf16 = jnp.float32, jnp.bfloat16
    la, lb = tb * _PA, tb * _PB

    def taps9(a, width):
        """(Cin, L) -> (9*Cin, L); rows k*Cin..k*Cin+Cin-1 hold `a` shifted
        left by di*width+dj with k = 3*di+dj.  A 128-lane zero tail supplies
        shift slack; shifted reads that leave an image only land on canvas
        positions that no downstream consumer ever reads."""
        cin, length = a.shape
        a_ext = jnp.concatenate([a, jnp.zeros((cin, 128), a.dtype)], axis=1)
        return jnp.concatenate(
            [a_ext[:, di * width + dj: di * width + dj + length]
             for di in range(3) for dj in range(3)], axis=0)

    def conv3x3(a, w_ref, c_ref, width):
        x9 = taps9(a, width).astype(bf16)                 # bf16 MXU operand
        acc = jnp.dot(w_ref[...], x9, preferred_element_type=f32)
        return jnp.maximum(acc + c_ref[...], 0.0)         # f32 epilogue

    def conv1x1(a, w_ref, c_ref):
        acc = jnp.dot(w_ref[...], a.astype(bf16), preferred_element_type=f32)
        return jnp.maximum(acc + c_ref[...], 0.0)

    # ---------------- stage A: 28x32 canvas (896 lanes / image) --------------
    x = x_ref[...]                                        # (1, la) f32
    # conv1 has Cin == 1: nine rank-1 VPU updates (K=9 matmul buys nothing).
    x_ext = jnp.concatenate([x, jnp.zeros((1, 128), f32)], axis=1)
    acc1 = None
    for di in range(3):
        for dj in range(3):
            s = di * _WA + dj
            y = w1_ref[di * 3 + dj] * x_ext[:, s:s + la]  # (8,1)*(1,la)
            acc1 = y if acc1 is None else acc1 + y
    a1 = jnp.maximum(acc1 + c1_ref[...], 0.0)             # (8,  la) valid 26x26
    a2 = conv3x3(a1, w2_ref, c2_ref, _WA)                 # (16, la) valid 24x24
    a3 = conv1x1(a2, w3_ref, c3_ref)                      # (8,  la) valid 24x24

    # -------- 2x2/2 max-pool (24x24 -> 12x12), repacked onto 16x16 -----------
    a3e = jnp.concatenate([a3, jnp.zeros((8, 128), f32)], axis=1)
    hm = jnp.maximum(jnp.maximum(a3, a3e[:, 1:1 + la]),
                     jnp.maximum(a3e[:, _WA:_WA + la],
                                 a3e[:, _WA + 1:_WA + 1 + la]))   # f32 pool max
    sel = sel_ref[...]                                    # (896, 256) 0/1 bf16
    p0 = jnp.concatenate(
        [jnp.dot(hm[:, t * _PA:(t + 1) * _PA].astype(bf16), sel,
                 preferred_element_type=f32) for t in range(tb)],
        axis=1)                                           # (8, lb) f32

    # ---------------- stage B: 16x16 canvas (256 lanes / image) --------------
    a4 = conv3x3(p0, w4_ref, c4_ref, _WB)                 # (16, lb) valid 10x10
    a5 = conv3x3(a4, w5_ref, c5_ref, _WB)                 # valid 8x8
    a6 = conv3x3(a5, w6_ref, c6_ref, _WB)                 # valid 6x6
    a7 = conv1x1(a6, w7_ref, c7_ref)                      # (16, lb) valid 6x6

    # -------- global average pool over the valid 6x6: ONE matmul -------------
    g = jnp.dot(a7, gap_ref[...], preferred_element_type=f32)    # (16, tb)

    # --------------------- 1x1 head + log-softmax ----------------------------
    logits = jnp.dot(w8_ref[...], g, preferred_element_type=f32)  # (10, tb)
    m = jnp.max(logits, axis=0, keepdims=True)
    z = logits - m
    lse = jnp.log(jnp.sum(jnp.exp(z), axis=0, keepdims=True))
    o_ref[0] = z - lse


# ------------------------------ host wrapper ---------------------------------

def _resident_spec(a):
    zeros = (0,) * a.ndim
    return pl.BlockSpec(a.shape, lambda i: zeros)


def _pool_selection():
    """(896, 256) 0/1 matrix: input pos (2r)*32 + 2c -> output pos 16r + c."""
    rr, cc = np.meshgrid(np.arange(12), np.arange(12), indexing="ij")
    sel = np.zeros((_PA, _PB), np.float32)
    sel[(2 * rr * _WA + 2 * cc).ravel(), (rr * _WB + cc).ravel()] = 1.0
    return jnp.asarray(sel, jnp.bfloat16)                 # 0/1 is exact in bf16


def _gap_matrix(tb):
    """(tb*256, tb): 1/36 on the valid 6x6 pixels of image t, else 0."""
    rr, cc = np.meshgrid(np.arange(6), np.arange(6), indexing="ij")
    pix = (rr * _WB + cc).ravel()
    gap = np.zeros((tb * _PB, tb), np.float32)
    for t in range(tb):
        gap[t * _PB + pix, t] = 1.0 / 36.0
    return jnp.asarray(gap)


@jax.jit
def model3_forward(packed, x):
    n, c, hh, ww = x.shape
    assert (c, hh, ww) == (1, 28, 28), "Model_3 expects (N, 1, 28, 28) inputs"
    tb = min(n, _TB_MAX)
    npad = -(-n // tb) * tb
    steps = npad // tb

    # pad cols 28->32 (896 = 7*128 lanes per image), pad batch, flatten to
    # channel-major (1, npad*896).
    xp = jnp.pad(x, ((0, npad - n), (0, 0), (0, 0), (0, _WA - 28)))
    x_cm = xp.reshape(1, npad * _PA)

    sel = _pool_selection()
    gap = _gap_matrix(tb)

    args = [x_cm,
            packed["w1"], packed["c1"], packed["w2"], packed["c2"],
            packed["w3"], packed["c3"], sel,
            packed["w4"], packed["c4"], packed["w5"], packed["c5"],
            packed["w6"], packed["c6"], packed["w7"], packed["c7"],
            gap, packed["w8"]]

    in_specs = ([pl.BlockSpec((1, tb * _PA), lambda i: (0, i))]
                + [_resident_spec(a) for a in args[1:]])

    out = pl.pallas_call(
        functools.partial(_model3_kernel, tb=tb),
        out_shape=jax.ShapeDtypeStruct((steps, 10, tb), jnp.float32),
        grid=(steps,),
        in_specs=in_specs,
        out_specs=pl.BlockSpec((1, 10, tb), lambda i: (i, 0, 0)),
        compiler_params=pltpu.CompilerParams(
            dimension_semantics=("parallel",)),
    )(*args)
    out = jnp.moveaxis(out, 0, 1).reshape(10, npad)        # (10, npad)
    return out[:, :n].T                                    # (N, 10)


def pack_params(params, eps=1e-5, mm_dtype=jnp.bfloat16):
    """Fold eval-mode BatchNorm into the conv weights and pack for the kernel:
      conv1 (Cin=1) -> (9, 8, 1) f32 broadcast taps;
      other 3x3     -> (Cout, 9*Cin) bf16, column k*Cin + ci with k = 3*di+dj;
      1x1           -> (Cout, Cin) bf16;
      folded biases -> (Cout, 1) f32; head -> (10, 16) f32."""
    def fold(w, bn):
        g, b, m, v = bn
        s = g / jnp.sqrt(v + eps)
        return w * s[:, None, None, None], (b - m * s)

    packed = {}
    w, bias = fold(params["w1"], params["bn1"])
    packed["w1"] = jnp.transpose(w, (2, 3, 0, 1)).reshape(9, 8, 1)
    packed["c1"] = bias.reshape(8, 1)
    for idx, kind in ((2, "3x3"), (3, "1x1"), (4, "3x3"),
                      (5, "3x3"), (6, "3x3"), (7, "1x1")):
        w, bias = fold(params[f"w{idx}"], params[f"bn{idx}"])
        cout, cin = w.shape[0], w.shape[1]
        if kind == "3x3":
            wk = jnp.transpose(w, (0, 2, 3, 1)).reshape(cout, 9 * cin)
        else:
            wk = w.reshape(cout, cin)
        packed[f"w{idx}"] = wk.astype(mm_dtype)
        packed[f"c{idx}"] = bias.reshape(cout, 1)
    packed["w8"] = params["w8"].reshape(10, 16)
    return packed


# ------------------------- pure-JAX reference (check) ------------------------

@jax.jit
def reference_forward(params, x, eps=1e-5):
    def conv(h, w):
        return lax.conv_general_dilated(
            h, w, window_strides=(1, 1), padding="VALID",
            dimension_numbers=("NCHW", "OIHW", "NCHW"),
            precision=lax.Precision.HIGHEST)

    def bn_relu(h, bn):
        g, b, m, v = bn
        s = (g / jnp.sqrt(v + eps))[None, :, None, None]
        h = (h - m[None, :, None, None]) * s + b[None, :, None, None]
        return jax.nn.relu(h)

    h = bn_relu(conv(x, params["w1"]), params["bn1"])
    h = bn_relu(conv(h, params["w2"]), params["bn2"])
    h = bn_relu(conv(h, params["w3"]), params["bn3"])
    h = lax.reduce_window(h, -jnp.inf, lax.max,
                          (1, 1, 2, 2), (1, 1, 2, 2), "VALID")
    h = bn_relu(conv(h, params["w4"]), params["bn4"])
    h = bn_relu(conv(h, params["w5"]), params["bn5"])
    h = bn_relu(conv(h, params["w6"]), params["bn6"])
    h = bn_relu(conv(h, params["w7"]), params["bn7"])
    h = jnp.mean(h, axis=(2, 3), keepdims=True)            # AvgPool2d(6) on 6x6
    h = conv(h, params["w8"]).reshape(-1, 10)
    return jax.nn.log_softmax(h, axis=-1)


# --------------------------------- params ------------------------------------

def init_params(key):
    def conv_w(k, cout, cin, kh, kw):
        fan_in = cin * kh * kw
        return (jax.random.normal(k, (cout, cin, kh, kw), jnp.float32)
                * jnp.sqrt(2.0 / fan_in))

    def bn_p(k, c):
        k1, k2, k3, k4 = jax.random.split(k, 4)
        gamma = jax.random.uniform(k1, (c,), jnp.float32, 0.5, 1.5)
        beta = 0.1 * jax.random.normal(k2, (c,), jnp.float32)
        mean = 0.1 * jax.random.normal(k3, (c,), jnp.float32)
        var = jax.random.uniform(k4, (c,), jnp.float32, 0.5, 1.5)
        return (gamma, beta, mean, var)

    keys = jax.random.split(key, 16)
    shapes = [(8, 1), (16, 8), (8, 16), (16, 8), (16, 16), (16, 16), (16, 16)]
    ksz = [3, 3, 1, 3, 3, 3, 1]
    params = {}
    for i, ((co, ci), ks) in enumerate(zip(shapes, ksz), start=1):
        params[f"w{i}"] = conv_w(keys[2 * (i - 1)], co, ci, ks, ks)
        params[f"bn{i}"] = bn_p(keys[2 * (i - 1) + 1], co)
    params["w8"] = conv_w(keys[14], 10, 16, 1, 1)
    return params


# ----------------------------------- main -------------------------------------

if __name__ == "__main__":
    root = jax.random.PRNGKey(0)
    pkey, xkey = jax.random.split(root)
    params = init_params(pkey)
    packed = pack_params(params)          # one-time BN fold / weight repack

    # 28x28 single-channel input so the AvgPool2d(6) sees a 6x6 map.
    x = jax.random.normal(xkey, (2, 1, 28, 28), jnp.float32)

    out = jax.block_until_ready(model3_forward(packed, x))
    assert out.shape == (2, 10)

    # log-softmax rows must normalize in probability space.
    assert bool(jnp.allclose(jnp.sum(jnp.exp(out), axis=-1), 1.0, atol=1e-4))

    # Compare against the plain-JAX/XLA f32 reference.  The kernel uses bf16
    # MXU operands (f32 accumulate + f32 epilogue), so allow up to 1e-1 max
    # abs error in log-prob space (expected ~1e-2).
    ref = reference_forward(params, x)
    err = float(jnp.max(jnp.abs(out - ref)))
    assert err < 1e-1, f"kernel/reference mismatch: max abs err {err}"

    print("KERNEL_OK")
</pallas_src>

<mosaic_0001>
module attributes {stable_mosaic.version = 11 : i64} {
  func.func @_model3_kernel(%arg0: i32, %arg1: memref<1x1792xf32, #tpu.memory_space<vmem>>, %arg2: memref<9x8x1xf32, #tpu.memory_space<vmem>>, %arg3: memref<8x1xf32, #tpu.memory_space<vmem>>, %arg4: memref<16x72xbf16, #tpu.memory_space<vmem>>, %arg5: memref<16x1xf32, #tpu.memory_space<vmem>>, %arg6: memref<8x16xbf16, #tpu.memory_space<vmem>>, %arg7: memref<8x1xf32, #tpu.memory_space<vmem>>, %arg8: memref<896x256xbf16, #tpu.memory_space<vmem>>, %arg9: memref<16x72xbf16, #tpu.memory_space<vmem>>, %arg10: memref<16x1xf32, #tpu.memory_space<vmem>>, %arg11: memref<16x144xbf16, #tpu.memory_space<vmem>>, %arg12: memref<16x1xf32, #tpu.memory_space<vmem>>, %arg13: memref<16x144xbf16, #tpu.memory_space<vmem>>, %arg14: memref<16x1xf32, #tpu.memory_space<vmem>>, %arg15: memref<16x16xbf16, #tpu.memory_space<vmem>>, %arg16: memref<16x1xf32, #tpu.memory_space<vmem>>, %arg17: memref<512x2xf32, #tpu.memory_space<vmem>>, %arg18: memref<10x16xf32, #tpu.memory_space<vmem>>, %arg19: memref<1x10x2xf32, #tpu.memory_space<vmem>>) attributes {dimension_semantics = [#tpu.dimension_semantics<parallel>], iteration_bounds = array<i64: 1>, scalar_prefetch = 0 : i64, scratch_operands = 0 : i64, tpu.core_type = #tpu.core_type<tc>, window_params = [{transform_indices = @transform_0, window_bounds = array<i64: 1, 1792>}, {pipeline_mode = #tpu.pipeline_mode<synchronous>, transform_indices = @transform_1, window_bounds = array<i64: 9, 8, 1>}, {pipeline_mode = #tpu.pipeline_mode<synchronous>, transform_indices = @transform_2, window_bounds = array<i64: 8, 1>}, {pipeline_mode = #tpu.pipeline_mode<synchronous>, transform_indices = @transform_3, window_bounds = array<i64: 16, 72>}, {pipeline_mode = #tpu.pipeline_mode<synchronous>, transform_indices = @transform_4, window_bounds = array<i64: 16, 1>}, {pipeline_mode = #tpu.pipeline_mode<synchronous>, transform_indices = @transform_5, window_bounds = array<i64: 8, 16>}, {pipeline_mode = #tpu.pipeline_mode<synchronous>, transform_indices = @transform_6, window_bounds = array<i64: 8, 1>}, {pipeline_mode = #tpu.pipeline_mode<synchronous>, transform_indices = @transform_7, window_bounds = array<i64: 896, 256>}, {pipeline_mode = #tpu.pipeline_mode<synchronous>, transform_indices = @transform_8, window_bounds = array<i64: 16, 72>}, {pipeline_mode = #tpu.pipeline_mode<synchronous>, transform_indices = @transform_9, window_bounds = array<i64: 16, 1>}, {pipeline_mode = #tpu.pipeline_mode<synchronous>, transform_indices = @transform_10, window_bounds = array<i64: 16, 144>}, {pipeline_mode = #tpu.pipeline_mode<synchronous>, transform_indices = @transform_11, window_bounds = array<i64: 16, 1>}, {pipeline_mode = #tpu.pipeline_mode<synchronous>, transform_indices = @transform_12, window_bounds = array<i64: 16, 144>}, {pipeline_mode = #tpu.pipeline_mode<synchronous>, transform_indices = @transform_13, window_bounds = array<i64: 16, 1>}, {pipeline_mode = #tpu.pipeline_mode<synchronous>, transform_indices = @transform_14, window_bounds = array<i64: 16, 16>}, {pipeline_mode = #tpu.pipeline_mode<synchronous>, transform_indices = @transform_15, window_bounds = array<i64: 16, 1>}, {pipeline_mode = #tpu.pipeline_mode<synchronous>, transform_indices = @transform_16, window_bounds = array<i64: 512, 2>}, {pipeline_mode = #tpu.pipeline_mode<synchronous>, transform_indices = @transform_17, window_bounds = array<i64: 10, 16>}, {transform_indices = @transform_18, window_bounds = array<i64: 1, 10, 2>}]} {
    %c0 = arith.constant 0 : index
    %c0_0 = arith.constant 0 : index
    %0 = vector.load %arg1[%c0, %c0_0] : memref<1x1792xf32, #tpu.memory_space<vmem>>, vector<1x1792xf32>
    %cst = arith.constant 0.000000e+00 : f32
    %1 = vector.broadcast %cst : f32 to vector<1x128xf32>
    %2 = tpu.concatenate %0, %1 in 1 : vector<1x1792xf32>, vector<1x128xf32> -> vector<1x1920xf32>
    %c0_1 = arith.constant 0 : index
    %c0_2 = arith.constant 0 : index
    %c0_3 = arith.constant 0 : index
    %3 = vector.load %arg2[%c0_1, %c0_2, %c0_3] : memref<9x8x1xf32, #tpu.memory_space<vmem>>, vector<1x8x1xf32>
    %4 = vector.shape_cast %3 : vector<1x8x1xf32> to vector<8x1xf32>
    %5 = vector.extract_strided_slice %2 {offsets = [0, 0], sizes = [1, 1792], strides = [1, 1]} : vector<1x1920xf32> to vector<1x1792xf32>
    %6 = vector.broadcast %4 : vector<8x1xf32> to vector<8x1792xf32>
    %7 = vector.broadcast %5 : vector<1x1792xf32> to vector<8x1792xf32>
    %8 = arith.mulf %6, %7 : vector<8x1792xf32>
    %c1 = arith.constant 1 : index
    %c0_4 = arith.constant 0 : index
    %c0_5 = arith.constant 0 : index
    %9 = vector.load %arg2[%c1, %c0_4, %c0_5] : memref<9x8x1xf32, #tpu.memory_space<vmem>>, vector<1x8x1xf32>
    %10 = vector.shape_cast %9 : vector<1x8x1xf32> to vector<8x1xf32>
    %11 = vector.extract_strided_slice %2 {offsets = [0, 1], sizes = [1, 1792], strides = [1, 1]} : vector<1x1920xf32> to vector<1x1792xf32>
    %12 = vector.broadcast %10 : vector<8x1xf32> to vector<8x1792xf32>
    %13 = vector.broadcast %11 : vector<1x1792xf32> to vector<8x1792xf32>
    %14 = arith.mulf %12, %13 : vector<8x1792xf32>
    %15 = arith.addf %8, %14 : vector<8x1792xf32>
    %c2 = arith.constant 2 : index
    %c0_6 = arith.constant 0 : index
    %c0_7 = arith.constant 0 : index
    %16 = vector.load %arg2[%c2, %c0_6, %c0_7] : memref<9x8x1xf32, #tpu.memory_space<vmem>>, vector<1x8x1xf32>
    %17 = vector.shape_cast %16 : vector<1x8x1xf32> to vector<8x1xf32>
    %18 = vector.extract_strided_slice %2 {offsets = [0, 2], sizes = [1, 1792], strides = [1, 1]} : vector<1x1920xf32> to vector<1x1792xf32>
    %19 = vector.broadcast %17 : vector<8x1xf32> to vector<8x1792xf32>
    %20 = vector.broadcast %18 : vector<1x1792xf32> to vector<8x1792xf32>
    %21 = arith.mulf %19, %20 : vector<8x1792xf32>
    %22 = arith.addf %15, %21 : vector<8x1792xf32>
    %c3 = arith.constant 3 : index
    %c0_8 = arith.constant 0 : index
    %c0_9 = arith.constant 0 : index
    %23 = vector.load %arg2[%c3, %c0_8, %c0_9] : memref<9x8x1xf32, #tpu.memory_space<vmem>>, vector<1x8x1xf32>
    %24 = vector.shape_cast %23 : vector<1x8x1xf32> to vector<8x1xf32>
    %25 = vector.extract_strided_slice %2 {offsets = [0, 32], sizes = [1, 1792], strides = [1, 1]} : vector<1x1920xf32> to vector<1x1792xf32>
    %26 = vector.broadcast %24 : vector<8x1xf32> to vector<8x1792xf32>
    %27 = vector.broadcast %25 : vector<1x1792xf32> to vector<8x1792xf32>
    %28 = arith.mulf %26, %27 : vector<8x1792xf32>
    %29 = arith.addf %22, %28 : vector<8x1792xf32>
    %c4 = arith.constant 4 : index
    %c0_10 = arith.constant 0 : index
    %c0_11 = arith.constant 0 : index
    %30 = vector.load %arg2[%c4, %c0_10, %c0_11] : memref<9x8x1xf32, #tpu.memory_space<vmem>>, vector<1x8x1xf32>
    %31 = vector.shape_cast %30 : vector<1x8x1xf32> to vector<8x1xf32>
    %32 = vector.extract_strided_slice %2 {offsets = [0, 33], sizes = [1, 1792], strides = [1, 1]} : vector<1x1920xf32> to vector<1x1792xf32>
    %33 = vector.broadcast %31 : vector<8x1xf32> to vector<8x1792xf32>
    %34 = vector.broadcast %32 : vector<1x1792xf32> to vector<8x1792xf32>
    %35 = arith.mulf %33, %34 : vector<8x1792xf32>
    %36 = arith.addf %29, %35 : vector<8x1792xf32>
    %c5 = arith.constant 5 : index
    %c0_12 = arith.constant 0 : index
    %c0_13 = arith.constant 0 : index
    %37 = vector.load %arg2[%c5, %c0_12, %c0_13] : memref<9x8x1xf32, #tpu.memory_space<vmem>>, vector<1x8x1xf32>
    %38 = vector.shape_cast %37 : vector<1x8x1xf32> to vector<8x1xf32>
    %39 = vector.extract_strided_slice %2 {offsets = [0, 34], sizes = [1, 1792], strides = [1, 1]} : vector<1x1920xf32> to vector<1x1792xf32>
    %40 = vector.broadcast %38 : vector<8x1xf32> to vector<8x1792xf32>
    %41 = vector.broadcast %39 : vector<1x1792xf32> to vector<8x1792xf32>
    %42 = arith.mulf %40, %41 : vector<8x1792xf32>
    %43 = arith.addf %36, %42 : vector<8x1792xf32>
    %c6 = arith.constant 6 : index
    %c0_14 = arith.constant 0 : index
    %c0_15 = arith.constant 0 : index
    %44 = vector.load %arg2[%c6, %c0_14, %c0_15] : memref<9x8x1xf32, #tpu.memory_space<vmem>>, vector<1x8x1xf32>
    %45 = vector.shape_cast %44 : vector<1x8x1xf32> to vector<8x1xf32>
    %46 = vector.extract_strided_slice %2 {offsets = [0, 64], sizes = [1, 1792], strides = [1, 1]} : vector<1x1920xf32> to vector<1x1792xf32>
    %47 = vector.broadcast %45 : vector<8x1xf32> to vector<8x1792xf32>
    %48 = vector.broadcast %46 : vector<1x1792xf32> to vector<8x1792xf32>
    %49 = arith.mulf %47, %48 : vector<8x1792xf32>
    %50 = arith.addf %43, %49 : vector<8x1792xf32>
    %c7 = arith.constant 7 : index
    %c0_16 = arith.constant 0 : index
    %c0_17 = arith.constant 0 : index
    %51 = vector.load %arg2[%c7, %c0_16, %c0_17] : memref<9x8x1xf32, #tpu.memory_space<vmem>>, vector<1x8x1xf32>
    %52 = vector.shape_cast %51 : vector<1x8x1xf32> to vector<8x1xf32>
    %53 = vector.extract_strided_slice %2 {offsets = [0, 65], sizes = [1, 1792], strides = [1, 1]} : vector<1x1920xf32> to vector<1x1792xf32>
    %54 = vector.broadcast %52 : vector<8x1xf32> to vector<8x1792xf32>
    %55 = vector.broadcast %53 : vector<1x1792xf32> to vector<8x1792xf32>
    %56 = arith.mulf %54, %55 : vector<8x1792xf32>
    %57 = arith.addf %50, %56 : vector<8x1792xf32>
    %c8 = arith.constant 8 : index
    %c0_18 = arith.constant 0 : index
    %c0_19 = arith.constant 0 : index
    %58 = vector.load %arg2[%c8, %c0_18, %c0_19] : memref<9x8x1xf32, #tpu.memory_space<vmem>>, vector<1x8x1xf32>
    %59 = vector.shape_cast %58 : vector<1x8x1xf32> to vector<8x1xf32>
    %60 = vector.extract_strided_slice %2 {offsets = [0, 66], sizes = [1, 1792], strides = [1, 1]} : vector<1x1920xf32> to vector<1x1792xf32>
    %61 = vector.broadcast %59 : vector<8x1xf32> to vector<8x1792xf32>
    %62 = vector.broadcast %60 : vector<1x1792xf32> to vector<8x1792xf32>
    %63 = arith.mulf %61, %62 : vector<8x1792xf32>
    %64 = arith.addf %57, %63 : vector<8x1792xf32>
    %c0_20 = arith.constant 0 : index
    %c0_21 = arith.constant 0 : index
    %65 = vector.load %arg3[%c0_20, %c0_21] : memref<8x1xf32, #tpu.memory_space<vmem>>, vector<8x1xf32>
    %66 = vector.broadcast %65 : vector<8x1xf32> to vector<8x1792xf32>
    %67 = arith.addf %64, %66 : vector<8x1792xf32>
    %cst_22 = arith.constant 0.000000e+00 : f32
    %68 = vector.broadcast %cst_22 : f32 to vector<8x1792xf32>
    %69 = arith.maximumf %67, %68 : vector<8x1792xf32>
    %cst_23 = arith.constant 0.000000e+00 : f32
    %70 = vector.broadcast %cst_23 : f32 to vector<8x128xf32>
    %71 = tpu.concatenate %69, %70 in 1 : vector<8x1792xf32>, vector<8x128xf32> -> vector<8x1920xf32>
    %72 = vector.extract_strided_slice %71 {offsets = [0, 0], sizes = [8, 1792], strides = [1, 1]} : vector<8x1920xf32> to vector<8x1792xf32>
    %73 = vector.extract_strided_slice %71 {offsets = [0, 1], sizes = [8, 1792], strides = [1, 1]} : vector<8x1920xf32> to vector<8x1792xf32>
    %74 = vector.extract_strided_slice %71 {offsets = [0, 2], sizes = [8, 1792], strides = [1, 1]} : vector<8x1920xf32> to vector<8x1792xf32>
    %75 = vector.extract_strided_slice %71 {offsets = [0, 32], sizes = [8, 1792], strides = [1, 1]} : vector<8x1920xf32> to vector<8x1792xf32>
    %76 = vector.extract_strided_slice %71 {offsets = [0, 33], sizes = [8, 1792], strides = [1, 1]} : vector<8x1920xf32> to vector<8x1792xf32>
    %77 = vector.extract_strided_slice %71 {offsets = [0, 34], sizes = [8, 1792], strides = [1, 1]} : vector<8x1920xf32> to vector<8x1792xf32>
    %78 = vector.extract_strided_slice %71 {offsets = [0, 64], sizes = [8, 1792], strides = [1, 1]} : vector<8x1920xf32> to vector<8x1792xf32>
    %79 = vector.extract_strided_slice %71 {offsets = [0, 65], sizes = [8, 1792], strides = [1, 1]} : vector<8x1920xf32> to vector<8x1792xf32>
    %80 = vector.extract_strided_slice %71 {offsets = [0, 66], sizes = [8, 1792], strides = [1, 1]} : vector<8x1920xf32> to vector<8x1792xf32>
    %81 = tpu.concatenate %72, %73, %74, %75, %76, %77, %78, %79, %80 in 0 : vector<8x1792xf32>, vector<8x1792xf32>, vector<8x1792xf32>, vector<8x1792xf32>, vector<8x1792xf32>, vector<8x1792xf32>, vector<8x1792xf32>, vector<8x1792xf32>, vector<8x1792xf32> -> vector<72x1792xf32>
    %82 = arith.truncf %81 : vector<72x1792xf32> to vector<72x1792xbf16>
    %c0_24 = arith.constant 0 : index
    %c0_25 = arith.constant 0 : index
    %83 = vector.load %arg4[%c0_24, %c0_25] : memref<16x72xbf16, #tpu.memory_space<vmem>>, vector<16x72xbf16>
    %cst_26 = arith.constant dense<0.000000e+00> : vector<16x1792xf32>
    %84 = tpu.matmul %83, %82, %cst_26 {dimension_numbers = #tpu.dot_dimension_numbers<[1], [0], [0], [1], [0, 0, 1, 1], [], []>} : vector<16x72xbf16>, vector<72x1792xbf16>, vector<16x1792xf32> -> vector<16x1792xf32>
    %c0_27 = arith.constant 0 : index
    %c0_28 = arith.constant 0 : index
    %85 = vector.load %arg5[%c0_27, %c0_28] : memref<16x1xf32, #tpu.memory_space<vmem>>, vector<16x1xf32>
    %86 = vector.broadcast %85 : vector<16x1xf32> to vector<16x1792xf32>
    %87 = arith.addf %84, %86 : vector<16x1792xf32>
    %cst_29 = arith.constant 0.000000e+00 : f32
    %88 = vector.broadcast %cst_29 : f32 to vector<16x1792xf32>
    %89 = arith.maximumf %87, %88 : vector<16x1792xf32>
    %c0_30 = arith.constant 0 : index
    %c0_31 = arith.constant 0 : index
    %90 = vector.load %arg6[%c0_30, %c0_31] : memref<8x16xbf16, #tpu.memory_space<vmem>>, vector<8x16xbf16>
    %91 = arith.truncf %89 : vector<16x1792xf32> to vector<16x1792xbf16>
    %cst_32 = arith.constant dense<0.000000e+00> : vector<8x1792xf32>
    %92 = tpu.matmul %90, %91, %cst_32 {dimension_numbers = #tpu.dot_dimension_numbers<[1], [0], [0], [1], [0, 0, 1, 1], [], []>} : vector<8x16xbf16>, vector<16x1792xbf16>, vector<8x1792xf32> -> vector<8x1792xf32>
    %c0_33 = arith.constant 0 : index
    %c0_34 = arith.constant 0 : index
    %93 = vector.load %arg7[%c0_33, %c0_34] : memref<8x1xf32, #tpu.memory_space<vmem>>, vector<8x1xf32>
    %94 = vector.broadcast %93 : vector<8x1xf32> to vector<8x1792xf32>
    %95 = arith.addf %92, %94 : vector<8x1792xf32>
    %cst_35 = arith.constant 0.000000e+00 : f32
    %96 = vector.broadcast %cst_35 : f32 to vector<8x1792xf32>
    %97 = arith.maximumf %95, %96 : vector<8x1792xf32>
    %cst_36 = arith.constant 0.000000e+00 : f32
    %98 = vector.broadcast %cst_36 : f32 to vector<8x128xf32>
    %99 = tpu.concatenate %97, %98 in 1 : vector<8x1792xf32>, vector<8x128xf32> -> vector<8x1920xf32>
    %100 = vector.extract_strided_slice %99 {offsets = [0, 1], sizes = [8, 1792], strides = [1, 1]} : vector<8x1920xf32> to vector<8x1792xf32>
    %101 = arith.maximumf %97, %100 : vector<8x1792xf32>
    %102 = vector.extract_strided_slice %99 {offsets = [0, 32], sizes = [8, 1792], strides = [1, 1]} : vector<8x1920xf32> to vector<8x1792xf32>
    %103 = vector.extract_strided_slice %99 {offsets = [0, 33], sizes = [8, 1792], strides = [1, 1]} : vector<8x1920xf32> to vector<8x1792xf32>
    %104 = arith.maximumf %102, %103 : vector<8x1792xf32>
    %105 = arith.maximumf %101, %104 : vector<8x1792xf32>
    %c0_37 = arith.constant 0 : index
    %c0_38 = arith.constant 0 : index
    %106 = vector.load %arg8[%c0_37, %c0_38] : memref<896x256xbf16, #tpu.memory_space<vmem>>, vector<896x256xbf16>
    %107 = vector.extract_strided_slice %105 {offsets = [0, 0], sizes = [8, 896], strides = [1, 1]} : vector<8x1792xf32> to vector<8x896xf32>
    %108 = arith.truncf %107 : vector<8x896xf32> to vector<8x896xbf16>
    %cst_39 = arith.constant dense<0.000000e+00> : vector<8x256xf32>
    %109 = tpu.matmul %108, %106, %cst_39 {dimension_numbers = #tpu.dot_dimension_numbers<[1], [0], [0], [1], [0, 0, 1, 1], [], []>} : vector<8x896xbf16>, vector<896x256xbf16>, vector<8x256xf32> -> vector<8x256xf32>
    %110 = vector.extract_strided_slice %105 {offsets = [0, 896], sizes = [8, 896], strides = [1, 1]} : vector<8x1792xf32> to vector<8x896xf32>
    %111 = arith.truncf %110 : vector<8x896xf32> to vector<8x896xbf16>
    %cst_40 = arith.constant dense<0.000000e+00> : vector<8x256xf32>
    %112 = tpu.matmul %111, %106, %cst_40 {dimension_numbers = #tpu.dot_dimension_numbers<[1], [0], [0], [1], [0, 0, 1, 1], [], []>} : vector<8x896xbf16>, vector<896x256xbf16>, vector<8x256xf32> -> vector<8x256xf32>
    %113 = tpu.concatenate %109, %112 in 1 : vector<8x256xf32>, vector<8x256xf32> -> vector<8x512xf32>
    %cst_41 = arith.constant 0.000000e+00 : f32
    %114 = vector.broadcast %cst_41 : f32 to vector<8x128xf32>
    %115 = tpu.concatenate %113, %114 in 1 : vector<8x512xf32>, vector<8x128xf32> -> vector<8x640xf32>
    %116 = vector.extract_strided_slice %115 {offsets = [0, 0], sizes = [8, 512], strides = [1, 1]} : vector<8x640xf32> to vector<8x512xf32>
    %117 = vector.extract_strided_slice %115 {offsets = [0, 1], sizes = [8, 512], strides = [1, 1]} : vector<8x640xf32> to vector<8x512xf32>
    %118 = vector.extract_strided_slice %115 {offsets = [0, 2], sizes = [8, 512], strides = [1, 1]} : vector<8x640xf32> to vector<8x512xf32>
    %119 = vector.extract_strided_slice %115 {offsets = [0, 16], sizes = [8, 512], strides = [1, 1]} : vector<8x640xf32> to vector<8x512xf32>
    %120 = vector.extract_strided_slice %115 {offsets = [0, 17], sizes = [8, 512], strides = [1, 1]} : vector<8x640xf32> to vector<8x512xf32>
    %121 = vector.extract_strided_slice %115 {offsets = [0, 18], sizes = [8, 512], strides = [1, 1]} : vector<8x640xf32> to vector<8x512xf32>
    %122 = vector.extract_strided_slice %115 {offsets = [0, 32], sizes = [8, 512], strides = [1, 1]} : vector<8x640xf32> to vector<8x512xf32>
    %123 = vector.extract_strided_slice %115 {offsets = [0, 33], sizes = [8, 512], strides = [1, 1]} : vector<8x640xf32> to vector<8x512xf32>
    %124 = vector.extract_strided_slice %115 {offsets = [0, 34], sizes = [8, 512], strides = [1, 1]} : vector<8x640xf32> to vector<8x512xf32>
    %125 = tpu.concatenate %116, %117, %118, %119, %120, %121, %122, %123, %124 in 0 : vector<8x512xf32>, vector<8x512xf32>, vector<8x512xf32>, vector<8x512xf32>, vector<8x512xf32>, vector<8x512xf32>, vector<8x512xf32>, vector<8x512xf32>, vector<8x512xf32> -> vector<72x512xf32>
    %126 = arith.truncf %125 : vector<72x512xf32> to vector<72x512xbf16>
    %c0_42 = arith.constant 0 : index
    %c0_43 = arith.constant 0 : index
    %127 = vector.load %arg9[%c0_42, %c0_43] : memref<16x72xbf16, #tpu.memory_space<vmem>>, vector<16x72xbf16>
    %cst_44 = arith.constant dense<0.000000e+00> : vector<16x512xf32>
    %128 = tpu.matmul %127, %126, %cst_44 {dimension_numbers = #tpu.dot_dimension_numbers<[1], [0], [0], [1], [0, 0, 1, 1], [], []>} : vector<16x72xbf16>, vector<72x512xbf16>, vector<16x512xf32> -> vector<16x512xf32>
    %c0_45 = arith.constant 0 : index
    %c0_46 = arith.constant 0 : index
    %129 = vector.load %arg10[%c0_45, %c0_46] : memref<16x1xf32, #tpu.memory_space<vmem>>, vector<16x1xf32>
    %130 = vector.broadcast %129 : vector<16x1xf32> to vector<16x512xf32>
    %131 = arith.addf %128, %130 : vector<16x512xf32>
    %cst_47 = arith.constant 0.000000e+00 : f32
    %132 = vector.broadcast %cst_47 : f32 to vector<16x512xf32>
    %133 = arith.maximumf %131, %132 : vector<16x512xf32>
    %cst_48 = arith.constant 0.000000e+00 : f32
    %134 = vector.broadcast %cst_48 : f32 to vector<16x128xf32>
    %135 = tpu.concatenate %133, %134 in 1 : vector<16x512xf32>, vector<16x128xf32> -> vector<16x640xf32>
    %136 = vector.extract_strided_slice %135 {offsets = [0, 0], sizes = [16, 512], strides = [1, 1]} : vector<16x640xf32> to vector<16x512xf32>
    %137 = vector.extract_strided_slice %135 {offsets = [0, 1], sizes = [16, 512], strides = [1, 1]} : vector<16x640xf32> to vector<16x512xf32>
    %138 = vector.extract_strided_slice %135 {offsets = [0, 2], sizes = [16, 512], strides = [1, 1]} : vector<16x640xf32> to vector<16x512xf32>
    %139 = vector.extract_strided_slice %135 {offsets = [0, 16], sizes = [16, 512], strides = [1, 1]} : vector<16x640xf32> to vector<16x512xf32>
    %140 = vector.extract_strided_slice %135 {offsets = [0, 17], sizes = [16, 512], strides = [1, 1]} : vector<16x640xf32> to vector<16x512xf32>
    %141 = vector.extract_strided_slice %135 {offsets = [0, 18], sizes = [16, 512], strides = [1, 1]} : vector<16x640xf32> to vector<16x512xf32>
    %142 = vector.extract_strided_slice %135 {offsets = [0, 32], sizes = [16, 512], strides = [1, 1]} : vector<16x640xf32> to vector<16x512xf32>
    %143 = vector.extract_strided_slice %135 {offsets = [0, 33], sizes = [16, 512], strides = [1, 1]} : vector<16x640xf32> to vector<16x512xf32>
    %144 = vector.extract_strided_slice %135 {offsets = [0, 34], sizes = [16, 512], strides = [1, 1]} : vector<16x640xf32> to vector<16x512xf32>
    %145 = tpu.concatenate %136, %137, %138, %139, %140, %141, %142, %143, %144 in 0 : vector<16x512xf32>, vector<16x512xf32>, vector<16x512xf32>, vector<16x512xf32>, vector<16x512xf32>, vector<16x512xf32>, vector<16x512xf32>, vector<16x512xf32>, vector<16x512xf32> -> vector<144x512xf32>
    %146 = arith.truncf %145 : vector<144x512xf32> to vector<144x512xbf16>
    %c0_49 = arith.constant 0 : index
    %c0_50 = arith.constant 0 : index
    %147 = vector.load %arg11[%c0_49, %c0_50] : memref<16x144xbf16, #tpu.memory_space<vmem>>, vector<16x144xbf16>
    %cst_51 = arith.constant dense<0.000000e+00> : vector<16x512xf32>
    %148 = tpu.matmul %147, %146, %cst_51 {dimension_numbers = #tpu.dot_dimension_numbers<[1], [0], [0], [1], [0, 0, 1, 1], [], []>} : vector<16x144xbf16>, vector<144x512xbf16>, vector<16x512xf32> -> vector<16x512xf32>
    %c0_52 = arith.constant 0 : index
    %c0_53 = arith.constant 0 : index
    %149 = vector.load %arg12[%c0_52, %c0_53] : memref<16x1xf32, #tpu.memory_space<vmem>>, vector<16x1xf32>
    %150 = vector.broadcast %149 : vector<16x1xf32> to vector<16x512xf32>
    %151 = arith.addf %148, %150 : vector<16x512xf32>
    %cst_54 = arith.constant 0.000000e+00 : f32
    %152 = vector.broadcast %cst_54 : f32 to vector<16x512xf32>
    %153 = arith.maximumf %151, %152 : vector<16x512xf32>
    %cst_55 = arith.constant 0.000000e+00 : f32
    %154 = vector.broadcast %cst_55 : f32 to vector<16x128xf32>
    %155 = tpu.concatenate %153, %154 in 1 : vector<16x512xf32>, vector<16x128xf32> -> vector<16x640xf32>
    %156 = vector.extract_strided_slice %155 {offsets = [0, 0], sizes = [16, 512], strides = [1, 1]} : vector<16x640xf32> to vector<16x512xf32>
    %157 = vector.extract_strided_slice %155 {offsets = [0, 1], sizes = [16, 512], strides = [1, 1]} : vector<16x640xf32> to vector<16x512xf32>
    %158 = vector.extract_strided_slice %155 {offsets = [0, 2], sizes = [16, 512], strides = [1, 1]} : vector<16x640xf32> to vector<16x512xf32>
    %159 = vector.extract_strided_slice %155 {offsets = [0, 16], sizes = [16, 512], strides = [1, 1]} : vector<16x640xf32> to vector<16x512xf32>
    %160 = vector.extract_strided_slice %155 {offsets = [0, 17], sizes = [16, 512], strides = [1, 1]} : vector<16x640xf32> to vector<16x512xf32>
    %161 = vector.extract_strided_slice %155 {offsets = [0, 18], sizes = [16, 512], strides = [1, 1]} : vector<16x640xf32> to vector<16x512xf32>
    %162 = vector.extract_strided_slice %155 {offsets = [0, 32], sizes = [16, 512], strides = [1, 1]} : vector<16x640xf32> to vector<16x512xf32>
    %163 = vector.extract_strided_slice %155 {offsets = [0, 33], sizes = [16, 512], strides = [1, 1]} : vector<16x640xf32> to vector<16x512xf32>
    %164 = vector.extract_strided_slice %155 {offsets = [0, 34], sizes = [16, 512], strides = [1, 1]} : vector<16x640xf32> to vector<16x512xf32>
    %165 = tpu.concatenate %156, %157, %158, %159, %160, %161, %162, %163, %164 in 0 : vector<16x512xf32>, vector<16x512xf32>, vector<16x512xf32>, vector<16x512xf32>, vector<16x512xf32>, vector<16x512xf32>, vector<16x512xf32>, vector<16x512xf32>, vector<16x512xf32> -> vector<144x512xf32>
    %166 = arith.truncf %165 : vector<144x512xf32> to vector<144x512xbf16>
    %c0_56 = arith.constant 0 : index
    %c0_57 = arith.constant 0 : index
    %167 = vector.load %arg13[%c0_56, %c0_57] : memref<16x144xbf16, #tpu.memory_space<vmem>>, vector<16x144xbf16>
    %cst_58 = arith.constant dense<0.000000e+00> : vector<16x512xf32>
    %168 = tpu.matmul %167, %166, %cst_58 {dimension_numbers = #tpu.dot_dimension_numbers<[1], [0], [0], [1], [0, 0, 1, 1], [], []>} : vector<16x144xbf16>, vector<144x512xbf16>, vector<16x512xf32> -> vector<16x512xf32>
    %c0_59 = arith.constant 0 : index
    %c0_60 = arith.constant 0 : index
    %169 = vector.load %arg14[%c0_59, %c0_60] : memref<16x1xf32, #tpu.memory_space<vmem>>, vector<16x1xf32>
    %170 = vector.broadcast %169 : vector<16x1xf32> to vector<16x512xf32>
    %171 = arith.addf %168, %170 : vector<16x512xf32>
    %cst_61 = arith.constant 0.000000e+00 : f32
    %172 = vector.broadcast %cst_61 : f32 to vector<16x512xf32>
    %173 = arith.maximumf %171, %172 : vector<16x512xf32>
    %c0_62 = arith.constant 0 : index
    %c0_63 = arith.constant 0 : index
    %174 = vector.load %arg15[%c0_62, %c0_63] : memref<16x16xbf16, #tpu.memory_space<vmem>>, vector<16x16xbf16>
    %175 = arith.truncf %173 : vector<16x512xf32> to vector<16x512xbf16>
    %cst_64 = arith.constant dense<0.000000e+00> : vector<16x512xf32>
    %176 = tpu.matmul %174, %175, %cst_64 {dimension_numbers = #tpu.dot_dimension_numbers<[1], [0], [0], [1], [0, 0, 1, 1], [], []>} : vector<16x16xbf16>, vector<16x512xbf16>, vector<16x512xf32> -> vector<16x512xf32>
    %c0_65 = arith.constant 0 : index
    %c0_66 = arith.constant 0 : index
    %177 = vector.load %arg16[%c0_65, %c0_66] : memref<16x1xf32, #tpu.memory_space<vmem>>, vector<16x1xf32>
    %178 = vector.broadcast %177 : vector<16x1xf32> to vector<16x512xf32>
    %179 = arith.addf %176, %178 : vector<16x512xf32>
    %cst_67 = arith.constant 0.000000e+00 : f32
    %180 = vector.broadcast %cst_67 : f32 to vector<16x512xf32>
    %181 = arith.maximumf %179, %180 : vector<16x512xf32>
    %c0_68 = arith.constant 0 : index
    %c0_69 = arith.constant 0 : index
    %182 = vector.load %arg17[%c0_68, %c0_69] : memref<512x2xf32, #tpu.memory_space<vmem>>, vector<512x2xf32>
    %cst_70 = arith.constant dense<0.000000e+00> : vector<16x2xf32>
    %183 = tpu.matmul %181, %182, %cst_70 {dimension_numbers = #tpu.dot_dimension_numbers<[1], [0], [0], [1], [0, 0, 1, 1], [], []>} : vector<16x512xf32>, vector<512x2xf32>, vector<16x2xf32> -> vector<16x2xf32>
    %c0_71 = arith.constant 0 : index
    %c0_72 = arith.constant 0 : index
    %184 = vector.load %arg18[%c0_71, %c0_72] : memref<10x16xf32, #tpu.memory_space<vmem>>, vector<10x16xf32>
    %cst_73 = arith.constant dense<0.000000e+00> : vector<10x2xf32>
    %185 = tpu.matmul %184, %183, %cst_73 {dimension_numbers = #tpu.dot_dimension_numbers<[1], [0], [0], [1], [0, 0, 1, 1], [], []>} : vector<10x16xf32>, vector<16x2xf32>, vector<10x2xf32> -> vector<10x2xf32>
    %cst_74 = arith.constant dense<0xFF800000> : vector<2xf32>
    %186 = vector.multi_reduction <maximumf>, %185, %cst_74 [0] : vector<10x2xf32> to vector<2xf32>
    %187 = vector.shape_cast %186 : vector<2xf32> to vector<1x2xf32>
    %188 = vector.broadcast %187 : vector<1x2xf32> to vector<10x2xf32>
    %189 = arith.subf %185, %188 : vector<10x2xf32>
    %190 = math.exp %189 : vector<10x2xf32>
    %cst_75 = arith.constant dense<0.000000e+00> : vector<2xf32>
    %191 = vector.multi_reduction <add>, %190, %cst_75 [0] : vector<10x2xf32> to vector<2xf32>
    %192 = vector.shape_cast %191 : vector<2xf32> to vector<1x2xf32>
    %193 = math.log %192 : vector<1x2xf32>
    %194 = vector.broadcast %193 : vector<1x2xf32> to vector<10x2xf32>
    %195 = arith.subf %189, %194 : vector<10x2xf32>
    %c0_76 = arith.constant 0 : index
    %c0_77 = arith.constant 0 : index
    %c0_78 = arith.constant 0 : index
    %196 = vector.load %arg19[%c0_76, %c0_77, %c0_78] : memref<1x10x2xf32, #tpu.memory_space<vmem>>, vector<1x10x2xf32>
    %197 = vector.shape_cast %196 : vector<1x10x2xf32> to vector<10x2xf32>
    %198 = vector.shape_cast %195 : vector<10x2xf32> to vector<1x10x2xf32>
    tpu.vector_store %arg19[%c0_76, %c0_77, %c0_78], %198 {strides = array<i32>} : memref<1x10x2xf32, #tpu.memory_space<vmem>>, vector<1x10x2xf32>,
    return
  }
  func.func @transform_0(%arg0: i32) -> (i32, i32) {
    %c0_i32 = arith.constant 0 : i32
    %c0_i32_0 = arith.constant 0 : i32
    return %c0_i32, %arg0 : i32, i32
  }
  func.func @transform_1(%arg0: i32) -> (i32, i32, i32) {
    %c0_i32 = arith.constant 0 : i32
    %c0_i32_0 = arith.constant 0 : i32
    %c0_i32_1 = arith.constant 0 : i32
    %c0_i32_2 = arith.constant 0 : i32
    return %c0_i32, %c0_i32_0, %c0_i32_1 : i32, i32, i32
  }
  func.func @transform_2(%arg0: i32) -> (i32, i32) {
    %c0_i32 = arith.constant 0 : i32
    %c0_i32_0 = arith.constant 0 : i32
    %c0_i32_1 = arith.constant 0 : i32
    return %c0_i32, %c0_i32_0 : i32, i32
  }
  func.func @transform_3(%arg0: i32) -> (i32, i32) {
    %c0_i32 = arith.constant 0 : i32
    %c0_i32_0 = arith.constant 0 : i32
    %c0_i32_1 = arith.constant 0 : i32
    return %c0_i32, %c0_i32_0 : i32, i32
  }
  func.func @transform_4(%arg0: i32) -> (i32, i32) {
    %c0_i32 = arith.constant 0 : i32
    %c0_i32_0 = arith.constant 0 : i32
    %c0_i32_1 = arith.constant 0 : i32
    return %c0_i32, %c0_i32_0 : i32, i32
  }
  func.func @transform_5(%arg0: i32) -> (i32, i32) {
    %c0_i32 = arith.constant 0 : i32
    %c0_i32_0 = arith.constant 0 : i32
    %c0_i32_1 = arith.constant 0 : i32
    return %c0_i32, %c0_i32_0 : i32, i32
  }
  func.func @transform_6(%arg0: i32) -> (i32, i32) {
    %c0_i32 = arith.constant 0 : i32
    %c0_i32_0 = arith.constant 0 : i32
    %c0_i32_1 = arith.constant 0 : i32
    return %c0_i32, %c0_i32_0 : i32, i32
  }
  func.func @transform_7(%arg0: i32) -> (i32, i32) {
    %c0_i32 = arith.constant 0 : i32
    %c0_i32_0 = arith.constant 0 : i32
    %c0_i32_1 = arith.constant 0 : i32
    return %c0_i32, %c0_i32_0 : i32, i32
  }
  func.func @transform_8(%arg0: i32) -> (i32, i32) {
    %c0_i32 = arith.constant 0 : i32
    %c0_i32_0 = arith.constant 0 : i32
    %c0_i32_1 = arith.constant 0 : i32
    return %c0_i32, %c0_i32_0 : i32, i32
  }
  func.func @transform_9(%arg0: i32) -> (i32, i32) {
    %c0_i32 = arith.constant 0 : i32
    %c0_i32_0 = arith.constant 0 : i32
    %c0_i32_1 = arith.constant 0 : i32
    return %c0_i32, %c0_i32_0 : i32, i32
  }
  func.func @transform_10(%arg0: i32) -> (i32, i32) {
    %c0_i32 = arith.constant 0 : i32
    %c0_i32_0 = arith.constant 0 : i32
    %c0_i32_1 = arith.constant 0 : i32
    return %c0_i32, %c0_i32_0 : i32, i32
  }
  func.func @transform_11(%arg0: i32) -> (i32, i32) {
    %c0_i32 = arith.constant 0 : i32
    %c0_i32_0 = arith.constant 0 : i32
    %c0_i32_1 = arith.constant 0 : i32
    return %c0_i32, %c0_i32_0 : i32, i32
  }
  func.func @transform_12(%arg0: i32) -> (i32, i32) {
    %c0_i32 = arith.constant 0 : i32
    %c0_i32_0 = arith.constant 0 : i32
    %c0_i32_1 = arith.constant 0 : i32
    return %c0_i32, %c0_i32_0 : i32, i32
  }
  func.func @transform_13(%arg0: i32) -> (i32, i32) {
    %c0_i32 = arith.constant 0 : i32
    %c0_i32_0 = arith.constant 0 : i32
    %c0_i32_1 = arith.constant 0 : i32
    return %c0_i32, %c0_i32_0 : i32, i32
  }
  func.func @transform_14(%arg0: i32) -> (i32, i32) {
    %c0_i32 = arith.constant 0 : i32
    %c0_i32_0 = arith.constant 0 : i32
    %c0_i32_1 = arith.constant 0 : i32
    return %c0_i32, %c0_i32_0 : i32, i32
  }
  func.func @transform_15(%arg0: i32) -> (i32, i32) {
    %c0_i32 = arith.constant 0 : i32
    %c0_i32_0 = arith.constant 0 : i32
    %c0_i32_1 = arith.constant 0 : i32
    return %c0_i32, %c0_i32_0 : i32, i32
  }
  func.func @transform_16(%arg0: i32) -> (i32, i32) {
    %c0_i32 = arith.constant 0 : i32
    %c0_i32_0 = arith.constant 0 : i32
    %c0_i32_1 = arith.constant 0 : i32
    return %c0_i32, %c0_i32_0 : i32, i32
  }
  func.func @transform_17(%arg0: i32) -> (i32, i32) {
    %c0_i32 = arith.constant 0 : i32
    %c0_i32_0 = arith.constant 0 : i32
    %c0_i32_1 = arith.constant 0 : i32
    return %c0_i32, %c0_i32_0 : i32, i32
  }
  func.func @transform_18(%arg0: i32) -> (i32, i32, i32) {
    %c0_i32 = arith.constant 0 : i32
    %c0_i32_0 = arith.constant 0 : i32
    %c0_i32_1 = arith.constant 0 : i32
    return %arg0, %c0_i32, %c0_i32_0 : i32, i32, i32
  }
}

</mosaic_0001>

<llo_original>
// kernel: model3_forward.1
$region0: #{model3_forward.1}
  #allocation0 [shape = 'u32[]', space=smem, size = 0x4, offset = 0x4, fixed_abs, tag = 'smem constant byte address 0x4 - core index']
  #allocation1 [shape = 'u32[144,128]{1,0:T(1,128)}', space=vmem, size = 0x12000, scoped, tag = 'internal scratch']
  %s0 = inlined_call_operand.vmem [shape: f32[1,1792], index: 0, kind: input, shape index: {}]
  %s1 = inlined_call_operand.vmem [shape: f32[9,8,1], index: 1, kind: input, shape index: {}]
  %s2 = inlined_call_operand.vmem [shape: f32[8,1], index: 2, kind: input, shape index: {}]
  %s3 = inlined_call_operand.vmem [shape: bf16[16,72], index: 3, kind: input, shape index: {}]
  %s4 = inlined_call_operand.vmem [shape: f32[16,1], index: 4, kind: input, shape index: {}]
  %s5 = inlined_call_operand.vmem [shape: bf16[8,16], index: 5, kind: input, shape index: {}]
  %s6 = inlined_call_operand.vmem [shape: f32[8,1], index: 6, kind: input, shape index: {}]
  %s7 = inlined_call_operand.vmem [shape: bf16[896,256], index: 7, kind: input, shape index: {}]
  %s8 = inlined_call_operand.vmem [shape: bf16[16,72], index: 8, kind: input, shape index: {}]
  %s9 = inlined_call_operand.vmem [shape: f32[16,1], index: 9, kind: input, shape index: {}]
  %s10 = inlined_call_operand.vmem [shape: bf16[16,144], index: 10, kind: input, shape index: {}]
  %s11 = inlined_call_operand.vmem [shape: f32[16,1], index: 11, kind: input, shape index: {}]
  %s12 = inlined_call_operand.vmem [shape: bf16[16,144], index: 12, kind: input, shape index: {}]
  %s13 = inlined_call_operand.vmem [shape: f32[16,1], index: 13, kind: input, shape index: {}]
  %s14 = inlined_call_operand.vmem [shape: bf16[16,16], index: 14, kind: input, shape index: {}]
  %s15 = inlined_call_operand.vmem [shape: f32[16,1], index: 15, kind: input, shape index: {}]
  %s16 = inlined_call_operand.vmem [shape: f32[512,2], index: 16, kind: input, shape index: {}]
  %s17 = inlined_call_operand.vmem [shape: f32[10,16], index: 17, kind: input, shape index: {}]
  %s18 = inlined_call_operand.vmem [shape: f32[1,10,2], index: 18, kind: output, shape index: {}]
  %s19 = sld [smem:[#allocation0]]
  $region82: #{model3_forward.1} parent=0
    _
  %s21 = ssub.s32 1, %s19
  %s22 = scalar_select 0, %s21, %s19
  // Predicated region
  $region2: #{model3_forward.1} parent=0 // pred_check
    _
  $region3: #{model3_forward.1} parent=0 // pred_check_branch
    %24 = sbr.rel (0) target = $region5
  $region4: #{model3_forward.1} parent=0 // pred_region
    _
  $region5: #{model3_forward.1} parent=0 // pred_fallthru
    _
  // Predicated region
  $region6: #{model3_forward.1} parent=0 // pred_check
    _
  $region7: #{model3_forward.1} parent=0 // pred_check_branch
    %26 = sbr.rel (0) target = $region9
  $region8: #{model3_forward.1} parent=0 // pred_region
    _
  $region9: #{model3_forward.1} parent=0 // pred_fallthru
    _
  // Predicated region
  $region10: #{model3_forward.1} parent=0 // pred_check
    _
  $region11: #{model3_forward.1} parent=0 // pred_check_branch
    %28 = sbr.rel (0) target = $region13
  $region12: #{model3_forward.1} parent=0 // pred_region
    _
  $region13: #{model3_forward.1} parent=0 // pred_fallthru
    _
  // Predicated region
  $region14: #{model3_forward.1} parent=0 // pred_check
    _
  $region15: #{model3_forward.1} parent=0 // pred_check_branch
    %30 = sbr.rel (0) target = $region17
  $region16: #{model3_forward.1} parent=0 // pred_region
    _
  $region17: #{model3_forward.1} parent=0 // pred_fallthru
    _
  // Predicated region
  $region18: #{model3_forward.1} parent=0 // pred_check
    _
  $region19: #{model3_forward.1} parent=0 // pred_check_branch
    %32 = sbr.rel (0) target = $region21
  $region20: #{model3_forward.1} parent=0 // pred_region
    _
  $region21: #{model3_forward.1} parent=0 // pred_fallthru
    _
  // Predicated region
  $region22: #{model3_forward.1} parent=0 // pred_check
    _
  $region23: #{model3_forward.1} parent=0 // pred_check_branch
    %34 = sbr.rel (0) target = $region25
  $region24: #{model3_forward.1} parent=0 // pred_region
    _
  $region25: #{model3_forward.1} parent=0 // pred_fallthru
    _
  // Predicated region
  $region26: #{model3_forward.1} parent=0 // pred_check
    _
  $region27: #{model3_forward.1} parent=0 // pred_check_branch
    %36 = sbr.rel (0) target = $region29
  $region28: #{model3_forward.1} parent=0 // pred_region
    _
  $region29: #{model3_forward.1} parent=0 // pred_fallthru
    _
  // Predicated region
  $region30: #{model3_forward.1} parent=0 // pred_check
    _
  $region31: #{model3_forward.1} parent=0 // pred_check_branch
    %38 = sbr.rel (0) target = $region33
  $region32: #{model3_forward.1} parent=0 // pred_region
    _
  $region33: #{model3_forward.1} parent=0 // pred_fallthru
    _
  // Predicated region
  $region34: #{model3_forward.1} parent=0 // pred_check
    _
  $region35: #{model3_forward.1} parent=0 // pred_check_branch
    %40 = sbr.rel (0) target = $region37
  $region36: #{model3_forward.1} parent=0 // pred_region
    _
  $region37: #{model3_forward.1} parent=0 // pred_fallthru
    _
  // Predicated region
  $region38: #{model3_forward.1} parent=0 // pred_check
    _
  $region39: #{model3_forward.1} parent=0 // pred_check_branch
    %42 = sbr.rel (0) target = $region41
  $region40: #{model3_forward.1} parent=0 // pred_region
    _
  $region41: #{model3_forward.1} parent=0 // pred_fallthru
    _
  // Predicated region
  $region42: #{model3_forward.1} parent=0 // pred_check
    _
  $region43: #{model3_forward.1} parent=0 // pred_check_branch
    %44 = sbr.rel (0) target = $region45
  $region44: #{model3_forward.1} parent=0 // pred_region
    _
  $region45: #{model3_forward.1} parent=0 // pred_fallthru
    _
  // Predicated region
  $region46: #{model3_forward.1} parent=0 // pred_check
    _
  $region47: #{model3_forward.1} parent=0 // pred_check_branch
    %46 = sbr.rel (0) target = $region49
  $region48: #{model3_forward.1} parent=0 // pred_region
    _
  $region49: #{model3_forward.1} parent=0 // pred_fallthru
    _
  // Predicated region
  $region50: #{model3_forward.1} parent=0 // pred_check
    _
  $region51: #{model3_forward.1} parent=0 // pred_check_branch
    %48 = sbr.rel (0) target = $region53
  $region52: #{model3_forward.1} parent=0 // pred_region
    _
  $region53: #{model3_forward.1} parent=0 // pred_fallthru
    _
  // Predicated region
  $region54: #{model3_forward.1} parent=0 // pred_check
    _
  $region55: #{model3_forward.1} parent=0 // pred_check_branch
    %50 = sbr.rel (0) target = $region57
  $region56: #{model3_forward.1} parent=0 // pred_region
    _
  $region57: #{model3_forward.1} parent=0 // pred_fallthru
    _
  // Predicated region
  $region58: #{model3_forward.1} parent=0 // pred_check
    _
  $region59: #{model3_forward.1} parent=0 // pred_check_branch
    %52 = sbr.rel (0) target = $region61
  $region60: #{model3_forward.1} parent=0 // pred_region
    _
  $region61: #{model3_forward.1} parent=0 // pred_fallthru
    _
  // Predicated region
  $region62: #{model3_forward.1} parent=0 // pred_check
    _
  $region63: #{model3_forward.1} parent=0 // pred_check_branch
    %54 = sbr.rel (0) target = $region65
  $region64: #{model3_forward.1} parent=0 // pred_region
    _
  $region65: #{model3_forward.1} parent=0 // pred_fallthru
    _
  // Predicated region
  $region66: #{model3_forward.1} parent=0 // pred_check
    _
  $region67: #{model3_forward.1} parent=0 // pred_check_branch
    %56 = sbr.rel (0) target = $region69
  $region68: #{model3_forward.1} parent=0 // pred_region
    _
  $region69: #{model3_forward.1} parent=0 // pred_fallthru
    _
  // Predicated region
  $region70: #{model3_forward.1} parent=0 // pred_check
    _
  $region71: #{model3_forward.1} parent=0 // pred_check_branch
    %58 = sbr.rel (0) target = $region73
  $region72: #{model3_forward.1} parent=0 // pred_region
    _
  $region73: #{model3_forward.1} parent=0 // pred_fallthru
    _
  %v60 = vld [vmem:[%s0] sm:$0xff]
  %v61 = vld [vmem:[%s0 + $0x8] sm:$0x3f]
  %v64 = vlaneseq
  %v65 = vshrl.u32 %v64, 7
  %v66 = vsub.s32 0, %v65
  %v67 = vrot.slane %v60, %v66
  %v68 = vlaneseq
  %v69 = vshrl.u32 %v68, 7
  %v70 = vsub.s32 1, %v69
  %v71 = vrot.slane %v60, %v70
  %v72 = vlaneseq
  %v73 = vshrl.u32 %v72, 7
  %v74 = vsub.s32 2, %v73
  %v75 = vrot.slane %v60, %v74
  %v76 = vlaneseq
  %v77 = vshrl.u32 %v76, 7
  %v78 = vsub.s32 3, %v77
  %v79 = vrot.slane %v60, %v78
  %v80 = vlaneseq
  %v81 = vshrl.u32 %v80, 7
  %v82 = vsub.s32 4, %v81
  %v83 = vrot.slane %v60, %v82
  %v84 = vlaneseq
  %v85 = vshrl.u32 %v84, 7
  %v86 = vsub.s32 5, %v85
  %v87 = vrot.slane %v60, %v86
  %v88 = vlaneseq
  %v89 = vshrl.u32 %v88, 7
  %v90 = vsub.s32 6, %v89
  %v91 = vrot.slane %v60, %v90
  %v92 = vlaneseq
  %v93 = vshrl.u32 %v92, 7
  %v94 = vsub.s32 7, %v93
  %v95 = vrot.slane %v60, %v94
  %v96 = vlaneseq
  %v97 = vshrl.u32 %v96, 7
  %v98 = vsub.s32 0, %v97
  %v99 = vrot.slane %v61, %v98
  %v100 = vlaneseq
  %v101 = vshrl.u32 %v100, 7
  %v102 = vsub.s32 1, %v101
  %v103 = vrot.slane %v61, %v102
  %v104 = vlaneseq
  %v105 = vshrl.u32 %v104, 7
  %v106 = vsub.s32 2, %v105
  %v107 = vrot.slane %v61, %v106
  %v108 = vlaneseq
  %v109 = vshrl.u32 %v108, 7
  %v110 = vsub.s32 3, %v109
  %v111 = vrot.slane %v61, %v110
  %v112 = vlaneseq
  %v113 = vshrl.u32 %v112, 7
  %v114 = vsub.s32 4, %v113
  %v115 = vrot.slane %v61, %v114
  %v116 = vlaneseq
  %v117 = vshrl.u32 %v116, 7
  %v118 = vsub.s32 5, %v117
  %v119 = vrot.slane %v61, %v118
  %v134 = vld [vmem:[%s1] sm:$0xff]
  %136 = vset.pattern.permute.xlu0 0
  %137 = vperm.xlu0 %136, %v134
  %v138 = vpop.permute.xlu0 %137
  %v140 = vlaneseq
  %v141 = vshrl.u32 %v140, 7
  %v142 = vsub.s32 0, %v141
  %v143 = vrot.slane %v67, %v142
  %v144 = vlaneseq
  %v145 = vshrl.u32 %v144, 7
  %v146 = vsub.s32 0, %v145
  %v147 = vrot.slane %v71, %v146
  %v148 = vlaneseq
  %v149 = vshrl.u32 %v148, 7
  %v150 = vsub.s32 0, %v149
  %v151 = vrot.slane %v75, %v150
  %v152 = vlaneseq
  %v153 = vshrl.u32 %v152, 7
  %v154 = vsub.s32 0, %v153
  %v155 = vrot.slane %v79, %v154
  %v156 = vlaneseq
  %v157 = vshrl.u32 %v156, 7
  %v158 = vsub.s32 0, %v157
  %v159 = vrot.slane %v83, %v158
  %v160 = vlaneseq
  %v161 = vshrl.u32 %v160, 7
  %v162 = vsub.s32 0, %v161
  %v163 = vrot.slane %v87, %v162
  %v164 = vlaneseq
  %v165 = vshrl.u32 %v164, 7
  %v166 = vsub.s32 0, %v165
  %v167 = vrot.slane %v91, %v166
  %v168 = vlaneseq
  %v169 = vshrl.u32 %v168, 7
  %v170 = vsub.s32 0, %v169
  %v171 = vrot.slane %v95, %v170
  %v172 = vlaneseq
  %v173 = vshrl.u32 %v172, 7
  %v174 = vsub.s32 0, %v173
  %v175 = vrot.slane %v99, %v174
  %v176 = vlaneseq
  %v177 = vshrl.u32 %v176, 7
  %v178 = vsub.s32 0, %v177
  %v179 = vrot.slane %v103, %v178
  %v180 = vlaneseq
  %v181 = vshrl.u32 %v180, 7
  %v182 = vsub.s32 0, %v181
  %v183 = vrot.slane %v107, %v182
  %v184 = vlaneseq
  %v185 = vshrl.u32 %v184, 7
  %v186 = vsub.s32 0, %v185
  %v187 = vrot.slane %v111, %v186
  %v188 = vlaneseq
  %v189 = vshrl.u32 %v188, 7
  %v190 = vsub.s32 0, %v189
  %v191 = vrot.slane %v115, %v190
  %v192 = vlaneseq
  %v193 = vshrl.u32 %v192, 7
  %v194 = vsub.s32 0, %v193
  %v195 = vrot.slane %v119, %v194
  %v196 = vmul.f32 %v138, %v143
  %v197 = vmul.f32 %v138, %v147
  %v198 = vmul.f32 %v138, %v151
  %v199 = vmul.f32 %v138, %v155
  %v200 = vmul.f32 %v138, %v159
  %v201 = vmul.f32 %v138, %v163
  %v202 = vmul.f32 %v138, %v167
  %v203 = vmul.f32 %v138, %v171
  %v204 = vmul.f32 %v138, %v175
  %v205 = vmul.f32 %v138, %v179
  %v206 = vmul.f32 %v138, %v183
  %v207 = vmul.f32 %v138, %v187
  %v208 = vmul.f32 %v138, %v191
  %v209 = vmul.f32 %v138, %v195
  %s210 = scalar_lea.vmem %s1, 8
  %v211 = vld [vmem:[%s210] sm:$0xff]
  %213 = vset.pattern.permute.xlu0 0
  %214 = vperm.xlu0 %213, %v211
  %v215 = vpop.permute.xlu0 %214
  %v217 = vlaneseq
  %v218 = vshrl.u32 %v217, 7
  %v219 = vsub.s32 0, %v218
  %v220 = vmul.f32 %v215, %v143
  %v221 = vmul.f32 %v215, %v147
  %v222 = vmul.f32 %v215, %v151
  %v223 = vmul.f32 %v215, %v155
  %v224 = vmul.f32 %v215, %v159
  %v225 = vmul.f32 %v215, %v163
  %v226 = vmul.f32 %v215, %v167
  %v227 = vmul.f32 %v215, %v171
  %v228 = vmul.f32 %v215, %v175
  %v229 = vmul.f32 %v215, %v179
  %v230 = vmul.f32 %v215, %v183
  %v231 = vmul.f32 %v215, %v187
  %v232 = vmul.f32 %v215, %v191
  %v233 = vmul.f32 %v215, %v195
  %v234 = vmul.f32 %v215, 0.0
  %250 = vrot.lane.b32.xlu0 %v220, 127
  %v251 = vpop.permute.xlu0 %250
  %252 = vrot.lane.b32.xlu0 %v221, 127
  %v253 = vpop.permute.xlu0 %252
  %254 = vrot.lane.b32.xlu0 %v222, 127
  %v255 = vpop.permute.xlu0 %254
  %256 = vrot.lane.b32.xlu0 %v223, 127
  %v257 = vpop.permute.xlu0 %256
  %258 = vrot.lane.b32.xlu0 %v224, 127
  %v259 = vpop.permute.xlu0 %258
  %260 = vrot.lane.b32.xlu0 %v225, 127
  %v261 = vpop.permute.xlu0 %260
  %262 = vrot.lane.b32.xlu0 %v226, 127
  %v263 = vpop.permute.xlu0 %262
  %264 = vrot.lane.b32.xlu0 %v227, 127
  %v265 = vpop.permute.xlu0 %264
  %266 = vrot.lane.b32.xlu0 %v228, 127
  %v267 = vpop.permute.xlu0 %266
  %268 = vrot.lane.b32.xlu0 %v229, 127
  %v269 = vpop.permute.xlu0 %268
  %270 = vrot.lane.b32.xlu0 %v230, 127
  %v271 = vpop.permute.xlu0 %270
  %272 = vrot.lane.b32.xlu0 %v231, 127
  %v273 = vpop.permute.xlu0 %272
  %274 = vrot.lane.b32.xlu0 %v232, 127
  %v275 = vpop.permute.xlu0 %274
  %276 = vrot.lane.b32.xlu0 %v233, 127
  %v277 = vpop.permute.xlu0 %276
  %278 = vrot.lane.b32.xlu0 %v234, 127
  %v279 = vpop.permute.xlu0 %278
  %vm280 = vcmask 1039360
  %v281 = vsel %vm280, %v251, %v253
  %v282 = vsel %vm280, %v253, %v255
  %v283 = vsel %vm280, %v255, %v257
  %v284 = vsel %vm280, %v257, %v259
  %v285 = vsel %vm280, %v259, %v261
  %v286 = vsel %vm280, %v261, %v263
  %v287 = vsel %vm280, %v263, %v265
  %v288 = vsel %vm280, %v265, %v267
  %v289 = vsel %vm280, %v267, %v269
  %v290 = vsel %vm280, %v269, %v271
  %v291 = vsel %vm280, %v271, %v273
  %v292 = vsel %vm280, %v273, %v275
  %v293 = vsel %vm280, %v275, %v277
  %v294 = vsel %vm280, %v277, %v279
  %v309 = vadd.f32 %v196, %v281
  %v310 = vadd.f32 %v197, %v282
  %v311 = vadd.f32 %v198, %v283
  %v312 = vadd.f32 %v199, %v284
  %v313 = vadd.f32 %v200, %v285
  %v314 = vadd.f32 %v201, %v286
  %v315 = vadd.f32 %v202, %v287
  %v316 = vadd.f32 %v203, %v288
  %v317 = vadd.f32 %v204, %v289
  %v318 = vadd.f32 %v205, %v290
  %v319 = vadd.f32 %v206, %v291
  %v320 = vadd.f32 %v207, %v292
  %v321 = vadd.f32 %v208, %v293
  %v322 = vadd.f32 %v209, %v294
  %s323 = scalar_lea.vmem %s1, 16
  %v324 = vld [vmem:[%s323] sm:$0xff]
  %326 = vset.pattern.permute.xlu0 0
  %327 = vperm.xlu0 %326, %v324
  %v328 = vpop.permute.xlu0 %327
  %v330 = vmul.f32 %v328, %v143
  %v331 = vmul.f32 %v328, %v147
  %v332 = vmul.f32 %v328, %v151
  %v333 = vmul.f32 %v328, %v155
  %v334 = vmul.f32 %v328, %v159
  %v335 = vmul.f32 %v328, %v163
  %v336 = vmul.f32 %v328, %v167
  %v337 = vmul.f32 %v328, %v171
  %v338 = vmul.f32 %v328, %v175
  %v339 = vmul.f32 %v328, %v179
  %v340 = vmul.f32 %v328, %v183
  %v341 = vmul.f32 %v328, %v187
  %v342 = vmul.f32 %v328, %v191
  %v343 = vmul.f32 %v328, %v195
  %v344 = vmul.f32 %v328, 0.0
  %360 = vrot.lane.b32.xlu0 %v330, 126
  %v361 = vpop.permute.xlu0 %360
  %362 = vrot.lane.b32.xlu0 %v331, 126
  %v363 = vpop.permute.xlu0 %362
  %364 = vrot.lane.b32.xlu0 %v332, 126
  %v365 = vpop.permute.xlu0 %364
  %366 = vrot.lane.b32.xlu0 %v333, 126
  %v367 = vpop.permute.xlu0 %366
  %368 = vrot.lane.b32.xlu0 %v334, 126
  %v369 = vpop.permute.xlu0 %368
  %370 = vrot.lane.b32.xlu0 %v335, 126
  %v371 = vpop.permute.xlu0 %370
  %372 = vrot.lane.b32.xlu0 %v336, 126
  %v373 = vpop.permute.xlu0 %372
  %374 = vrot.lane.b32.xlu0 %v337, 126
  %v375 = vpop.permute.xlu0 %374
  %376 = vrot.lane.b32.xlu0 %v338, 126
  %v377 = vpop.permute.xlu0 %376
  %378 = vrot.lane.b32.xlu0 %v339, 126
  %v379 = vpop.permute.xlu0 %378
  %380 = vrot.lane.b32.xlu0 %v340, 126
  %v381 = vpop.permute.xlu0 %380
  %382 = vrot.lane.b32.xlu0 %v341, 126
  %v383 = vpop.permute.xlu0 %382
  %384 = vrot.lane.b32.xlu0 %v342, 126
  %v385 = vpop.permute.xlu0 %384
  %386 = vrot.lane.b32.xlu0 %v343, 126
  %v387 = vpop.permute.xlu0 %386
  %388 = vrot.lane.b32.xlu0 %v344, 126
  %v389 = vpop.permute.xlu0 %388
  %vm390 = vcmask 1031168
  %v391 = vsel %vm390, %v361, %v363
  %v392 = vsel %vm390, %v363, %v365
  %v393 = vsel %vm390, %v365, %v367
  %v394 = vsel %vm390, %v367, %v369
  %v395 = vsel %vm390, %v369, %v371
  %v396 = vsel %vm390, %v371, %v373
  %v397 = vsel %vm390, %v373, %v375
  %v398 = vsel %vm390, %v375, %v377
  %v399 = vsel %vm390, %v377, %v379
  %v400 = vsel %vm390, %v379, %v381
  %v401 = vsel %vm390, %v381, %v383
  %v402 = vsel %vm390, %v383, %v385
  %v403 = vsel %vm390, %v385, %v387
  %v404 = vsel %vm390, %v387, %v389
  %v419 = vadd.f32 %v309, %v391
  %v420 = vadd.f32 %v310, %v392
  %v421 = vadd.f32 %v311, %v393
  %v422 = vadd.f32 %v312, %v394
  %v423 = vadd.f32 %v313, %v395
  %v424 = vadd.f32 %v314, %v396
  %v425 = vadd.f32 %v315, %v397
  %v426 = vadd.f32 %v316, %v398
  %v427 = vadd.f32 %v317, %v399
  %v428 = vadd.f32 %v318, %v400
  %v429 = vadd.f32 %v319, %v401
  %v430 = vadd.f32 %v320, %v402
  %v431 = vadd.f32 %v321, %v403
  %v432 = vadd.f32 %v322, %v404
  %s433 = scalar_lea.vmem %s1, 24
  %v434 = vld [vmem:[%s433] sm:$0xff]
  %436 = vset.pattern.permute.xlu0 0
  %437 = vperm.xlu0 %436, %v434
  %v438 = vpop.permute.xlu0 %437
  %v440 = vmul.f32 %v438, %v143
  %v441 = vmul.f32 %v438, %v147
  %v442 = vmul.f32 %v438, %v151
  %v443 = vmul.f32 %v438, %v155
  %v444 = vmul.f32 %v438, %v159
  %v445 = vmul.f32 %v438, %v163
  %v446 = vmul.f32 %v438, %v167
  %v447 = vmul.f32 %v438, %v171
  %v448 = vmul.f32 %v438, %v175
  %v449 = vmul.f32 %v438, %v179
  %v450 = vmul.f32 %v438, %v183
  %v451 = vmul.f32 %v438, %v187
  %v452 = vmul.f32 %v438, %v191
  %v453 = vmul.f32 %v438, %v195
  %v454 = vmul.f32 %v438, 0.0
  %470 = vrot.lane.b32.xlu0 %v440, 96
  %v471 = vpop.permute.xlu0 %470
  %472 = vrot.lane.b32.xlu0 %v441, 96
  %v473 = vpop.permute.xlu0 %472
  %474 = vrot.lane.b32.xlu0 %v442, 96
  %v475 = vpop.permute.xlu0 %474
  %476 = vrot.lane.b32.xlu0 %v443, 96
  %v477 = vpop.permute.xlu0 %476
  %478 = vrot.lane.b32.xlu0 %v444, 96
  %v479 = vpop.permute.xlu0 %478
  %480 = vrot.lane.b32.xlu0 %v445, 96
  %v481 = vpop.permute.xlu0 %480
  %482 = vrot.lane.b32.xlu0 %v446, 96
  %v483 = vpop.permute.xlu0 %482
  %484 = vrot.lane.b32.xlu0 %v447, 96
  %v485 = vpop.permute.xlu0 %484
  %486 = vrot.lane.b32.xlu0 %v448, 96
  %v487 = vpop.permute.xlu0 %486
  %488 = vrot.lane.b32.xlu0 %v449, 96
  %v489 = vpop.permute.xlu0 %488
  %490 = vrot.lane.b32.xlu0 %v450, 96
  %v491 = vpop.permute.xlu0 %490
  %492 = vrot.lane.b32.xlu0 %v451, 96
  %v493 = vpop.permute.xlu0 %492
  %494 = vrot.lane.b32.xlu0 %v452, 96
  %v495 = vpop.permute.xlu0 %494
  %496 = vrot.lane.b32.xlu0 %v453, 96
  %v497 = vpop.permute.xlu0 %496
  %498 = vrot.lane.b32.xlu0 %v454, 96
  %v499 = vpop.permute.xlu0 %498
  %vm500 = vcmask 785408
  %v501 = vsel %vm500, %v471, %v473
  %v502 = vsel %vm500, %v473, %v475
  %v503 = vsel %vm500, %v475, %v477
  %v504 = vsel %vm500, %v477, %v479
  %v505 = vsel %vm500, %v479, %v481
  %v506 = vsel %vm500, %v481, %v483
  %v507 = vsel %vm500, %v483, %v485
  %v508 = vsel %vm500, %v485, %v487
  %v509 = vsel %vm500, %v487, %v489
  %v510 = vsel %vm500, %v489, %v491
  %v511 = vsel %vm500, %v491, %v493
  %v512 = vsel %vm500, %v493, %v495
  %v513 = vsel %vm500, %v495, %v497
  %v514 = vsel %vm500, %v497, %v499
  %v529 = vadd.f32 %v419, %v501
  %v530 = vadd.f32 %v420, %v502
  %v531 = vadd.f32 %v421, %v503
  %v532 = vadd.f32 %v422, %v504
  %v533 = vadd.f32 %v423, %v505
  %v534 = vadd.f32 %v424, %v506
  %v535 = vadd.f32 %v425, %v507
  %v536 = vadd.f32 %v426, %v508
  %v537 = vadd.f32 %v427, %v509
  %v538 = vadd.f32 %v428, %v510
  %v539 = vadd.f32 %v429, %v511
  %v540 = vadd.f32 %v430, %v512
  %v541 = vadd.f32 %v431, %v513
  %v542 = vadd.f32 %v432, %v514
  %s543 = scalar_lea.vmem %s1, 32
  %v544 = vld [vmem:[%s543] sm:$0xff]
  %546 = vset.pattern.permute.xlu0 0
  %547 = vperm.xlu0 %546, %v544
  %v548 = vpop.permute.xlu0 %547
  %v550 = vmul.f32 %v548, %v143
  %v551 = vmul.f32 %v548, %v147
  %v552 = vmul.f32 %v548, %v151
  %v553 = vmul.f32 %v548, %v155
  %v554 = vmul.f32 %v548, %v159
  %v555 = vmul.f32 %v548, %v163
  %v556 = vmul.f32 %v548, %v167
  %v557 = vmul.f32 %v548, %v171
  %v558 = vmul.f32 %v548, %v175
  %v559 = vmul.f32 %v548, %v179
  %v560 = vmul.f32 %v548, %v183
  %v561 = vmul.f32 %v548, %v187
  %v562 = vmul.f32 %v548, %v191
  %v563 = vmul.f32 %v548, %v195
  %v564 = vmul.f32 %v548, 0.0
  %580 = vrot.lane.b32.xlu0 %v550, 95
  %v581 = vpop.permute.xlu0 %580
  %582 = vrot.lane.b32.xlu0 %v551, 95
  %v583 = vpop.permute.xlu0 %582
  %584 = vrot.lane.b32.xlu0 %v552, 95
  %v585 = vpop.permute.xlu0 %584
  %586 = vrot.lane.b32.xlu0 %v553, 95
  %v587 = vpop.permute.xlu0 %586
  %588 = vrot.lane.b32.xlu0 %v554, 95
  %v589 = vpop.permute.xlu0 %588
  %590 = vrot.lane.b32.xlu0 %v555, 95
  %v591 = vpop.permute.xlu0 %590
  %592 = vrot.lane.b32.xlu0 %v556, 95
  %v593 = vpop.permute.xlu0 %592
  %594 = vrot.lane.b32.xlu0 %v557, 95
  %v595 = vpop.permute.xlu0 %594
  %596 = vrot.lane.b32.xlu0 %v558, 95
  %v597 = vpop.permute.xlu0 %596
  %598 = vrot.lane.b32.xlu0 %v559, 95
  %v599 = vpop.permute.xlu0 %598
  %600 = vrot.lane.b32.xlu0 %v560, 95
  %v601 = vpop.permute.xlu0 %600
  %602 = vrot.lane.b32.xlu0 %v561, 95
  %v603 = vpop.permute.xlu0 %602
  %604 = vrot.lane.b32.xlu0 %v562, 95
  %v605 = vpop.permute.xlu0 %604
  %606 = vrot.lane.b32.xlu0 %v563, 95
  %v607 = vpop.permute.xlu0 %606
  %608 = vrot.lane.b32.xlu0 %v564, 95
  %v609 = vpop.permute.xlu0 %608
  %vm610 = vcmask 777216
  %v611 = vsel %vm610, %v581, %v583
  %v612 = vsel %vm610, %v583, %v585
  %v613 = vsel %vm610, %v585, %v587
  %v614 = vsel %vm610, %v587, %v589
  %v615 = vsel %vm610, %v589, %v591
  %v616 = vsel %vm610, %v591, %v593
  %v617 = vsel %vm610, %v593, %v595
  %v618 = vsel %vm610, %v595, %v597
  %v619 = vsel %vm610, %v597, %v599
  %v620 = vsel %vm610, %v599, %v601
  %v621 = vsel %vm610, %v601, %v603
  %v622 = vsel %vm610, %v603, %v605
  %v623 = vsel %vm610, %v605, %v607
  %v624 = vsel %vm610, %v607, %v609
  %v639 = vadd.f32 %v529, %v611
  %v640 = vadd.f32 %v530, %v612
  %v641 = vadd.f32 %v531, %v613
  %v642 = vadd.f32 %v532, %v614
  %v643 = vadd.f32 %v533, %v615
  %v644 = vadd.f32 %v534, %v616
  %v645 = vadd.f32 %v535, %v617
  %v646 = vadd.f32 %v536, %v618
  %v647 = vadd.f32 %v537, %v619
  %v648 = vadd.f32 %v538, %v620
  %v649 = vadd.f32 %v539, %v621
  %v650 = vadd.f32 %v540, %v622
  %v651 = vadd.f32 %v541, %v623
  %v652 = vadd.f32 %v542, %v624
  %s653 = scalar_lea.vmem %s1, 40
  %v654 = vld [vmem:[%s653] sm:$0xff]
  %656 = vset.pattern.permute.xlu0 0
  %657 = vperm.xlu0 %656, %v654
  %v658 = vpop.permute.xlu0 %657
  %v660 = vmul.f32 %v658, %v143
  %v661 = vmul.f32 %v658, %v147
  %v662 = vmul.f32 %v658, %v151
  %v663 = vmul.f32 %v658, %v155
  %v664 = vmul.f32 %v658, %v159
  %v665 = vmul.f32 %v658, %v163
  %v666 = vmul.f32 %v658, %v167
  %v667 = vmul.f32 %v658, %v171
  %v668 = vmul.f32 %v658, %v175
  %v669 = vmul.f32 %v658, %v179
  %v670 = vmul.f32 %v658, %v183
  %v671 = vmul.f32 %v658, %v187
  %v672 = vmul.f32 %v658, %v191
  %v673 = vmul.f32 %v658, %v195
  %v674 = vmul.f32 %v658, 0.0
  %690 = vrot.lane.b32.xlu0 %v660, 94
  %v691 = vpop.permute.xlu0 %690
  %692 = vrot.lane.b32.xlu0 %v661, 94
  %v693 = vpop.permute.xlu0 %692
  %694 = vrot.lane.b32.xlu0 %v662, 94
  %v695 = vpop.permute.xlu0 %694
  %696 = vrot.lane.b32.xlu0 %v663, 94
  %v697 = vpop.permute.xlu0 %696
  %698 = vrot.lane.b32.xlu0 %v664, 94
  %v699 = vpop.permute.xlu0 %698
  %700 = vrot.lane.b32.xlu0 %v665, 94
  %v701 = vpop.permute.xlu0 %700
  %702 = vrot.lane.b32.xlu0 %v666, 94
  %v703 = vpop.permute.xlu0 %702
  %704 = vrot.lane.b32.xlu0 %v667, 94
  %v705 = vpop.permute.xlu0 %704
  %706 = vrot.lane.b32.xlu0 %v668, 94
  %v707 = vpop.permute.xlu0 %706
  %708 = vrot.lane.b32.xlu0 %v669, 94
  %v709 = vpop.permute.xlu0 %708
  %710 = vrot.lane.b32.xlu0 %v670, 94
  %v711 = vpop.permute.xlu0 %710
  %712 = vrot.lane.b32.xlu0 %v671, 94
  %v713 = vpop.permute.xlu0 %712
  %714 = vrot.lane.b32.xlu0 %v672, 94
  %v715 = vpop.permute.xlu0 %714
  %716 = vrot.lane.b32.xlu0 %v673, 94
  %v717 = vpop.permute.xlu0 %716
  %718 = vrot.lane.b32.xlu0 %v674, 94
  %v719 = vpop.permute.xlu0 %718
  %vm720 = vcmask 769024
  %v721 = vsel %vm720, %v691, %v693
  %v722 = vsel %vm720, %v693, %v695
  %v723 = vsel %vm720, %v695, %v697
  %v724 = vsel %vm720, %v697, %v699
  %v725 = vsel %vm720, %v699, %v701
  %v726 = vsel %vm720, %v701, %v703
  %v727 = vsel %vm720, %v703, %v705
  %v728 = vsel %vm720, %v705, %v707
  %v729 = vsel %vm720, %v707, %v709
  %v730 = vsel %vm720, %v709, %v711
  %v731 = vsel %vm720, %v711, %v713
  %v732 = vsel %vm720, %v713, %v715
  %v733 = vsel %vm720, %v715, %v717
  %v734 = vsel %vm720, %v717, %v719
  %v749 = vadd.f32 %v639, %v721
  %v750 = vadd.f32 %v640, %v722
  %v751 = vadd.f32 %v641, %v723
  %v752 = vadd.f32 %v642, %v724
  %v753 = vadd.f32 %v643, %v725
  %v754 = vadd.f32 %v644, %v726
  %v755 = vadd.f32 %v645, %v727
  %v756 = vadd.f32 %v646, %v728
  %v757 = vadd.f32 %v647, %v729
  %v758 = vadd.f32 %v648, %v730
  %v759 = vadd.f32 %v649, %v731
  %v760 = vadd.f32 %v650, %v732
  %v761 = vadd.f32 %v651, %v733
  %v762 = vadd.f32 %v652, %v734
  %s763 = scalar_lea.vmem %s1, 48
  %v764 = vld [vmem:[%s763] sm:$0xff]
  %766 = vset.pattern.permute.xlu0 0
  %767 = vperm.xlu0 %766, %v764
  %v768 = vpop.permute.xlu0 %767
  %v770 = vmul.f32 %v768, %v143
  %v771 = vmul.f32 %v768, %v147
  %v772 = vmul.f32 %v768, %v151
  %v773 = vmul.f32 %v768, %v155
  %v774 = vmul.f32 %v768, %v159
  %v775 = vmul.f32 %v768, %v163
  %v776 = vmul.f32 %v768, %v167
  %v777 = vmul.f32 %v768, %v171
  %v778 = vmul.f32 %v768, %v175
  %v779 = vmul.f32 %v768, %v179
  %v780 = vmul.f32 %v768, %v183
  %v781 = vmul.f32 %v768, %v187
  %v782 = vmul.f32 %v768, %v191
  %v783 = vmul.f32 %v768, %v195
  %v784 = vmul.f32 %v768, 0.0
  %800 = vrot.lane.b32.xlu0 %v770, 64
  %v801 = vpop.permute.xlu0 %800
  %802 = vrot.lane.b32.xlu0 %v771, 64
  %v803 = vpop.permute.xlu0 %802
  %804 = vrot.lane.b32.xlu0 %v772, 64
  %v805 = vpop.permute.xlu0 %804
  %806 = vrot.lane.b32.xlu0 %v773, 64
  %v807 = vpop.permute.xlu0 %806
  %808 = vrot.lane.b32.xlu0 %v774, 64
  %v809 = vpop.permute.xlu0 %808
  %810 = vrot.lane.b32.xlu0 %v775, 64
  %v811 = vpop.permute.xlu0 %810
  %812 = vrot.lane.b32.xlu0 %v776, 64
  %v813 = vpop.permute.xlu0 %812
  %814 = vrot.lane.b32.xlu0 %v777, 64
  %v815 = vpop.permute.xlu0 %814
  %816 = vrot.lane.b32.xlu0 %v778, 64
  %v817 = vpop.permute.xlu0 %816
  %818 = vrot.lane.b32.xlu0 %v779, 64
  %v819 = vpop.permute.xlu0 %818
  %820 = vrot.lane.b32.xlu0 %v780, 64
  %v821 = vpop.permute.xlu0 %820
  %822 = vrot.lane.b32.xlu0 %v781, 64
  %v823 = vpop.permute.xlu0 %822
  %824 = vrot.lane.b32.xlu0 %v782, 64
  %v825 = vpop.permute.xlu0 %824
  %826 = vrot.lane.b32.xlu0 %v783, 64
  %v827 = vpop.permute.xlu0 %826
  %828 = vrot.lane.b32.xlu0 %v784, 64
  %v829 = vpop.permute.xlu0 %828
  %vm830 = vcmask 523264
  %v831 = vsel %vm830, %v801, %v803
  %v832 = vsel %vm830, %v803, %v805
  %v833 = vsel %vm830, %v805, %v807
  %v834 = vsel %vm830, %v807, %v809
  %v835 = vsel %vm830, %v809, %v811
  %v836 = vsel %vm830, %v811, %v813
  %v837 = vsel %vm830, %v813, %v815
  %v838 = vsel %vm830, %v815, %v817
  %v839 = vsel %vm830, %v817, %v819
  %v840 = vsel %vm830, %v819, %v821
  %v841 = vsel %vm830, %v821, %v823
  %v842 = vsel %vm830, %v823, %v825
  %v843 = vsel %vm830, %v825, %v827
  %v844 = vsel %vm830, %v827, %v829
  %v859 = vadd.f32 %v749, %v831
  %v860 = vadd.f32 %v750, %v832
  %v861 = vadd.f32 %v751, %v833
  %v862 = vadd.f32 %v752, %v834
  %v863 = vadd.f32 %v753, %v835
  %v864 = vadd.f32 %v754, %v836
  %v865 = vadd.f32 %v755, %v837
  %v866 = vadd.f32 %v756, %v838
  %v867 = vadd.f32 %v757, %v839
  %v868 = vadd.f32 %v758, %v840
  %v869 = vadd.f32 %v759, %v841
  %v870 = vadd.f32 %v760, %v842
  %v871 = vadd.f32 %v761, %v843
  %v872 = vadd.f32 %v762, %v844
  %s873 = scalar_lea.vmem %s1, 56
  %v874 = vld [vmem:[%s873] sm:$0xff]
  %876 = vset.pattern.permute.xlu0 0
  %877 = vperm.xlu0 %876, %v874
  %v878 = vpop.permute.xlu0 %877
  %v880 = vmul.f32 %v878, %v143
  %v881 = vmul.f32 %v878, %v147
  %v882 = vmul.f32 %v878, %v151
  %v883 = vmul.f32 %v878, %v155
  %v884 = vmul.f32 %v878, %v159
  %v885 = vmul.f32 %v878, %v163
  %v886 = vmul.f32 %v878, %v167
  %v887 = vmul.f32 %v878, %v171
  %v888 = vmul.f32 %v878, %v175
  %v889 = vmul.f32 %v878, %v179
  %v890 = vmul.f32 %v878, %v183
  %v891 = vmul.f32 %v878, %v187
  %v892 = vmul.f32 %v878, %v191
  %v893 = vmul.f32 %v878, %v195
  %v894 = vmul.f32 %v878, 0.0
  %910 = vrot.lane.b32.xlu0 %v880, 63
  %v911 = vpop.permute.xlu0 %910
  %912 = vrot.lane.b32.xlu0 %v881, 63
  %v913 = vpop.permute.xlu0 %912
  %914 = vrot.lane.b32.xlu0 %v882, 63
  %v915 = vpop.permute.xlu0 %914
  %916 = vrot.lane.b32.xlu0 %v883, 63
  %v917 = vpop.permute.xlu0 %916
  %918 = vrot.lane.b32.xlu0 %v884, 63
  %v919 = vpop.permute.xlu0 %918
  %920 = vrot.lane.b32.xlu0 %v885, 63
  %v921 = vpop.permute.xlu0 %920
  %922 = vrot.lane.b32.xlu0 %v886, 63
  %v923 = vpop.permute.xlu0 %922
  %924 = vrot.lane.b32.xlu0 %v887, 63
  %v925 = vpop.permute.xlu0 %924
  %926 = vrot.lane.b32.xlu0 %v888, 63
  %v927 = vpop.permute.xlu0 %926
  %928 = vrot.lane.b32.xlu0 %v889, 63
  %v929 = vpop.permute.xlu0 %928
  %930 = vrot.lane.b32.xlu0 %v890, 63
  %v931 = vpop.permute.xlu0 %930
  %932 = vrot.lane.b32.xlu0 %v891, 63
  %v933 = vpop.permute.xlu0 %932
  %934 = vrot.lane.b32.xlu0 %v892, 63
  %v935 = vpop.permute.xlu0 %934
  %936 = vrot.lane.b32.xlu0 %v893, 63
  %v937 = vpop.permute.xlu0 %936
  %938 = vrot.lane.b32.xlu0 %v894, 63
  %v939 = vpop.permute.xlu0 %938
  %vm940 = vcmask 515072
  %v941 = vsel %vm940, %v911, %v913
  %v942 = vsel %vm940, %v913, %v915
  %v943 = vsel %vm940, %v915, %v917
  %v944 = vsel %vm940, %v917, %v919
  %v945 = vsel %vm940, %v919, %v921
  %v946 = vsel %vm940, %v921, %v923
  %v947 = vsel %vm940, %v923, %v925
  %v948 = vsel %vm940, %v925, %v927
  %v949 = vsel %vm940, %v927, %v929
  %v950 = vsel %vm940, %v929, %v931
  %v951 = vsel %vm940, %v931, %v933
  %v952 = vsel %vm940, %v933, %v935
  %v953 = vsel %vm940, %v935, %v937
  %v954 = vsel %vm940, %v937, %v939
  %v969 = vadd.f32 %v859, %v941
  %v970 = vadd.f32 %v860, %v942
  %v971 = vadd.f32 %v861, %v943
  %v972 = vadd.f32 %v862, %v944
  %v973 = vadd.f32 %v863, %v945
  %v974 = vadd.f32 %v864, %v946
  %v975 = vadd.f32 %v865, %v947
  %v976 = vadd.f32 %v866, %v948
  %v977 = vadd.f32 %v867, %v949
  %v978 = vadd.f32 %v868, %v950
  %v979 = vadd.f32 %v869, %v951
  %v980 = vadd.f32 %v870, %v952
  %v981 = vadd.f32 %v871, %v953
  %v982 = vadd.f32 %v872, %v954
  %s983 = scalar_lea.vmem %s1, 64
  %v984 = vld [vmem:[%s983] sm:$0xff]
  %986 = vset.pattern.permute.xlu0 0
  %987 = vperm.xlu0 %986, %v984
  %v988 = vpop.permute.xlu0 %987
  %v990 = vmul.f32 %v988, %v143
  %v991 = vmul.f32 %v988, %v147
  %v992 = vmul.f32 %v988, %v151
  %v993 = vmul.f32 %v988, %v155
  %v994 = vmul.f32 %v988, %v159
  %v995 = vmul.f32 %v988, %v163
  %v996 = vmul.f32 %v988, %v167
  %v997 = vmul.f32 %v988, %v171
  %v998 = vmul.f32 %v988, %v175
  %v999 = vmul.f32 %v988, %v179
  %v1000 = vmul.f32 %v988, %v183
  %v1001 = vmul.f32 %v988, %v187
  %v1002 = vmul.f32 %v988, %v191
  %v1003 = vmul.f32 %v988, %v195
  %v1004 = vmul.f32 %v988, 0.0
  %1020 = vrot.lane.b32.xlu0 %v990, 62
  %v1021 = vpop.permute.xlu0 %1020
  %1022 = vrot.lane.b32.xlu0 %v991, 62
  %v1023 = vpop.permute.xlu0 %1022
  %1024 = vrot.lane.b32.xlu0 %v992, 62
  %v1025 = vpop.permute.xlu0 %1024
  %1026 = vrot.lane.b32.xlu0 %v993, 62
  %v1027 = vpop.permute.xlu0 %1026
  %1028 = vrot.lane.b32.xlu0 %v994, 62
  %v1029 = vpop.permute.xlu0 %1028
  %1030 = vrot.lane.b32.xlu0 %v995, 62
  %v1031 = vpop.permute.xlu0 %1030
  %1032 = vrot.lane.b32.xlu0 %v996, 62
  %v1033 = vpop.permute.xlu0 %1032
  %1034 = vrot.lane.b32.xlu0 %v997, 62
  %v1035 = vpop.permute.xlu0 %1034
  %1036 = vrot.lane.b32.xlu0 %v998, 62
  %v1037 = vpop.permute.xlu0 %1036
  %1038 = vrot.lane.b32.xlu0 %v999, 62
  %v1039 = vpop.permute.xlu0 %1038
  %1040 = vrot.lane.b32.xlu0 %v1000, 62
  %v1041 = vpop.permute.xlu0 %1040
  %1042 = vrot.lane.b32.xlu0 %v1001, 62
  %v1043 = vpop.permute.xlu0 %1042
  %1044 = vrot.lane.b32.xlu0 %v1002, 62
  %v1045 = vpop.permute.xlu0 %1044
  %1046 = vrot.lane.b32.xlu0 %v1003, 62
  %v1047 = vpop.permute.xlu0 %1046
  %1048 = vrot.lane.b32.xlu0 %v1004, 62
  %v1049 = vpop.permute.xlu0 %1048
  %vm1050 = vcmask 506880
  %v1051 = vsel %vm1050, %v1021, %v1023
  %v1052 = vsel %vm1050, %v1023, %v1025
  %v1053 = vsel %vm1050, %v1025, %v1027
  %v1054 = vsel %vm1050, %v1027, %v1029
  %v1055 = vsel %vm1050, %v1029, %v1031
  %v1056 = vsel %vm1050, %v1031, %v1033
  %v1057 = vsel %vm1050, %v1033, %v1035
  %v1058 = vsel %vm1050, %v1035, %v1037
  %v1059 = vsel %vm1050, %v1037, %v1039
  %v1060 = vsel %vm1050, %v1039, %v1041
  %v1061 = vsel %vm1050, %v1041, %v1043
  %v1062 = vsel %vm1050, %v1043, %v1045
  %v1063 = vsel %vm1050, %v1045, %v1047
  %v1064 = vsel %vm1050, %v1047, %v1049
  %v1079 = vadd.f32 %v969, %v1051
  %v1080 = vadd.f32 %v970, %v1052
  %v1081 = vadd.f32 %v971, %v1053
  %v1082 = vadd.f32 %v972, %v1054
  %v1083 = vadd.f32 %v973, %v1055
  %v1084 = vadd.f32 %v974, %v1056
  %v1085 = vadd.f32 %v975, %v1057
  %v1086 = vadd.f32 %v976, %v1058
  %v1087 = vadd.f32 %v977, %v1059
  %v1088 = vadd.f32 %v978, %v1060
  %v1089 = vadd.f32 %v979, %v1061
  %v1090 = vadd.f32 %v980, %v1062
  %v1091 = vadd.f32 %v981, %v1063
  %v1092 = vadd.f32 %v982, %v1064
  %v1093 = vld [vmem:[%s2] sm:$0xff]
  %1095 = vset.pattern.permute.xlu0 0
  %1096 = vperm.xlu0 %1095, %v1093
  %v1097 = vpop.permute.xlu0 %1096
  %v1099 = vadd.f32 %v1079, %v1097
  %v1100 = vadd.f32 %v1080, %v1097
  %v1101 = vadd.f32 %v1081, %v1097
  %v1102 = vadd.f32 %v1082, %v1097
  %v1103 = vadd.f32 %v1083, %v1097
  %v1104 = vadd.f32 %v1084, %v1097
  %v1105 = vadd.f32 %v1085, %v1097
  %v1106 = vadd.f32 %v1086, %v1097
  %v1107 = vadd.f32 %v1087, %v1097
  %v1108 = vadd.f32 %v1088, %v1097
  %v1109 = vadd.f32 %v1089, %v1097
  %v1110 = vadd.f32 %v1090, %v1097
  %v1111 = vadd.f32 %v1091, %v1097
  %v1112 = vadd.f32 %v1092, %v1097
  %v1113 = vmax.f32 %v1099, 0.0
  %v1114 = vmax.f32 %v1100, 0.0
  %v1115 = vmax.f32 %v1101, 0.0
  %v1116 = vmax.f32 %v1102, 0.0
  %v1117 = vmax.f32 %v1103, 0.0
  %v1118 = vmax.f32 %v1104, 0.0
  %v1119 = vmax.f32 %v1105, 0.0
  %v1120 = vmax.f32 %v1106, 0.0
  %v1121 = vmax.f32 %v1107, 0.0
  %v1122 = vmax.f32 %v1108, 0.0
  %v1123 = vmax.f32 %v1109, 0.0
  %v1124 = vmax.f32 %v1110, 0.0
  %v1125 = vmax.f32 %v1111, 0.0
  %v1126 = vmax.f32 %v1112, 0.0
  %1142 = vrot.lane.b32.xlu0 %v1113, 127
  %v1143 = vpop.permute.xlu0 %1142
  %1144 = vrot.lane.b32.xlu0 %v1114, 127
  %v1145 = vpop.permute.xlu0 %1144
  %1146 = vrot.lane.b32.xlu0 %v1115, 127
  %v1147 = vpop.permute.xlu0 %1146
  %1148 = vrot.lane.b32.xlu0 %v1116, 127
  %v1149 = vpop.permute.xlu0 %1148
  %1150 = vrot.lane.b32.xlu0 %v1117, 127
  %v1151 = vpop.permute.xlu0 %1150
  %1152 = vrot.lane.b32.xlu0 %v1118, 127
  %v1153 = vpop.permute.xlu0 %1152
  %1154 = vrot.lane.b32.xlu0 %v1119, 127
  %v1155 = vpop.permute.xlu0 %1154
  %1156 = vrot.lane.b32.xlu0 %v1120, 127
  %v1157 = vpop.permute.xlu0 %1156
  %1158 = vrot.lane.b32.xlu0 %v1121, 127
  %v1159 = vpop.permute.xlu0 %1158
  %1160 = vrot.lane.b32.xlu0 %v1122, 127
  %v1161 = vpop.permute.xlu0 %1160
  %1162 = vrot.lane.b32.xlu0 %v1123, 127
  %v1163 = vpop.permute.xlu0 %1162
  %1164 = vrot.lane.b32.xlu0 %v1124, 127
  %v1165 = vpop.permute.xlu0 %1164
  %1166 = vrot.lane.b32.xlu0 %v1125, 127
  %v1167 = vpop.permute.xlu0 %1166
  %1168 = vrot.lane.b32.xlu0 %v1126, 127
  %v1169 = vpop.permute.xlu0 %1168
  %1170 = vrot.lane.b32.xlu0 0.0, 127
  %v1171 = vpop.permute.xlu0 %1170
  %v1172 = vsel %vm280, %v1143, %v1145
  %v1173 = vsel %vm280, %v1145, %v1147
  %v1174 = vsel %vm280, %v1147, %v1149
  %v1175 = vsel %vm280, %v1149, %v1151
  %v1176 = vsel %vm280, %v1151, %v1153
  %v1177 = vsel %vm280, %v1153, %v1155
  %v1178 = vsel %vm280, %v1155, %v1157
  %v1179 = vsel %vm280, %v1157, %v1159
  %v1180 = vsel %vm280, %v1159, %v1161
  %v1181 = vsel %vm280, %v1161, %v1163
  %v1182 = vsel %vm280, %v1163, %v1165
  %v1183 = vsel %vm280, %v1165, %v1167
  %v1184 = vsel %vm280, %v1167, %v1169
  %v1185 = vsel %vm280, %v1169, %v1171
  %1200 = vrot.lane.b32.xlu0 %v1113, 126
  %v1201 = vpop.permute.xlu0 %1200
  %1202 = vrot.lane.b32.xlu0 %v1114, 126
  %v1203 = vpop.permute.xlu0 %1202
  %1204 = vrot.lane.b32.xlu0 %v1115, 126
  %v1205 = vpop.permute.xlu0 %1204
  %1206 = vrot.lane.b32.xlu0 %v1116, 126
  %v1207 = vpop.permute.xlu0 %1206
  %1208 = vrot.lane.b32.xlu0 %v1117, 126
  %v1209 = vpop.permute.xlu0 %1208
  %1210 = vrot.lane.b32.xlu0 %v1118, 126
  %v1211 = vpop.permute.xlu0 %1210
  %1212 = vrot.lane.b32.xlu0 %v1119, 126
  %v1213 = vpop.permute.xlu0 %1212
  %1214 = vrot.lane.b32.xlu0 %v1120, 126
  %v1215 = vpop.permute.xlu0 %1214
  %1216 = vrot.lane.b32.xlu0 %v1121, 126
  %v1217 = vpop.permute.xlu0 %1216
  %1218 = vrot.lane.b32.xlu0 %v1122, 126
  %v1219 = vpop.permute.xlu0 %1218
  %1220 = vrot.lane.b32.xlu0 %v1123, 126
  %v1221 = vpop.permute.xlu0 %1220
  %1222 = vrot.lane.b32.xlu0 %v1124, 126
  %v1223 = vpop.permute.xlu0 %1222
  %1224 = vrot.lane.b32.xlu0 %v1125, 126
  %v1225 = vpop.permute.xlu0 %1224
  %1226 = vrot.lane.b32.xlu0 %v1126, 126
  %v1227 = vpop.permute.xlu0 %1226
  %1228 = vrot.lane.b32.xlu0 0.0, 126
  %v1229 = vpop.permute.xlu0 %1228
  %v1230 = vsel %vm390, %v1201, %v1203
  %v1231 = vsel %vm390, %v1203, %v1205
  %v1232 = vsel %vm390, %v1205, %v1207
  %v1233 = vsel %vm390, %v1207, %v1209
  %v1234 = vsel %vm390, %v1209, %v1211
  %v1235 = vsel %vm390, %v1211, %v1213
  %v1236 = vsel %vm390, %v1213, %v1215
  %v1237 = vsel %vm390, %v1215, %v1217
  %v1238 = vsel %vm390, %v1217, %v1219
  %v1239 = vsel %vm390, %v1219, %v1221
  %v1240 = vsel %vm390, %v1221, %v1223
  %v1241 = vsel %vm390, %v1223, %v1225
  %v1242 = vsel %vm390, %v1225, %v1227
  %v1243 = vsel %vm390, %v1227, %v1229
  %1258 = vrot.lane.b32.xlu0 %v1113, 96
  %v1259 = vpop.permute.xlu0 %1258
  %1260 = vrot.lane.b32.xlu0 %v1114, 96
  %v1261 = vpop.permute.xlu0 %1260
  %1262 = vrot.lane.b32.xlu0 %v1115, 96
  %v1263 = vpop.permute.xlu0 %1262
  %1264 = vrot.lane.b32.xlu0 %v1116, 96
  %v1265 = vpop.permute.xlu0 %1264
  %1266 = vrot.lane.b32.xlu0 %v1117, 96
  %v1267 = vpop.permute.xlu0 %1266
  %1268 = vrot.lane.b32.xlu0 %v1118, 96
  %v1269 = vpop.permute.xlu0 %1268
  %1270 = vrot.lane.b32.xlu0 %v1119, 96
  %v1271 = vpop.permute.xlu0 %1270
  %1272 = vrot.lane.b32.xlu0 %v1120, 96
  %v1273 = vpop.permute.xlu0 %1272
  %1274 = vrot.lane.b32.xlu0 %v1121, 96
  %v1275 = vpop.permute.xlu0 %1274
  %1276 = vrot.lane.b32.xlu0 %v1122, 96
  %v1277 = vpop.permute.xlu0 %1276
  %1278 = vrot.lane.b32.xlu0 %v1123, 96
  %v1279 = vpop.permute.xlu0 %1278
  %1280 = vrot.lane.b32.xlu0 %v1124, 96
  %v1281 = vpop.permute.xlu0 %1280
  %1282 = vrot.lane.b32.xlu0 %v1125, 96
  %v1283 = vpop.permute.xlu0 %1282
  %1284 = vrot.lane.b32.xlu0 %v1126, 96
  %v1285 = vpop.permute.xlu0 %1284
  %1286 = vrot.lane.b32.xlu0 0.0, 96
  %v1287 = vpop.permute.xlu0 %1286
  %v1288 = vsel %vm500, %v1259, %v1261
  %v1289 = vsel %vm500, %v1261, %v1263
  %v1290 = vsel %vm500, %v1263, %v1265
  %v1291 = vsel %vm500, %v1265, %v1267
  %v1292 = vsel %vm500, %v1267, %v1269
  %v1293 = vsel %vm500, %v1269, %v1271
  %v1294 = vsel %vm500, %v1271, %v1273
  %v1295 = vsel %vm500, %v1273, %v1275
  %v1296 = vsel %vm500, %v1275, %v1277
  %v1297 = vsel %vm500, %v1277, %v1279
  %v1298 = vsel %vm500, %v1279, %v1281
  %v1299 = vsel %vm500, %v1281, %v1283
  %v1300 = vsel %vm500, %v1283, %v1285
  %v1301 = vsel %vm500, %v1285, %v1287
  %1316 = vrot.lane.b32.xlu0 %v1113, 95
  %v1317 = vpop.permute.xlu0 %1316
  %1318 = vrot.lane.b32.xlu0 %v1114, 95
  %v1319 = vpop.permute.xlu0 %1318
  %1320 = vrot.lane.b32.xlu0 %v1115, 95
  %v1321 = vpop.permute.xlu0 %1320
  %1322 = vrot.lane.b32.xlu0 %v1116, 95
  %v1323 = vpop.permute.xlu0 %1322
  %1324 = vrot.lane.b32.xlu0 %v1117, 95
  %v1325 = vpop.permute.xlu0 %1324
  %1326 = vrot.lane.b32.xlu0 %v1118, 95
  %v1327 = vpop.permute.xlu0 %1326
  %1328 = vrot.lane.b32.xlu0 %v1119, 95
  %v1329 = vpop.permute.xlu0 %1328
  %1330 = vrot.lane.b32.xlu0 %v1120, 95
  %v1331 = vpop.permute.xlu0 %1330
  %1332 = vrot.lane.b32.xlu0 %v1121, 95
  %v1333 = vpop.permute.xlu0 %1332
  %1334 = vrot.lane.b32.xlu0 %v1122, 95
  %v1335 = vpop.permute.xlu0 %1334
  %1336 = vrot.lane.b32.xlu0 %v1123, 95
  %v1337 = vpop.permute.xlu0 %1336
  %1338 = vrot.lane.b32.xlu0 %v1124, 95
  %v1339 = vpop.permute.xlu0 %1338
  %1340 = vrot.lane.b32.xlu0 %v1125, 95
  %v1341 = vpop.permute.xlu0 %1340
  %1342 = vrot.lane.b32.xlu0 %v1126, 95
  %v1343 = vpop.permute.xlu0 %1342
  %1344 = vrot.lane.b32.xlu0 0.0, 95
  %v1345 = vpop.permute.xlu0 %1344
  %v1346 = vsel %vm610, %v1317, %v1319
  %v1347 = vsel %vm610, %v1319, %v1321
  %v1348 = vsel %vm610, %v1321, %v1323
  %v1349 = vsel %vm610, %v1323, %v1325
  %v1350 = vsel %vm610, %v1325, %v1327
  %v1351 = vsel %vm610, %v1327, %v1329
  %v1352 = vsel %vm610, %v1329, %v1331
  %v1353 = vsel %vm610, %v1331, %v1333
  %v1354 = vsel %vm610, %v1333, %v1335
  %v1355 = vsel %vm610, %v1335, %v1337
  %v1356 = vsel %vm610, %v1337, %v1339
  %v1357 = vsel %vm610, %v1339, %v1341
  %v1358 = vsel %vm610, %v1341, %v1343
  %v1359 = vsel %vm610, %v1343, %v1345
  %1374 = vrot.lane.b32.xlu0 %v1113, 94
  %v1375 = vpop.permute.xlu0 %1374
  %1376 = vrot.lane.b32.xlu0 %v1114, 94
  %v1377 = vpop.permute.xlu0 %1376
  %1378 = vrot.lane.b32.xlu0 %v1115, 94
  %v1379 = vpop.permute.xlu0 %1378
  %1380 = vrot.lane.b32.xlu0 %v1116, 94
  %v1381 = vpop.permute.xlu0 %1380
  %1382 = vrot.lane.b32.xlu0 %v1117, 94
  %v1383 = vpop.permute.xlu0 %1382
  %1384 = vrot.lane.b32.xlu0 %v1118, 94
  %v1385 = vpop.permute.xlu0 %1384
  %1386 = vrot.lane.b32.xlu0 %v1119, 94
  %v1387 = vpop.permute.xlu0 %1386
  %1388 = vrot.lane.b32.xlu0 %v1120, 94
  %v1389 = vpop.permute.xlu0 %1388
  %1390 = vrot.lane.b32.xlu0 %v1121, 94
  %v1391 = vpop.permute.xlu0 %1390
  %1392 = vrot.lane.b32.xlu0 %v1122, 94
  %v1393 = vpop.permute.xlu0 %1392
  %1394 = vrot.lane.b32.xlu0 %v1123, 94
  %v1395 = vpop.permute.xlu0 %1394
  %1396 = vrot.lane.b32.xlu0 %v1124, 94
  %v1397 = vpop.permute.xlu0 %1396
  %1398 = vrot.lane.b32.xlu0 %v1125, 94
  %v1399 = vpop.permute.xlu0 %1398
  %1400 = vrot.lane.b32.xlu0 %v1126, 94
  %v1401 = vpop.permute.xlu0 %1400
  %1402 = vrot.lane.b32.xlu0 0.0, 94
  %v1403 = vpop.permute.xlu0 %1402
  %v1404 = vsel %vm720, %v1375, %v1377
  %v1405 = vsel %vm720, %v1377, %v1379
  %v1406 = vsel %vm720, %v1379, %v1381
  %v1407 = vsel %vm720, %v1381, %v1383
  %v1408 = vsel %vm720, %v1383, %v1385
  %v1409 = vsel %vm720, %v1385, %v1387
  %v1410 = vsel %vm720, %v1387, %v1389
  %v1411 = vsel %vm720, %v1389, %v1391
  %v1412 = vsel %vm720, %v1391, %v1393
  %v1413 = vsel %vm720, %v1393, %v1395
  %v1414 = vsel %vm720, %v1395, %v1397
  %v1415 = vsel %vm720, %v1397, %v1399
  %v1416 = vsel %vm720, %v1399, %v1401
  %v1417 = vsel %vm720, %v1401, %v1403
  %1432 = vrot.lane.b32.xlu0 %v1113, 64
  %v1433 = vpop.permute.xlu0 %1432
  %1434 = vrot.lane.b32.xlu0 %v1114, 64
  %v1435 = vpop.permute.xlu0 %1434
  %1436 = vrot.lane.b32.xlu0 %v1115, 64
  %v1437 = vpop.permute.xlu0 %1436
  %1438 = vrot.lane.b32.xlu0 %v1116, 64
  %v1439 = vpop.permute.xlu0 %1438
  %1440 = vrot.lane.b32.xlu0 %v1117, 64
  %v1441 = vpop.permute.xlu0 %1440
  %1442 = vrot.lane.b32.xlu0 %v1118, 64
  %v1443 = vpop.permute.xlu0 %1442
  %1444 = vrot.lane.b32.xlu0 %v1119, 64
  %v1445 = vpop.permute.xlu0 %1444
  %1446 = vrot.lane.b32.xlu0 %v1120, 64
  %v1447 = vpop.permute.xlu0 %1446
  %1448 = vrot.lane.b32.xlu0 %v1121, 64
  %v1449 = vpop.permute.xlu0 %1448
  %1450 = vrot.lane.b32.xlu0 %v1122, 64
  %v1451 = vpop.permute.xlu0 %1450
  %1452 = vrot.lane.b32.xlu0 %v1123, 64
  %v1453 = vpop.permute.xlu0 %1452
  %1454 = vrot.lane.b32.xlu0 %v1124, 64
  %v1455 = vpop.permute.xlu0 %1454
  %1456 = vrot.lane.b32.xlu0 %v1125, 64
  %v1457 = vpop.permute.xlu0 %1456
  %1458 = vrot.lane.b32.xlu0 %v1126, 64
  %v1459 = vpop.permute.xlu0 %1458
  %1460 = vrot.lane.b32.xlu0 0.0, 64
  %v1461 = vpop.permute.xlu0 %1460
  %v1462 = vsel %vm830, %v1433, %v1435
  %v1463 = vsel %vm830, %v1435, %v1437
  %v1464 = vsel %vm830, %v1437, %v1439
  %v1465 = vsel %vm830, %v1439, %v1441
  %v1466 = vsel %vm830, %v1441, %v1443
  %v1467 = vsel %vm830, %v1443, %v1445
  %v1468 = vsel %vm830, %v1445, %v1447
  %v1469 = vsel %vm830, %v1447, %v1449
  %v1470 = vsel %vm830, %v1449, %v1451
  %v1471 = vsel %vm830, %v1451, %v1453
  %v1472 = vsel %vm830, %v1453, %v1455
  %v1473 = vsel %vm830, %v1455, %v1457
  %v1474 = vsel %vm830, %v1457, %v1459
  %v1475 = vsel %vm830, %v1459, %v1461
  %1490 = vrot.lane.b32.xlu0 %v1113, 63
  %v1491 = vpop.permute.xlu0 %1490
  %1492 = vrot.lane.b32.xlu0 %v1114, 63
  %v1493 = vpop.permute.xlu0 %1492
  %1494 = vrot.lane.b32.xlu0 %v1115, 63
  %v1495 = vpop.permute.xlu0 %1494
  %1496 = vrot.lane.b32.xlu0 %v1116, 63
  %v1497 = vpop.permute.xlu0 %1496
  %1498 = vrot.lane.b32.xlu0 %v1117, 63
  %v1499 = vpop.permute.xlu0 %1498
  %1500 = vrot.lane.b32.xlu0 %v1118, 63
  %v1501 = vpop.permute.xlu0 %1500
  %1502 = vrot.lane.b32.xlu0 %v1119, 63
  %v1503 = vpop.permute.xlu0 %1502
  %1504 = vrot.lane.b32.xlu0 %v1120, 63
  %v1505 = vpop.permute.xlu0 %1504
  %1506 = vrot.lane.b32.xlu0 %v1121, 63
  %v1507 = vpop.permute.xlu0 %1506
  %1508 = vrot.lane.b32.xlu0 %v1122, 63
  %v1509 = vpop.permute.xlu0 %1508
  %1510 = vrot.lane.b32.xlu0 %v1123, 63
  %v1511 = vpop.permute.xlu0 %1510
  %1512 = vrot.lane.b32.xlu0 %v1124, 63
  %v1513 = vpop.permute.xlu0 %1512
  %1514 = vrot.lane.b32.xlu0 %v1125, 63
  %v1515 = vpop.permute.xlu0 %1514
  %1516 = vrot.lane.b32.xlu0 %v1126, 63
  %v1517 = vpop.permute.xlu0 %1516
  %1518 = vrot.lane.b32.xlu0 0.0, 63
  %v1519 = vpop.permute.xlu0 %1518
  %v1520 = vsel %vm940, %v1491, %v1493
  %v1521 = vsel %vm940, %v1493, %v1495
  %v1522 = vsel %vm940, %v1495, %v1497
  %v1523 = vsel %vm940, %v1497, %v1499
  %v1524 = vsel %vm940, %v1499, %v1501
  %v1525 = vsel %vm940, %v1501, %v1503
  %v1526 = vsel %vm940, %v1503, %v1505
  %v1527 = vsel %vm940, %v1505, %v1507
  %v1528 = vsel %vm940, %v1507, %v1509
  %v1529 = vsel %vm940, %v1509, %v1511
  %v1530 = vsel %vm940, %v1511, %v1513
  %v1531 = vsel %vm940, %v1513, %v1515
  %v1532 = vsel %vm940, %v1515, %v1517
  %v1533 = vsel %vm940, %v1517, %v1519
  %1548 = vrot.lane.b32.xlu0 %v1113, 62
  %v1549 = vpop.permute.xlu0 %1548
  %1550 = vrot.lane.b32.xlu0 %v1114, 62
  %v1551 = vpop.permute.xlu0 %1550
  %1552 = vrot.lane.b32.xlu0 %v1115, 62
  %v1553 = vpop.permute.xlu0 %1552
  %1554 = vrot.lane.b32.xlu0 %v1116, 62
  %v1555 = vpop.permute.xlu0 %1554
  %1556 = vrot.lane.b32.xlu0 %v1117, 62
  %v1557 = vpop.permute.xlu0 %1556
  %1558 = vrot.lane.b32.xlu0 %v1118, 62
  %v1559 = vpop.permute.xlu0 %1558
  %1560 = vrot.lane.b32.xlu0 %v1119, 62
  %v1561 = vpop.permute.xlu0 %1560
  %1562 = vrot.lane.b32.xlu0 %v1120, 62
  %v1563 = vpop.permute.xlu0 %1562
  %1564 = vrot.lane.b32.xlu0 %v1121, 62
  %v1565 = vpop.permute.xlu0 %1564
  %1566 = vrot.lane.b32.xlu0 %v1122, 62
  %v1567 = vpop.permute.xlu0 %1566
  %1568 = vrot.lane.b32.xlu0 %v1123, 62
  %v1569 = vpop.permute.xlu0 %1568
  %1570 = vrot.lane.b32.xlu0 %v1124, 62
  %v1571 = vpop.permute.xlu0 %1570
  %1572 = vrot.lane.b32.xlu0 %v1125, 62
  %v1573 = vpop.permute.xlu0 %1572
  %1574 = vrot.lane.b32.xlu0 %v1126, 62
  %v1575 = vpop.permute.xlu0 %1574
  %1576 = vrot.lane.b32.xlu0 0.0, 62
  %v1577 = vpop.permute.xlu0 %1576
  %v1578 = vsel %vm1050, %v1549, %v1551
  %v1579 = vsel %vm1050, %v1551, %v1553
  %v1580 = vsel %vm1050, %v1553, %v1555
  %v1581 = vsel %vm1050, %v1555, %v1557
  %v1582 = vsel %vm1050, %v1557, %v1559
  %v1583 = vsel %vm1050, %v1559, %v1561
  %v1584 = vsel %vm1050, %v1561, %v1563
  %v1585 = vsel %vm1050, %v1563, %v1565
  %v1586 = vsel %vm1050, %v1565, %v1567
  %v1587 = vsel %vm1050, %v1567, %v1569
  %v1588 = vsel %vm1050, %v1569, %v1571
  %v1589 = vsel %vm1050, %v1571, %v1573
  %v1590 = vsel %vm1050, %v1573, %v1575
  %v1591 = vsel %vm1050, %v1575, %v1577
  %v1606 = vpack.c.bf16 %v1172, %v1113
  %v1607 = vpack.c.bf16 %v1173, %v1114
  %v1608 = vpack.c.bf16 %v1174, %v1115
  %v1609 = vpack.c.bf16 %v1175, %v1116
  %v1610 = vpack.c.bf16 %v1176, %v1117
  %v1611 = vpack.c.bf16 %v1177, %v1118
  %v1612 = vpack.c.bf16 %v1178, %v1119
  %v1613 = vpack.c.bf16 %v1179, %v1120
  %v1614 = vpack.c.bf16 %v1180, %v1121
  %v1615 = vpack.c.bf16 %v1181, %v1122
  %v1616 = vpack.c.bf16 %v1182, %v1123
  %v1617 = vpack.c.bf16 %v1183, %v1124
  %v1618 = vpack.c.bf16 %v1184, %v1125
  %v1619 = vpack.c.bf16 %v1185, %v1126
  %v1620 = vpack.c.bf16 %v1288, %v1230
  %v1621 = vpack.c.bf16 %v1289, %v1231
  %v1622 = vpack.c.bf16 %v1290, %v1232
  %v1623 = vpack.c.bf16 %v1291, %v1233
  %v1624 = vpack.c.bf16 %v1292, %v1234
  %v1625 = vpack.c.bf16 %v1293, %v1235
  %v1626 = vpack.c.bf16 %v1294, %v1236
  %v1627 = vpack.c.bf16 %v1295, %v1237
  %v1628 = vpack.c.bf16 %v1296, %v1238
  %v1629 = vpack.c.bf16 %v1297, %v1239
  %v1630 = vpack.c.bf16 %v1298, %v1240
  %v1631 = vpack.c.bf16 %v1299, %v1241
  %v1632 = vpack.c.bf16 %v1300, %v1242
  %v1633 = vpack.c.bf16 %v1301, %v1243
  %v1634 = vpack.c.bf16 %v1404, %v1346
  %v1635 = vpack.c.bf16 %v1405, %v1347
  %v1636 = vpack.c.bf16 %v1406, %v1348
  %v1637 = vpack.c.bf16 %v1407, %v1349
  %v1638 = vpack.c.bf16 %v1408, %v1350
  %v1639 = vpack.c.bf16 %v1409, %v1351
  %v1640 = vpack.c.bf16 %v1410, %v1352
  %v1641 = vpack.c.bf16 %v1411, %v1353
  %v1642 = vpack.c.bf16 %v1412, %v1354
  %v1643 = vpack.c.bf16 %v1413, %v1355
  %v1644 = vpack.c.bf16 %v1414, %v1356
  %v1645 = vpack.c.bf16 %v1415, %v1357
  %v1646 = vpack.c.bf16 %v1416, %v1358
  %v1647 = vpack.c.bf16 %v1417, %v1359
  %v1648 = vpack.c.bf16 %v1520, %v1462
  %v1649 = vpack.c.bf16 %v1521, %v1463
  %v1650 = vpack.c.bf16 %v1522, %v1464
  %v1651 = vpack.c.bf16 %v1523, %v1465
  %v1652 = vpack.c.bf16 %v1524, %v1466
  %v1653 = vpack.c.bf16 %v1525, %v1467
  %v1654 = vpack.c.bf16 %v1526, %v1468
  %v1655 = vpack.c.bf16 %v1527, %v1469
  %v1656 = vpack.c.bf16 %v1528, %v1470
  %v1657 = vpack.c.bf16 %v1529, %v1471
  %v1658 = vpack.c.bf16 %v1530, %v1472
  %v1659 = vpack.c.bf16 %v1531, %v1473
  %v1660 = vpack.c.bf16 %v1532, %v1474
  %v1661 = vpack.c.bf16 %v1533, %v1475
  %v1662 = vpack.c.bf16 %v1578, %v1578
  %v1663 = vpack.c.bf16 %v1579, %v1579
  %v1664 = vpack.c.bf16 %v1580, %v1580
  %v1665 = vpack.c.bf16 %v1581, %v1581
  %v1666 = vpack.c.bf16 %v1582, %v1582
  %v1667 = vpack.c.bf16 %v1583, %v1583
  %v1668 = vpack.c.bf16 %v1584, %v1584
  %v1669 = vpack.c.bf16 %v1585, %v1585
  %v1670 = vpack.c.bf16 %v1586, %v1586
  %v1671 = vpack.c.bf16 %v1587, %v1587
  %v1672 = vpack.c.bf16 %v1588, %v1588
  %v1673 = vpack.c.bf16 %v1589, %v1589
  %v1674 = vpack.c.bf16 %v1590, %v1590
  %v1675 = vpack.c.bf16 %v1591, %v1591
  %v1676 = vld [vmem:[%s3] sm:$0xf]
  %v1677 = vld [vmem:[%s3 + $0x4] sm:$0xf]
  %v1678 = vld [vmem:[%s4] sm:$0xff]
  %v1679 = vld [vmem:[%s4 + $0x8] sm:$0xff]
  %1681 = vset.pattern.permute.xlu0 0
  %1682 = vperm.xlu0 %1681, %v1678
  %v1683 = vpop.permute.xlu0 %1682
  %1686 = vset.pattern.permute.xlu0 0
  %1687 = vperm.xlu0 %1686, %v1679
  %v1688 = vpop.permute.xlu0 %1687
  %v1692 = vunpack.c.l.b16 %v1676
  %v1693 = vunpack.c.l.b16 %v1677
  %v1694 = vpack.c.b16 %v1693, %v1692
  %vm1695 = vcmask 588800
  %v1697 = vsel %vm1695, %v1694, 0
  %vm1699 = vcmask 1043456
  %v1701 = vsel %vm1699, %v1662, 0
  %v1704 = vsel %vm1699, %v1663, 0
  %v1707 = vsel %vm1699, %v1664, 0
  %v1710 = vsel %vm1699, %v1665, 0
  %v1713 = vsel %vm1699, %v1666, 0
  %v1716 = vsel %vm1699, %v1667, 0
  %v1719 = vsel %vm1699, %v1668, 0
  %v1722 = vsel %vm1699, %v1669, 0
  %v1725 = vsel %vm1699, %v1670, 0
  %v1728 = vsel %vm1699, %v1671, 0
  %v1731 = vsel %vm1699, %v1672, 0
  %v1734 = vsel %vm1699, %v1673, 0
  %v1737 = vsel %vm1699, %v1674, 0
  %v1740 = vsel %vm1699, %v1675, 0
  %1742 = vmatprep.subr.bf16.mxu0 %v1607
  %1743 = vmatpush1.bf16.msra.mxu0 %v1606
  %1744 = vmatprep.subr.bf16.mxu0 %v1621
  %1745 = vmatpush1.bf16.msra.mxu0 %v1620
  %1746 = vmatprep.subr.bf16.mxu0 %v1635
  %1747 = vmatpush1.bf16.msra.mxu0 %v1634
  %1748 = vmatprep.subr.bf16.mxu0 %v1649
  %1749 = vmatpush1.bf16.msra.mxu0 %v1648
  %1750 = vmatprep.subr.bf16.mxu0 %v1704
  %1751 = vmatpush1.bf16.msra.mxu0 %v1701
  %1752 = vmatprep.subr.bf16.mxu0 0
  %1753 = vmatpush1.bf16.msra.mxu0 0
  %1754 = vmatprep.subr.bf16.mxu0 0
  %1755 = vmatpush1.bf16.msra.mxu0 0
  %1756 = vmatprep.subr.bf16.mxu0 0
  %1757 = vmatpush1.bf16.msra.mxu0 0
  %1758 = vmatprep.subr.bf16.mxu0 0
  %1759 = vmatpush1.bf16.msra.mxu0 0
  %1760 = vmatprep.subr.bf16.mxu0 0
  %1761 = vmatpush1.bf16.msra.mxu0 0
  %1762 = vmatprep.subr.bf16.mxu0 0
  %1763 = vmatpush1.bf16.msra.mxu0 0
  %1764 = vmatprep.subr.bf16.mxu0 0
  %1765 = vmatpush1.bf16.msra.mxu0 0
  %1766 = vmatprep.subr.bf16.mxu0 0
  %1767 = vmatpush1.bf16.msra.mxu0 0
  %1768 = vmatprep.subr.bf16.mxu0 0
  %1769 = vmatpush1.bf16.msra.mxu0 0
  %1770 = vmatprep.subr.bf16.mxu0 0
  %1771 = vmatpush1.bf16.msra.mxu0 0
  %1772 = vmatprep.subr.bf16.mxu0 0
  %1773 = vmatpush1.bf16.msra.mxu0 0
  %1774 = vmatprep.mubr.bf16.mxu0 0
  %1775 = vmatmul.mubr.bf16.gmra.mrb[0].mxu0 %v1697
  %v1776 = vpop.f32.mrb[0].mxu0
  %v1777 = vadd.f32 %v1683, %v1776
  %v1778 = vpop.f32.mrb[0].mxu0
  %v1779 = vadd.f32 %v1683, %v1778
  %v1780 = vpop.f32.mrb[0].mxu0
  %v1781 = vadd.f32 %v1688, %v1780
  %v1782 = vpop.f32.mrb[0].mxu0
  %v1783 = vadd.f32 %v1688, %v1782
  %1784 = vdwg.mxu0
  %1785 = vmatprep.subr.bf16.mxu0 %v1609
  %1786 = vmatpush1.bf16.msra.mxu0 %v1608
  %1787 = vmatprep.subr.bf16.mxu0 %v1623
  %1788 = vmatpush1.bf16.msra.mxu0 %v1622
  %1789 = vmatprep.subr.bf16.mxu0 %v1637
  %1790 = vmatpush1.bf16.msra.mxu0 %v1636
  %1791 = vmatprep.subr.bf16.mxu0 %v1651
  %1792 = vmatpush1.bf16.msra.mxu0 %v1650
  %1793 = vmatprep.subr.bf16.mxu0 %v1710
  %1794 = vmatpush1.bf16.msra.mxu0 %v1707
  %1795 = vmatprep.subr.bf16.mxu0 0
  %1796 = vmatpush1.bf16.msra.mxu0 0
  %1797 = vmatprep.subr.bf16.mxu0 0
  %1798 = vmatpush1.bf16.msra.mxu0 0
  %1799 = vmatprep.subr.bf16.mxu0 0
  %1800 = vmatpush1.bf16.msra.mxu0 0
  %1801 = vmatprep.subr.bf16.mxu0 0
  %1802 = vmatpush1.bf16.msra.mxu0 0
  %1803 = vmatprep.subr.bf16.mxu0 0
  %1804 = vmatpush1.bf16.msra.mxu0 0
  %1805 = vmatprep.subr.bf16.mxu0 0
  %1806 = vmatpush1.bf16.msra.mxu0 0
  %1807 = vmatprep.subr.bf16.mxu0 0
  %1808 = vmatpush1.bf16.msra.mxu0 0
  %1809 = vmatprep.subr.bf16.mxu0 0
  %1810 = vmatpush1.bf16.msra.mxu0 0
  %1811 = vmatprep.subr.bf16.mxu0 0
  %1812 = vmatpush1.bf16.msra.mxu0 0
  %1813 = vmatprep.subr.bf16.mxu0 0
  %1814 = vmatpush1.bf16.msra.mxu0 0
  %1815 = vmatprep.subr.bf16.mxu0 0
  %1816 = vmatpush1.bf16.msra.mxu0 0
  %1817 = vmatprep.mubr.bf16.mxu0 0
  %1818 = vmatmul.mubr.bf16.gmra.mrb[0].mxu0 %v1697
  %v1819 = vpop.f32.mrb[0].mxu0
  %v1820 = vadd.f32 %v1683, %v1819
  %v1821 = vpop.f32.mrb[0].mxu0
  %v1822 = vadd.f32 %v1683, %v1821
  %v1823 = vpop.f32.mrb[0].mxu0
  %v1824 = vadd.f32 %v1688, %v1823
  %v1825 = vpop.f32.mrb[0].mxu0
  %v1826 = vadd.f32 %v1688, %v1825
  %1827 = vdwg.mxu0
  %1828 = vmatprep.subr.bf16.mxu0 %v1611
  %1829 = vmatpush1.bf16.msra.mxu0 %v1610
  %1830 = vmatprep.subr.bf16.mxu0 %v1625
  %1831 = vmatpush1.bf16.msra.mxu0 %v1624
  %1832 = vmatprep.subr.bf16.mxu0 %v1639
  %1833 = vmatpush1.bf16.msra.mxu0 %v1638
  %1834 = vmatprep.subr.bf16.mxu0 %v1653
  %1835 = vmatpush1.bf16.msra.mxu0 %v1652
  %1836 = vmatprep.subr.bf16.mxu0 %v1716
  %1837 = vmatpush1.bf16.msra.mxu0 %v1713
  %1838 = vmatprep.subr.bf16.mxu0 0
  %1839 = vmatpush1.bf16.msra.mxu0 0
  %1840 = vmatprep.subr.bf16.mxu0 0
  %1841 = vmatpush1.bf16.msra.mxu0 0
  %1842 = vmatprep.subr.bf16.mxu0 0
  %1843 = vmatpush1.bf16.msra.mxu0 0
  %1844 = vmatprep.subr.bf16.mxu0 0
  %1845 = vmatpush1.bf16.msra.mxu0 0
  %1846 = vmatprep.subr.bf16.mxu0 0
  %1847 = vmatpush1.bf16.msra.mxu0 0
  %1848 = vmatprep.subr.bf16.mxu0 0
  %1849 = vmatpush1.bf16.msra.mxu0 0
  %1850 = vmatprep.subr.bf16.mxu0 0
  %1851 = vmatpush1.bf16.msra.mxu0 0
  %1852 = vmatprep.subr.bf16.mxu0 0
  %1853 = vmatpush1.bf16.msra.mxu0 0
  %1854 = vmatprep.subr.bf16.mxu0 0
  %1855 = vmatpush1.bf16.msra.mxu0 0
  %1856 = vmatprep.subr.bf16.mxu0 0
  %1857 = vmatpush1.bf16.msra.mxu0 0
  %1858 = vmatprep.subr.bf16.mxu0 0
  %1859 = vmatpush1.bf16.msra.mxu0 0
  %1860 = vmatprep.mubr.bf16.mxu0 0
  %1861 = vmatmul.mubr.bf16.gmra.mrb[0].mxu0 %v1697
  %v1862 = vpop.f32.mrb[0].mxu0
  %v1863 = vadd.f32 %v1683, %v1862
  %v1864 = vpop.f32.mrb[0].mxu0
  %v1865 = vadd.f32 %v1683, %v1864
  %v1866 = vpop.f32.mrb[0].mxu0
  %v1867 = vadd.f32 %v1688, %v1866
  %v1868 = vpop.f32.mrb[0].mxu0
  %v1869 = vadd.f32 %v1688, %v1868
  %1870 = vdwg.mxu0
  %1871 = vmatprep.subr.bf16.mxu0 %v1613
  %1872 = vmatpush1.bf16.msra.mxu0 %v1612
  %1873 = vmatprep.subr.bf16.mxu0 %v1627
  %1874 = vmatpush1.bf16.msra.mxu0 %v1626
  %1875 = vmatprep.subr.bf16.mxu0 %v1641
  %1876 = vmatpush1.bf16.msra.mxu0 %v1640
  %1877 = vmatprep.subr.bf16.mxu0 %v1655
  %1878 = vmatpush1.bf16.msra.mxu0 %v1654
  %1879 = vmatprep.subr.bf16.mxu0 %v1722
  %1880 = vmatpush1.bf16.msra.mxu0 %v1719
  %1881 = vmatprep.subr.bf16.mxu0 0
  %1882 = vmatpush1.bf16.msra.mxu0 0
  %1883 = vmatprep.subr.bf16.mxu0 0
  %1884 = vmatpush1.bf16.msra.mxu0 0
  %1885 = vmatprep.subr.bf16.mxu0 0
  %1886 = vmatpush1.bf16.msra.mxu0 0
  %1887 = vmatprep.subr.bf16.mxu0 0
  %1888 = vmatpush1.bf16.msra.mxu0 0
  %1889 = vmatprep.subr.bf16.mxu0 0
  %1890 = vmatpush1.bf16.msra.mxu0 0
  %1891 = vmatprep.subr.bf16.mxu0 0
  %1892 = vmatpush1.bf16.msra.mxu0 0
  %1893 = vmatprep.subr.bf16.mxu0 0
  %1894 = vmatpush1.bf16.msra.mxu0 0
  %1895 = vmatprep.subr.bf16.mxu0 0
  %1896 = vmatpush1.bf16.msra.mxu0 0
  %1897 = vmatprep.subr.bf16.mxu0 0
  %1898 = vmatpush1.bf16.msra.mxu0 0
  %1899 = vmatprep.subr.bf16.mxu0 0
  %1900 = vmatpush1.bf16.msra.mxu0 0
  %1901 = vmatprep.subr.bf16.mxu0 0
  %1902 = vmatpush1.bf16.msra.mxu0 0
  %1903 = vmatprep.mubr.bf16.mxu0 0
  %1904 = vmatmul.mubr.bf16.gmra.mrb[0].mxu0 %v1697
  %v1905 = vpop.f32.mrb[0].mxu0
  %v1906 = vadd.f32 %v1683, %v1905
  %v1907 = vpop.f32.mrb[0].mxu0
  %v1908 = vadd.f32 %v1683, %v1907
  %v1909 = vpop.f32.mrb[0].mxu0
  %v1910 = vadd.f32 %v1688, %v1909
  %v1911 = vpop.f32.mrb[0].mxu0
  %v1912 = vadd.f32 %v1688, %v1911
  %1913 = vdwg.mxu0
  %1914 = vmatprep.subr.bf16.mxu0 %v1615
  %1915 = vmatpush1.bf16.msra.mxu0 %v1614
  %1916 = vmatprep.subr.bf16.mxu0 %v1629
  %1917 = vmatpush1.bf16.msra.mxu0 %v1628
  %1918 = vmatprep.subr.bf16.mxu0 %v1643
  %1919 = vmatpush1.bf16.msra.mxu0 %v1642
  %1920 = vmatprep.subr.bf16.mxu0 %v1657
  %1921 = vmatpush1.bf16.msra.mxu0 %v1656
  %1922 = vmatprep.subr.bf16.mxu0 %v1728
  %1923 = vmatpush1.bf16.msra.mxu0 %v1725
  %1924 = vmatprep.subr.bf16.mxu0 0
  %1925 = vmatpush1.bf16.msra.mxu0 0
  %1926 = vmatprep.subr.bf16.mxu0 0
  %1927 = vmatpush1.bf16.msra.mxu0 0
  %1928 = vmatprep.subr.bf16.mxu0 0
  %1929 = vmatpush1.bf16.msra.mxu0 0
  %1930 = vmatprep.subr.bf16.mxu0 0
  %1931 = vmatpush1.bf16.msra.mxu0 0
  %1932 = vmatprep.subr.bf16.mxu0 0
  %1933 = vmatpush1.bf16.msra.mxu0 0
  %1934 = vmatprep.subr.bf16.mxu0 0
  %1935 = vmatpush1.bf16.msra.mxu0 0
  %1936 = vmatprep.subr.bf16.mxu0 0
  %1937 = vmatpush1.bf16.msra.mxu0 0
  %1938 = vmatprep.subr.bf16.mxu0 0
  %1939 = vmatpush1.bf16.msra.mxu0 0
  %1940 = vmatprep.subr.bf16.mxu0 0
  %1941 = vmatpush1.bf16.msra.mxu0 0
  %1942 = vmatprep.subr.bf16.mxu0 0
  %1943 = vmatpush1.bf16.msra.mxu0 0
  %1944 = vmatprep.subr.bf16.mxu0 0
  %1945 = vmatpush1.bf16.msra.mxu0 0
  %1946 = vmatprep.mubr.bf16.mxu0 0
  %1947 = vmatmul.mubr.bf16.gmra.mrb[0].mxu0 %v1697
  %v1948 = vpop.f32.mrb[0].mxu0
  %v1949 = vadd.f32 %v1683, %v1948
  %v1950 = vpop.f32.mrb[0].mxu0
  %v1951 = vadd.f32 %v1683, %v1950
  %v1952 = vpop.f32.mrb[0].mxu0
  %v1953 = vadd.f32 %v1688, %v1952
  %v1954 = vpop.f32.mrb[0].mxu0
  %v1955 = vadd.f32 %v1688, %v1954
  %1956 = vdwg.mxu0
  %1957 = vmatprep.subr.bf16.mxu0 %v1617
  %1958 = vmatpush1.bf16.msra.mxu0 %v1616
  %1959 = vmatprep.subr.bf16.mxu0 %v1631
  %1960 = vmatpush1.bf16.msra.mxu0 %v1630
  %1961 = vmatprep.subr.bf16.mxu0 %v1645
  %1962 = vmatpush1.bf16.msra.mxu0 %v1644
  %1963 = vmatprep.subr.bf16.mxu0 %v1659
  %1964 = vmatpush1.bf16.msra.mxu0 %v1658
  %1965 = vmatprep.subr.bf16.mxu0 %v1734
  %1966 = vmatpush1.bf16.msra.mxu0 %v1731
  %1967 = vmatprep.subr.bf16.mxu0 0
  %1968 = vmatpush1.bf16.msra.mxu0 0
  %1969 = vmatprep.subr.bf16.mxu0 0
  %1970 = vmatpush1.bf16.msra.mxu0 0
  %1971 = vmatprep.subr.bf16.mxu0 0
  %1972 = vmatpush1.bf16.msra.mxu0 0
  %1973 = vmatprep.subr.bf16.mxu0 0
  %1974 = vmatpush1.bf16.msra.mxu0 0
  %1975 = vmatprep.subr.bf16.mxu0 0
  %1976 = vmatpush1.bf16.msra.mxu0 0
  %1977 = vmatprep.subr.bf16.mxu0 0
  %1978 = vmatpush1.bf16.msra.mxu0 0
  %1979 = vmatprep.subr.bf16.mxu0 0
  %1980 = vmatpush1.bf16.msra.mxu0 0
  %1981 = vmatprep.subr.bf16.mxu0 0
  %1982 = vmatpush1.bf16.msra.mxu0 0
  %1983 = vmatprep.subr.bf16.mxu0 0
  %1984 = vmatpush1.bf16.msra.mxu0 0
  %1985 = vmatprep.subr.bf16.mxu0 0
  %1986 = vmatpush1.bf16.msra.mxu0 0
  %1987 = vmatprep.subr.bf16.mxu0 0
  %1988 = vmatpush1.bf16.msra.mxu0 0
  %1989 = vmatprep.mubr.bf16.mxu0 0
  %1990 = vmatmul.mubr.bf16.gmra.mrb[0].mxu0 %v1697
  %v1991 = vpop.f32.mrb[0].mxu0
  %v1992 = vadd.f32 %v1683, %v1991
  %v1993 = vpop.f32.mrb[0].mxu0
  %v1994 = vadd.f32 %v1683, %v1993
  %v1995 = vpop.f32.mrb[0].mxu0
  %v1996 = vadd.f32 %v1688, %v1995
  %v1997 = vpop.f32.mrb[0].mxu0
  %v1998 = vadd.f32 %v1688, %v1997
  %1999 = vdwg.mxu0
  %2000 = vmatprep.subr.bf16.mxu0 %v1619
  %2001 = vmatpush1.bf16.msra.mxu0 %v1618
  %2002 = vmatprep.subr.bf16.mxu0 %v1633
  %2003 = vmatpush1.bf16.msra.mxu0 %v1632
  %2004 = vmatprep.subr.bf16.mxu0 %v1647
  %2005 = vmatpush1.bf16.msra.mxu0 %v1646
  %2006 = vmatprep.subr.bf16.mxu0 %v1661
  %2007 = vmatpush1.bf16.msra.mxu0 %v1660
  %2008 = vmatprep.subr.bf16.mxu0 %v1740
  %2009 = vmatpush1.bf16.msra.mxu0 %v1737
  %2010 = vmatprep.subr.bf16.mxu0 0
  %2011 = vmatpush1.bf16.msra.mxu0 0
  %2012 = vmatprep.subr.bf16.mxu0 0
  %2013 = vmatpush1.bf16.msra.mxu0 0
  %2014 = vmatprep.subr.bf16.mxu0 0
  %2015 = vmatpush1.bf16.msra.mxu0 0
  %2016 = vmatprep.subr.bf16.mxu0 0
  %2017 = vmatpush1.bf16.msra.mxu0 0
  %2018 = vmatprep.subr.bf16.mxu0 0
  %2019 = vmatpush1.bf16.msra.mxu0 0
  %2020 = vmatprep.subr.bf16.mxu0 0
  %2021 = vmatpush1.bf16.msra.mxu0 0
  %2022 = vmatprep.subr.bf16.mxu0 0
  %2023 = vmatpush1.bf16.msra.mxu0 0
  %2024 = vmatprep.subr.bf16.mxu0 0
  %2025 = vmatpush1.bf16.msra.mxu0 0
  %2026 = vmatprep.subr.bf16.mxu0 0
  %2027 = vmatpush1.bf16.msra.mxu0 0
  %2028 = vmatprep.subr.bf16.mxu0 0
  %2029 = vmatpush1.bf16.msra.mxu0 0
  %2030 = vmatprep.subr.bf16.mxu0 0
  %2031 = vmatpush1.bf16.msra.mxu0 0
  %2032 = vmatprep.mubr.bf16.mxu0 0
  %2033 = vmatmul.mubr.bf16.gmra.mrb[0].mxu0 %v1697
  %v2034 = vpop.f32.mrb[0].mxu0
  %v2035 = vadd.f32 %v1683, %v2034
  %v2036 = vpop.f32.mrb[0].mxu0
  %v2037 = vadd.f32 %v1683, %v2036
  %v2038 = vpop.f32.mrb[0].mxu0
  %v2039 = vadd.f32 %v1688, %v2038
  %v2040 = vpop.f32.mrb[0].mxu0
  %v2041 = vadd.f32 %v1688, %v2040
  %2042 = vdwg.mxu0
  %v2043 = vmax.f32 %v1777, 0.0
  %v2044 = vmax.f32 %v1779, 0.0
  %v2045 = vmax.f32 %v1820, 0.0
  %v2046 = vmax.f32 %v1822, 0.0
  %v2047 = vmax.f32 %v1863, 0.0
  %v2048 = vmax.f32 %v1865, 0.0
  %v2049 = vmax.f32 %v1906, 0.0
  %v2050 = vmax.f32 %v1908, 0.0
  %v2051 = vmax.f32 %v1949, 0.0
  %v2052 = vmax.f32 %v1951, 0.0
  %v2053 = vmax.f32 %v1992, 0.0
  %v2054 = vmax.f32 %v1994, 0.0
  %v2055 = vmax.f32 %v2035, 0.0
  %v2056 = vmax.f32 %v2037, 0.0
  %v2057 = vmax.f32 %v1781, 0.0
  %v2058 = vmax.f32 %v1783, 0.0
  %v2059 = vmax.f32 %v1824, 0.0
  %v2060 = vmax.f32 %v1826, 0.0
  %v2061 = vmax.f32 %v1867, 0.0
  %v2062 = vmax.f32 %v1869, 0.0
  %v2063 = vmax.f32 %v1910, 0.0
  %v2064 = vmax.f32 %v1912, 0.0
  %v2065 = vmax.f32 %v1953, 0.0
  %v2066 = vmax.f32 %v1955, 0.0
  %v2067 = vmax.f32 %v1996, 0.0
  %v2068 = vmax.f32 %v1998, 0.0
  %v2069 = vmax.f32 %v2039, 0.0
  %v2070 = vmax.f32 %v2041, 0.0
  %v2071 = vld [vmem:[%s5] sm:$0xf]
  %v2072 = vpack.c.bf16 %v2057, %v2043
  %v2073 = vpack.c.bf16 %v2058, %v2044
  %v2074 = vpack.c.bf16 %v2059, %v2045
  %v2075 = vpack.c.bf16 %v2060, %v2046
  %v2076 = vpack.c.bf16 %v2061, %v2047
  %v2077 = vpack.c.bf16 %v2062, %v2048
  %v2078 = vpack.c.bf16 %v2063, %v2049
  %v2079 = vpack.c.bf16 %v2064, %v2050
  %v2080 = vpack.c.bf16 %v2065, %v2051
  %v2081 = vpack.c.bf16 %v2066, %v2052
  %v2082 = vpack.c.bf16 %v2067, %v2053
  %v2083 = vpack.c.bf16 %v2068, %v2054
  %v2084 = vpack.c.bf16 %v2069, %v2055
  %v2085 = vpack.c.bf16 %v2070, %v2056
  %v2086 = vld [vmem:[%s6] sm:$0xff]
  %2088 = vset.pattern.permute.xlu0 0
  %2089 = vperm.xlu0 %2088, %v2086
  %v2090 = vpop.permute.xlu0 %2089
  %vm2092 = vcmask 130048
  %v2094 = vsel %vm2092, %v2071, 0
  %2096 = vmatprep.subr.bf16.mxu0 %v2073
  %2097 = vmatpush1.bf16.msra.mxu0 %v2072
  %2098 = vmatprep.subr.bf16.mxu0 0
  %2099 = vmatpush1.bf16.msra.mxu0 0
  %2100 = vmatprep.subr.bf16.mxu0 0
  %2101 = vmatpush1.bf16.msra.mxu0 0
  %2102 = vmatprep.subr.bf16.mxu0 0
  %2103 = vmatpush1.bf16.msra.mxu0 0
  %2104 = vmatprep.subr.bf16.mxu0 0
  %2105 = vmatpush1.bf16.msra.mxu0 0
  %2106 = vmatprep.subr.bf16.mxu0 0
  %2107 = vmatpush1.bf16.msra.mxu0 0
  %2108 = vmatprep.subr.bf16.mxu0 0
  %2109 = vmatpush1.bf16.msra.mxu0 0
  %2110 = vmatprep.subr.bf16.mxu0 0
  %2111 = vmatpush1.bf16.msra.mxu0 0
  %2112 = vmatprep.subr.bf16.mxu0 0
  %2113 = vmatpush1.bf16.msra.mxu0 0
  %2114 = vmatprep.subr.bf16.mxu0 0
  %2115 = vmatpush1.bf16.msra.mxu0 0
  %2116 = vmatprep.subr.bf16.mxu0 0
  %2117 = vmatpush1.bf16.msra.mxu0 0
  %2118 = vmatprep.subr.bf16.mxu0 0
  %2119 = vmatpush1.bf16.msra.mxu0 0
  %2120 = vmatprep.subr.bf16.mxu0 0
  %2121 = vmatpush1.bf16.msra.mxu0 0
  %2122 = vmatprep.subr.bf16.mxu0 0
  %2123 = vmatpush1.bf16.msra.mxu0 0
  %2124 = vmatprep.subr.bf16.mxu0 0
  %2125 = vmatpush1.bf16.msra.mxu0 0
  %2126 = vmatprep.subr.bf16.mxu0 0
  %2127 = vmatpush1.bf16.msra.mxu0 0
  %2128 = vmatprep.mubr.bf16.mxu0 0
  %2129 = vmatmul.mubr.bf16.gmra.mrb[0].mxu0 %v2094
  %v2130 = vpop.f32.mrb[0].mxu0
  %v2131 = vadd.f32 %v2090, %v2130
  %v2132 = vpop.f32.mrb[0].mxu0
  %v2133 = vadd.f32 %v2090, %v2132
  %v2134 = vpop.f32.mrb[0].mxu0
  %v2135 = vpop.f32.mrb[0].mxu0
  %2136 = vdwg.mxu0
  %2137 = vmatprep.subr.bf16.mxu0 %v2075
  %2138 = vmatpush1.bf16.msra.mxu0 %v2074
  %2139 = vmatprep.subr.bf16.mxu0 0
  %2140 = vmatpush1.bf16.msra.mxu0 0
  %2141 = vmatprep.subr.bf16.mxu0 0
  %2142 = vmatpush1.bf16.msra.mxu0 0
  %2143 = vmatprep.subr.bf16.mxu0 0
  %2144 = vmatpush1.bf16.msra.mxu0 0
  %2145 = vmatprep.subr.bf16.mxu0 0
  %2146 = vmatpush1.bf16.msra.mxu0 0
  %2147 = vmatprep.subr.bf16.mxu0 0
  %2148 = vmatpush1.bf16.msra.mxu0 0
  %2149 = vmatprep.subr.bf16.mxu0 0
  %2150 = vmatpush1.bf16.msra.mxu0 0
  %2151 = vmatprep.subr.bf16.mxu0 0
  %2152 = vmatpush1.bf16.msra.mxu0 0
  %2153 = vmatprep.subr.bf16.mxu0 0
  %2154 = vmatpush1.bf16.msra.mxu0 0
  %2155 = vmatprep.subr.bf16.mxu0 0
  %2156 = vmatpush1.bf16.msra.mxu0 0
  %2157 = vmatprep.subr.bf16.mxu0 0
  %2158 = vmatpush1.bf16.msra.mxu0 0
  %2159 = vmatprep.subr.bf16.mxu0 0
  %2160 = vmatpush1.bf16.msra.mxu0 0
  %2161 = vmatprep.subr.bf16.mxu0 0
  %2162 = vmatpush1.bf16.msra.mxu0 0
  %2163 = vmatprep.subr.bf16.mxu0 0
  %2164 = vmatpush1.bf16.msra.mxu0 0
  %2165 = vmatprep.subr.bf16.mxu0 0
  %2166 = vmatpush1.bf16.msra.mxu0 0
  %2167 = vmatprep.subr.bf16.mxu0 0
  %2168 = vmatpush1.bf16.msra.mxu0 0
  %2169 = vmatprep.mubr.bf16.mxu0 0
  %2170 = vmatmul.mubr.bf16.gmra.mrb[0].mxu0 %v2094
  %v2171 = vpop.f32.mrb[0].mxu0
  %v2172 = vadd.f32 %v2090, %v2171
  %v2173 = vpop.f32.mrb[0].mxu0
  %v2174 = vadd.f32 %v2090, %v2173
  %v2175 = vpop.f32.mrb[0].mxu0
  %v2176 = vpop.f32.mrb[0].mxu0
  %2177 = vdwg.mxu0
  %2178 = vmatprep.subr.bf16.mxu0 %v2077
  %2179 = vmatpush1.bf16.msra.mxu0 %v2076
  %2180 = vmatprep.subr.bf16.mxu0 0
  %2181 = vmatpush1.bf16.msra.mxu0 0
  %2182 = vmatprep.subr.bf16.mxu0 0
  %2183 = vmatpush1.bf16.msra.mxu0 0
  %2184 = vmatprep.subr.bf16.mxu0 0
  %2185 = vmatpush1.bf16.msra.mxu0 0
  %2186 = vmatprep.subr.bf16.mxu0 0
  %2187 = vmatpush1.bf16.msra.mxu0 0
  %2188 = vmatprep.subr.bf16.mxu0 0
  %2189 = vmatpush1.bf16.msra.mxu0 0
  %2190 = vmatprep.subr.bf16.mxu0 0
  %2191 = vmatpush1.bf16.msra.mxu0 0
  %2192 = vmatprep.subr.bf16.mxu0 0
  %2193 = vmatpush1.bf16.msra.mxu0 0
  %2194 = vmatprep.subr.bf16.mxu0 0
  %2195 = vmatpush1.bf16.msra.mxu0 0
  %2196 = vmatprep.subr.bf16.mxu0 0
  %2197 = vmatpush1.bf16.msra.mxu0 0
  %2198 = vmatprep.subr.bf16.mxu0 0
  %2199 = vmatpush1.bf16.msra.mxu0 0
  %2200 = vmatprep.subr.bf16.mxu0 0
  %2201 = vmatpush1.bf16.msra.mxu0 0
  %2202 = vmatprep.subr.bf16.mxu0 0
  %2203 = vmatpush1.bf16.msra.mxu0 0
  %2204 = vmatprep.subr.bf16.mxu0 0
  %2205 = vmatpush1.bf16.msra.mxu0 0
  %2206 = vmatprep.subr.bf16.mxu0 0
  %2207 = vmatpush1.bf16.msra.mxu0 0
  %2208 = vmatprep.subr.bf16.mxu0 0
  %2209 = vmatpush1.bf16.msra.mxu0 0
  %2210 = vmatprep.mubr.bf16.mxu0 0
  %2211 = vmatmul.mubr.bf16.gmra.mrb[0].mxu0 %v2094
  %v2212 = vpop.f32.mrb[0].mxu0
  %v2213 = vadd.f32 %v2090, %v2212
  %v2214 = vpop.f32.mrb[0].mxu0
  %v2215 = vadd.f32 %v2090, %v2214
  %v2216 = vpop.f32.mrb[0].mxu0
  %v2217 = vpop.f32.mrb[0].mxu0
  %2218 = vdwg.mxu0
  %2219 = vmatprep.subr.bf16.mxu0 %v2079
  %2220 = vmatpush1.bf16.msra.mxu0 %v2078
  %2221 = vmatprep.subr.bf16.mxu0 0
  %2222 = vmatpush1.bf16.msra.mxu0 0
  %2223 = vmatprep.subr.bf16.mxu0 0
  %2224 = vmatpush1.bf16.msra.mxu0 0
  %2225 = vmatprep.subr.bf16.mxu0 0
  %2226 = vmatpush1.bf16.msra.mxu0 0
  %2227 = vmatprep.subr.bf16.mxu0 0
  %2228 = vmatpush1.bf16.msra.mxu0 0
  %2229 = vmatprep.subr.bf16.mxu0 0
  %2230 = vmatpush1.bf16.msra.mxu0 0
  %2231 = vmatprep.subr.bf16.mxu0 0
  %2232 = vmatpush1.bf16.msra.mxu0 0
  %2233 = vmatprep.subr.bf16.mxu0 0
  %2234 = vmatpush1.bf16.msra.mxu0 0
  %2235 = vmatprep.subr.bf16.mxu0 0
  %2236 = vmatpush1.bf16.msra.mxu0 0
  %2237 = vmatprep.subr.bf16.mxu0 0
  %2238 = vmatpush1.bf16.msra.mxu0 0
  %2239 = vmatprep.subr.bf16.mxu0 0
  %2240 = vmatpush1.bf16.msra.mxu0 0
  %2241 = vmatprep.subr.bf16.mxu0 0
  %2242 = vmatpush1.bf16.msra.mxu0 0
  %2243 = vmatprep.subr.bf16.mxu0 0
  %2244 = vmatpush1.bf16.msra.mxu0 0
  %2245 = vmatprep.subr.bf16.mxu0 0
  %2246 = vmatpush1.bf16.msra.mxu0 0
  %2247 = vmatprep.subr.bf16.mxu0 0
  %2248 = vmatpush1.bf16.msra.mxu0 0
  %2249 = vmatprep.subr.bf16.mxu0 0
  %2250 = vmatpush1.bf16.msra.mxu0 0
  %2251 = vmatprep.mubr.bf16.mxu0 0
  %2252 = vmatmul.mubr.bf16.gmra.mrb[0].mxu0 %v2094
  %v2253 = vpop.f32.mrb[0].mxu0
  %v2254 = vadd.f32 %v2090, %v2253
  %v2255 = vpop.f32.mrb[0].mxu0
  %v2256 = vadd.f32 %v2090, %v2255
  %v2257 = vpop.f32.mrb[0].mxu0
  %v2258 = vpop.f32.mrb[0].mxu0
  %2259 = vdwg.mxu0
  %2260 = vmatprep.subr.bf16.mxu0 %v2081
  %2261 = vmatpush1.bf16.msra.mxu0 %v2080
  %2262 = vmatprep.subr.bf16.mxu0 0
  %2263 = vmatpush1.bf16.msra.mxu0 0
  %2264 = vmatprep.subr.bf16.mxu0 0
  %2265 = vmatpush1.bf16.msra.mxu0 0
  %2266 = vmatprep.subr.bf16.mxu0 0
  %2267 = vmatpush1.bf16.msra.mxu0 0
  %2268 = vmatprep.subr.bf16.mxu0 0
  %2269 = vmatpush1.bf16.msra.mxu0 0
  %2270 = vmatprep.subr.bf16.mxu0 0
  %2271 = vmatpush1.bf16.msra.mxu0 0
  %2272 = vmatprep.subr.bf16.mxu0 0
  %2273 = vmatpush1.bf16.msra.mxu0 0
  %2274 = vmatprep.subr.bf16.mxu0 0
  %2275 = vmatpush1.bf16.msra.mxu0 0
  %2276 = vmatprep.subr.bf16.mxu0 0
  %2277 = vmatpush1.bf16.msra.mxu0 0
  %2278 = vmatprep.subr.bf16.mxu0 0
  %2279 = vmatpush1.bf16.msra.mxu0 0
  %2280 = vmatprep.subr.bf16.mxu0 0
  %2281 = vmatpush1.bf16.msra.mxu0 0
  %2282 = vmatprep.subr.bf16.mxu0 0
  %2283 = vmatpush1.bf16.msra.mxu0 0
  %2284 = vmatprep.subr.bf16.mxu0 0
  %2285 = vmatpush1.bf16.msra.mxu0 0
  %2286 = vmatprep.subr.bf16.mxu0 0
  %2287 = vmatpush1.bf16.msra.mxu0 0
  %2288 = vmatprep.subr.bf16.mxu0 0
  %2289 = vmatpush1.bf16.msra.mxu0 0
  %2290 = vmatprep.subr.bf16.mxu0 0
  %2291 = vmatpush1.bf16.msra.mxu0 0
  %2292 = vmatprep.mubr.bf16.mxu0 0
  %2293 = vmatmul.mubr.bf16.gmra.mrb[0].mxu0 %v2094
  %v2294 = vpop.f32.mrb[0].mxu0
  %v2295 = vadd.f32 %v2090, %v2294
  %v2296 = vpop.f32.mrb[0].mxu0
  %v2297 = vadd.f32 %v2090, %v2296
  %v2298 = vpop.f32.mrb[0].mxu0
  %v2299 = vpop.f32.mrb[0].mxu0
  %2300 = vdwg.mxu0
  %2301 = vmatprep.subr.bf16.mxu0 %v2083
  %2302 = vmatpush1.bf16.msra.mxu0 %v2082
  %2303 = vmatprep.subr.bf16.mxu0 0
  %2304 = vmatpush1.bf16.msra.mxu0 0
  %2305 = vmatprep.subr.bf16.mxu0 0
  %2306 = vmatpush1.bf16.msra.mxu0 0
  %2307 = vmatprep.subr.bf16.mxu0 0
  %2308 = vmatpush1.bf16.msra.mxu0 0
  %2309 = vmatprep.subr.bf16.mxu0 0
  %2310 = vmatpush1.bf16.msra.mxu0 0
  %2311 = vmatprep.subr.bf16.mxu0 0
  %2312 = vmatpush1.bf16.msra.mxu0 0
  %2313 = vmatprep.subr.bf16.mxu0 0
  %2314 = vmatpush1.bf16.msra.mxu0 0
  %2315 = vmatprep.subr.bf16.mxu0 0
  %2316 = vmatpush1.bf16.msra.mxu0 0
  %2317 = vmatprep.subr.bf16.mxu0 0
  %2318 = vmatpush1.bf16.msra.mxu0 0
  %2319 = vmatprep.subr.bf16.mxu0 0
  %2320 = vmatpush1.bf16.msra.mxu0 0
  %2321 = vmatprep.subr.bf16.mxu0 0
  %2322 = vmatpush1.bf16.msra.mxu0 0
  %2323 = vmatprep.subr.bf16.mxu0 0
  %2324 = vmatpush1.bf16.msra.mxu0 0
  %2325 = vmatprep.subr.bf16.mxu0 0
  %2326 = vmatpush1.bf16.msra.mxu0 0
  %2327 = vmatprep.subr.bf16.mxu0 0
  %2328 = vmatpush1.bf16.msra.mxu0 0
  %2329 = vmatprep.subr.bf16.mxu0 0
  %2330 = vmatpush1.bf16.msra.mxu0 0
  %2331 = vmatprep.subr.bf16.mxu0 0
  %2332 = vmatpush1.bf16.msra.mxu0 0
  %2333 = vmatprep.mubr.bf16.mxu0 0
  %2334 = vmatmul.mubr.bf16.gmra.mrb[0].mxu0 %v2094
  %v2335 = vpop.f32.mrb[0].mxu0
  %v2336 = vadd.f32 %v2090, %v2335
  %v2337 = vpop.f32.mrb[0].mxu0
  %v2338 = vadd.f32 %v2090, %v2337
  %v2339 = vpop.f32.mrb[0].mxu0
  %v2340 = vpop.f32.mrb[0].mxu0
  %2341 = vdwg.mxu0
  %2342 = vmatprep.subr.bf16.mxu0 %v2085
  %2343 = vmatpush1.bf16.msra.mxu0 %v2084
  %2344 = vmatprep.subr.bf16.mxu0 0
  %2345 = vmatpush1.bf16.msra.mxu0 0
  %2346 = vmatprep.subr.bf16.mxu0 0
  %2347 = vmatpush1.bf16.msra.mxu0 0
  %2348 = vmatprep.subr.bf16.mxu0 0
  %2349 = vmatpush1.bf16.msra.mxu0 0
  %2350 = vmatprep.subr.bf16.mxu0 0
  %2351 = vmatpush1.bf16.msra.mxu0 0
  %2352 = vmatprep.subr.bf16.mxu0 0
  %2353 = vmatpush1.bf16.msra.mxu0 0
  %2354 = vmatprep.subr.bf16.mxu0 0
  %2355 = vmatpush1.bf16.msra.mxu0 0
  %2356 = vmatprep.subr.bf16.mxu0 0
  %2357 = vmatpush1.bf16.msra.mxu0 0
  %2358 = vmatprep.subr.bf16.mxu0 0
  %2359 = vmatpush1.bf16.msra.mxu0 0
  %2360 = vmatprep.subr.bf16.mxu0 0
  %2361 = vmatpush1.bf16.msra.mxu0 0
  %2362 = vmatprep.subr.bf16.mxu0 0
  %2363 = vmatpush1.bf16.msra.mxu0 0
  %2364 = vmatprep.subr.bf16.mxu0 0
  %2365 = vmatpush1.bf16.msra.mxu0 0
  %2366 = vmatprep.subr.bf16.mxu0 0
  %2367 = vmatpush1.bf16.msra.mxu0 0
  %2368 = vmatprep.subr.bf16.mxu0 0
  %2369 = vmatpush1.bf16.msra.mxu0 0
  %2370 = vmatprep.subr.bf16.mxu0 0
  %2371 = vmatpush1.bf16.msra.mxu0 0
  %2372 = vmatprep.subr.bf16.mxu0 0
  %2373 = vmatpush1.bf16.msra.mxu0 0
  %2374 = vmatprep.mubr.bf16.mxu0 0
  %2375 = vmatmul.mubr.bf16.gmra.mrb[0].mxu0 %v2094
  %v2376 = vpop.f32.mrb[0].mxu0
  %v2377 = vadd.f32 %v2090, %v2376
  %v2378 = vpop.f32.mrb[0].mxu0
  %v2379 = vadd.f32 %v2090, %v2378
  %v2380 = vpop.f32.mrb[0].mxu0
  %v2381 = vpop.f32.mrb[0].mxu0
  %2382 = vdwg.mxu0
  %v2383 = vmax.f32 %v2131, 0.0
  %v2384 = vmax.f32 %v2133, 0.0
  %v2385 = vmax.f32 %v2172, 0.0
  %v2386 = vmax.f32 %v2174, 0.0
  %v2387 = vmax.f32 %v2213, 0.0
  %v2388 = vmax.f32 %v2215, 0.0
  %v2389 = vmax.f32 %v2254, 0.0
  %v2390 = vmax.f32 %v2256, 0.0
  %v2391 = vmax.f32 %v2295, 0.0
  %v2392 = vmax.f32 %v2297, 0.0
  %v2393 = vmax.f32 %v2336, 0.0
  %v2394 = vmax.f32 %v2338, 0.0
  %v2395 = vmax.f32 %v2377, 0.0
  %v2396 = vmax.f32 %v2379, 0.0
  %2411 = vrot.lane.b32.xlu0 %v2383, 127
  %v2412 = vpop.permute.xlu0 %2411
  %2413 = vrot.lane.b32.xlu0 %v2384, 127
  %v2414 = vpop.permute.xlu0 %2413
  %2415 = vrot.lane.b32.xlu0 %v2385, 127
  %v2416 = vpop.permute.xlu0 %2415
  %2417 = vrot.lane.b32.xlu0 %v2386, 127
  %v2418 = vpop.permute.xlu0 %2417
  %2419 = vrot.lane.b32.xlu0 %v2387, 127
  %v2420 = vpop.permute.xlu0 %2419
  %2421 = vrot.lane.b32.xlu0 %v2388, 127
  %v2422 = vpop.permute.xlu0 %2421
  %2423 = vrot.lane.b32.xlu0 %v2389, 127
  %v2424 = vpop.permute.xlu0 %2423
  %2425 = vrot.lane.b32.xlu0 %v2390, 127
  %v2426 = vpop.permute.xlu0 %2425
  %2427 = vrot.lane.b32.xlu0 %v2391, 127
  %v2428 = vpop.permute.xlu0 %2427
  %2429 = vrot.lane.b32.xlu0 %v2392, 127
  %v2430 = vpop.permute.xlu0 %2429
  %2431 = vrot.lane.b32.xlu0 %v2393, 127
  %v2432 = vpop.permute.xlu0 %2431
  %2433 = vrot.lane.b32.xlu0 %v2394, 127
  %v2434 = vpop.permute.xlu0 %2433
  %2435 = vrot.lane.b32.xlu0 %v2395, 127
  %v2436 = vpop.permute.xlu0 %2435
  %2437 = vrot.lane.b32.xlu0 %v2396, 127
  %v2438 = vpop.permute.xlu0 %2437
  %v2439 = vsel %vm280, %v2412, %v2414
  %v2440 = vsel %vm280, %v2414, %v2416
  %v2441 = vsel %vm280, %v2416, %v2418
  %v2442 = vsel %vm280, %v2418, %v2420
  %v2443 = vsel %vm280, %v2420, %v2422
  %v2444 = vsel %vm280, %v2422, %v2424
  %v2445 = vsel %vm280, %v2424, %v2426
  %v2446 = vsel %vm280, %v2426, %v2428
  %v2447 = vsel %vm280, %v2428, %v2430
  %v2448 = vsel %vm280, %v2430, %v2432
  %v2449 = vsel %vm280, %v2432, %v2434
  %v2450 = vsel %vm280, %v2434, %v2436
  %v2451 = vsel %vm280, %v2436, %v2438
  %v2452 = vsel %vm280, %v2438, %v1171
  %v2467 = vmax.f32 %v2383, %v2439
  %v2468 = vmax.f32 %v2384, %v2440
  %v2469 = vmax.f32 %v2385, %v2441
  %v2470 = vmax.f32 %v2386, %v2442
  %v2471 = vmax.f32 %v2387, %v2443
  %v2472 = vmax.f32 %v2388, %v2444
  %v2473 = vmax.f32 %v2389, %v2445
  %v2474 = vmax.f32 %v2390, %v2446
  %v2475 = vmax.f32 %v2391, %v2447
  %v2476 = vmax.f32 %v2392, %v2448
  %v2477 = vmax.f32 %v2393, %v2449
  %v2478 = vmax.f32 %v2394, %v2450
  %v2479 = vmax.f32 %v2395, %v2451
  %v2480 = vmax.f32 %v2396, %v2452
  %v2482 = vmax.f32 %v1171, 0.0
  %2498 = vrot.lane.b32.xlu0 %v2467, 96
  %v2499 = vpop.permute.xlu0 %2498
  %2500 = vrot.lane.b32.xlu0 %v2468, 96
  %v2501 = vpop.permute.xlu0 %2500
  %2502 = vrot.lane.b32.xlu0 %v2469, 96
  %v2503 = vpop.permute.xlu0 %2502
  %2504 = vrot.lane.b32.xlu0 %v2470, 96
  %v2505 = vpop.permute.xlu0 %2504
  %2506 = vrot.lane.b32.xlu0 %v2471, 96
  %v2507 = vpop.permute.xlu0 %2506
  %2508 = vrot.lane.b32.xlu0 %v2472, 96
  %v2509 = vpop.permute.xlu0 %2508
  %2510 = vrot.lane.b32.xlu0 %v2473, 96
  %v2511 = vpop.permute.xlu0 %2510
  %2512 = vrot.lane.b32.xlu0 %v2474, 96
  %v2513 = vpop.permute.xlu0 %2512
  %2514 = vrot.lane.b32.xlu0 %v2475, 96
  %v2515 = vpop.permute.xlu0 %2514
  %2516 = vrot.lane.b32.xlu0 %v2476, 96
  %v2517 = vpop.permute.xlu0 %2516
  %2518 = vrot.lane.b32.xlu0 %v2477, 96
  %v2519 = vpop.permute.xlu0 %2518
  %2520 = vrot.lane.b32.xlu0 %v2478, 96
  %v2521 = vpop.permute.xlu0 %2520
  %2522 = vrot.lane.b32.xlu0 %v2479, 96
  %v2523 = vpop.permute.xlu0 %2522
  %2524 = vrot.lane.b32.xlu0 %v2480, 96
  %v2525 = vpop.permute.xlu0 %2524
  %2526 = vrot.lane.b32.xlu0 %v2482, 96
  %v2527 = vpop.permute.xlu0 %2526
  %v2528 = vsel %vm500, %v2499, %v2501
  %v2529 = vsel %vm500, %v2501, %v2503
  %v2530 = vsel %vm500, %v2503, %v2505
  %v2531 = vsel %vm500, %v2505, %v2507
  %v2532 = vsel %vm500, %v2507, %v2509
  %v2533 = vsel %vm500, %v2509, %v2511
  %v2534 = vsel %vm500, %v2511, %v2513
  %v2535 = vsel %vm500, %v2513, %v2515
  %v2536 = vsel %vm500, %v2515, %v2517
  %v2537 = vsel %vm500, %v2517, %v2519
  %v2538 = vsel %vm500, %v2519, %v2521
  %v2539 = vsel %vm500, %v2521, %v2523
  %v2540 = vsel %vm500, %v2523, %v2525
  %v2541 = vsel %vm500, %v2525, %v2527
  %v2556 = vmax.f32 %v2467, %v2528
  %v2557 = vmax.f32 %v2468, %v2529
  %v2558 = vmax.f32 %v2469, %v2530
  %v2559 = vmax.f32 %v2470, %v2531
  %v2560 = vmax.f32 %v2471, %v2532
  %v2561 = vmax.f32 %v2472, %v2533
  %v2562 = vmax.f32 %v2473, %v2534
  %v2563 = vmax.f32 %v2474, %v2535
  %v2564 = vmax.f32 %v2475, %v2536
  %v2565 = vmax.f32 %v2476, %v2537
  %v2566 = vmax.f32 %v2477, %v2538
  %v2567 = vmax.f32 %v2478, %v2539
  %v2568 = vmax.f32 %v2479, %v2540
  %v2569 = vmax.f32 %v2480, %v2541
  %v2570 = vld [vmem:[%s7] sm:$0xff]
  %v2571 = vld [vmem:[%s7 + $0x8] sm:$0xff]
  %v2572 = vld [vmem:[%s7 + $0x10] sm:$0xff]
  %v2573 = vld [vmem:[%s7 + $0x18] sm:$0xff]
  %v2574 = vld [vmem:[%s7 + $0x20] sm:$0xff]
  %v2575 = vld [vmem:[%s7 + $0x28] sm:$0xff]
  %v2576 = vld [vmem:[%s7 + $0x30] sm:$0xff]
  %v2577 = vld [vmem:[%s7 + $0x38] sm:$0xff]
  %v2578 = vld [vmem:[%s7 + $0x40] sm:$0xff]
  %v2579 = vld [vmem:[%s7 + $0x48] sm:$0xff]
  %v2580 = vld [vmem:[%s7 + $0x50] sm:$0xff]
  %v2581 = vld [vmem:[%s7 + $0x58] sm:$0xff]
  %v2582 = vld [vmem:[%s7 + $0x60] sm:$0xff]
  %v2583 = vld [vmem:[%s7 + $0x68] sm:$0xff]
  %v2584 = vld [vmem:[%s7 + $0x70] sm:$0xff]
  %v2585 = vld [vmem:[%s7 + $0x78] sm:$0xff]
  %v2586 = vld [vmem:[%s7 + $0x80] sm:$0xff]
  %v2587 = vld [vmem:[%s7 + $0x88] sm:$0xff]
  %v2588 = vld [vmem:[%s7 + $0x90] sm:$0xff]
  %v2589 = vld [vmem:[%s7 + $0x98] sm:$0xff]
  %v2590 = vld [vmem:[%s7 + $0xa0] sm:$0xff]
  %v2591 = vld [vmem:[%s7 + $0xa8] sm:$0xff]
  %v2592 = vld [vmem:[%s7 + $0xb0] sm:$0xff]
  %v2593 = vld [vmem:[%s7 + $0xb8] sm:$0xff]
  %v2594 = vld [vmem:[%s7 + $0xc0] sm:$0xff]
  %v2595 = vld [vmem:[%s7 + $0xc8] sm:$0xff]
  %v2596 = vld [vmem:[%s7 + $0xd0] sm:$0xff]
  %v2597 = vld [vmem:[%s7 + $0xd8] sm:$0xff]
  %v2598 = vld [vmem:[%s7 + $0xe0] sm:$0xff]
  %v2599 = vld [vmem:[%s7 + $0xe8] sm:$0xff]
  %v2600 = vld [vmem:[%s7 + $0xf0] sm:$0xff]
  %v2601 = vld [vmem:[%s7 + $0xf8] sm:$0xff]
  %v2602 = vld [vmem:[%s7 + $0x100] sm:$0xff]
  %v2603 = vld [vmem:[%s7 + $0x108] sm:$0xff]
  %v2604 = vld [vmem:[%s7 + $0x110] sm:$0xff]
  %v2605 = vld [vmem:[%s7 + $0x118] sm:$0xff]
  %v2606 = vld [vmem:[%s7 + $0x120] sm:$0xff]
  %v2607 = vld [vmem:[%s7 + $0x128] sm:$0xff]
  %v2608 = vld [vmem:[%s7 + $0x130] sm:$0xff]
  %v2609 = vld [vmem:[%s7 + $0x138] sm:$0xff]
  %v2610 = vld [vmem:[%s7 + $0x140] sm:$0xff]
  %v2611 = vld [vmem:[%s7 + $0x148] sm:$0xff]
  %v2612 = vld [vmem:[%s7 + $0x150] sm:$0xff]
  %v2613 = vld [vmem:[%s7 + $0x158] sm:$0xff]
  %v2614 = vld [vmem:[%s7 + $0x160] sm:$0xff]
  %v2615 = vld [vmem:[%s7 + $0x168] sm:$0xff]
  %v2616 = vld [vmem:[%s7 + $0x170] sm:$0xff]
  %v2617 = vld [vmem:[%s7 + $0x178] sm:$0xff]
  %v2618 = vld [vmem:[%s7 + $0x180] sm:$0xff]
  %v2619 = vld [vmem:[%s7 + $0x188] sm:$0xff]
  %v2620 = vld [vmem:[%s7 + $0x190] sm:$0xff]
  %v2621 = vld [vmem:[%s7 + $0x198] sm:$0xff]
  %v2622 = vld [vmem:[%s7 + $0x1a0] sm:$0xff]
  %v2623 = vld [vmem:[%s7 + $0x1a8] sm:$0xff]
  %v2624 = vld [vmem:[%s7 + $0x1b0] sm:$0xff]
  %v2625 = vld [vmem:[%s7 + $0x1b8] sm:$0xff]
  %v2626 = vld [vmem:[%s7 + $0x1c0] sm:$0xff]
  %v2627 = vld [vmem:[%s7 + $0x1c8] sm:$0xff]
  %v2628 = vld [vmem:[%s7 + $0x1d0] sm:$0xff]
  %v2629 = vld [vmem:[%s7 + $0x1d8] sm:$0xff]
  %v2630 = vld [vmem:[%s7 + $0x1e0] sm:$0xff]
  %v2631 = vld [vmem:[%s7 + $0x1e8] sm:$0xff]
  %v2632 = vld [vmem:[%s7 + $0x1f0] sm:$0xff]
  %v2633 = vld [vmem:[%s7 + $0x1f8] sm:$0xff]
  %v2634 = vld [vmem:[%s7 + $0x200] sm:$0xff]
  %v2635 = vld [vmem:[%s7 + $0x208] sm:$0xff]
  %v2636 = vld [vmem:[%s7 + $0x210] sm:$0xff]
  %v2637 = vld [vmem:[%s7 + $0x218] sm:$0xff]
  %v2638 = vld [vmem:[%s7 + $0x220] sm:$0xff]
  %v2639 = vld [vmem:[%s7 + $0x228] sm:$0xff]
  %v2640 = vld [vmem:[%s7 + $0x230] sm:$0xff]
  %v2641 = vld [vmem:[%s7 + $0x238] sm:$0xff]
  %v2642 = vld [vmem:[%s7 + $0x240] sm:$0xff]
  %v2643 = vld [vmem:[%s7 + $0x248] sm:$0xff]
  %v2644 = vld [vmem:[%s7 + $0x250] sm:$0xff]
  %v2645 = vld [vmem:[%s7 + $0x258] sm:$0xff]
  %v2646 = vld [vmem:[%s7 + $0x260] sm:$0xff]
  %v2647 = vld [vmem:[%s7 + $0x268] sm:$0xff]
  %v2648 = vld [vmem:[%s7 + $0x270] sm:$0xff]
  %v2649 = vld [vmem:[%s7 + $0x278] sm:$0xff]
  %v2650 = vld [vmem:[%s7 + $0x280] sm:$0xff]
  %v2651 = vld [vmem:[%s7 + $0x288] sm:$0xff]
  %v2652 = vld [vmem:[%s7 + $0x290] sm:$0xff]
  %v2653 = vld [vmem:[%s7 + $0x298] sm:$0xff]
  %v2654 = vld [vmem:[%s7 + $0x2a0] sm:$0xff]
  %v2655 = vld [vmem:[%s7 + $0x2a8] sm:$0xff]
  %v2656 = vld [vmem:[%s7 + $0x2b0] sm:$0xff]
  %v2657 = vld [vmem:[%s7 + $0x2b8] sm:$0xff]
  %v2658 = vld [vmem:[%s7 + $0x2c0] sm:$0xff]
  %v2659 = vld [vmem:[%s7 + $0x2c8] sm:$0xff]
  %v2660 = vld [vmem:[%s7 + $0x2d0] sm:$0xff]
  %v2661 = vld [vmem:[%s7 + $0x2d8] sm:$0xff]
  %v2662 = vld [vmem:[%s7 + $0x2e0] sm:$0xff]
  %v2663 = vld [vmem:[%s7 + $0x2e8] sm:$0xff]
  %v2664 = vld [vmem:[%s7 + $0x2f0] sm:$0xff]
  %v2665 = vld [vmem:[%s7 + $0x2f8] sm:$0xff]
  %v2666 = vld [vmem:[%s7 + $0x300] sm:$0xff]
  %v2667 = vld [vmem:[%s7 + $0x308] sm:$0xff]
  %v2668 = vld [vmem:[%s7 + $0x310] sm:$0xff]
  %v2669 = vld [vmem:[%s7 + $0x318] sm:$0xff]
  %v2670 = vld [vmem:[%s7 + $0x320] sm:$0xff]
  %v2671 = vld [vmem:[%s7 + $0x328] sm:$0xff]
  %v2672 = vld [vmem:[%s7 + $0x330] sm:$0xff]
  %v2673 = vld [vmem:[%s7 + $0x338] sm:$0xff]
  %v2674 = vld [vmem:[%s7 + $0x340] sm:$0xff]
  %v2675 = vld [vmem:[%s7 + $0x348] sm:$0xff]
  %v2676 = vld [vmem:[%s7 + $0x350] sm:$0xff]
  %v2677 = vld [vmem:[%s7 + $0x358] sm:$0xff]
  %v2678 = vld [vmem:[%s7 + $0x360] sm:$0xff]
  %v2679 = vld [vmem:[%s7 + $0x368] sm:$0xff]
  %v2680 = vld [vmem:[%s7 + $0x370] sm:$0xff]
  %v2681 = vld [vmem:[%s7 + $0x378] sm:$0xff]
  %v2682 = vpack.c.bf16 %v2556, %v2556
  %v2683 = vpack.c.bf16 %v2557, %v2557
  %v2684 = vpack.c.bf16 %v2558, %v2558
  %v2685 = vpack.c.bf16 %v2559, %v2559
  %v2686 = vpack.c.bf16 %v2560, %v2560
  %v2687 = vpack.c.bf16 %v2561, %v2561
  %v2688 = vpack.c.bf16 %v2562, %v2562
  %v2801 = vunpack.c.l.b16 %v2570
  %v2802 = vunpack.c.h.b16 %v2570
  %v2803 = vunpack.c.l.b16 %v2571
  %v2804 = vunpack.c.h.b16 %v2571
  %v2805 = vunpack.c.l.b16 %v2572
  %v2806 = vunpack.c.h.b16 %v2572
  %v2807 = vunpack.c.l.b16 %v2573
  %v2808 = vunpack.c.h.b16 %v2573
  %v2809 = vunpack.c.l.b16 %v2574
  %v2810 = vunpack.c.h.b16 %v2574
  %v2811 = vunpack.c.l.b16 %v2575
  %v2812 = vunpack.c.h.b16 %v2575
  %v2813 = vunpack.c.l.b16 %v2576
  %v2814 = vunpack.c.h.b16 %v2576
  %v2815 = vunpack.c.l.b16 %v2577
  %v2816 = vunpack.c.h.b16 %v2577
  %v2817 = vunpack.c.l.b16 %v2578
  %v2818 = vunpack.c.h.b16 %v2578
  %v2819 = vunpack.c.l.b16 %v2579
  %v2820 = vunpack.c.h.b16 %v2579
  %v2821 = vunpack.c.l.b16 %v2580
  %v2822 = vunpack.c.h.b16 %v2580
  %v2823 = vunpack.c.l.b16 %v2581
  %v2824 = vunpack.c.h.b16 %v2581
  %v2825 = vunpack.c.l.b16 %v2582
  %v2826 = vunpack.c.h.b16 %v2582
  %v2827 = vunpack.c.l.b16 %v2583
  %v2828 = vunpack.c.h.b16 %v2583
  %v2829 = vunpack.c.l.b16 %v2584
  %v2830 = vunpack.c.h.b16 %v2584
  %v2831 = vunpack.c.l.b16 %v2585
  %v2832 = vunpack.c.h.b16 %v2585
  %v2833 = vunpack.c.l.b16 %v2586
  %v2834 = vunpack.c.h.b16 %v2586
  %v2835 = vunpack.c.l.b16 %v2587
  %v2836 = vunpack.c.h.b16 %v2587
  %v2837 = vunpack.c.l.b16 %v2588
  %v2838 = vunpack.c.h.b16 %v2588
  %v2839 = vunpack.c.l.b16 %v2589
  %v2840 = vunpack.c.h.b16 %v2589
  %v2841 = vunpack.c.l.b16 %v2590
  %v2842 = vunpack.c.h.b16 %v2590
  %v2843 = vunpack.c.l.b16 %v2591
  %v2844 = vunpack.c.h.b16 %v2591
  %v2845 = vunpack.c.l.b16 %v2592
  %v2846 = vunpack.c.h.b16 %v2592
  %v2847 = vunpack.c.l.b16 %v2593
  %v2848 = vunpack.c.h.b16 %v2593
  %v2849 = vunpack.c.l.b16 %v2594
  %v2850 = vunpack.c.h.b16 %v2594
  %v2851 = vunpack.c.l.b16 %v2595
  %v2852 = vunpack.c.h.b16 %v2595
  %v2853 = vunpack.c.l.b16 %v2596
  %v2854 = vunpack.c.h.b16 %v2596
  %v2855 = vunpack.c.l.b16 %v2597
  %v2856 = vunpack.c.h.b16 %v2597
  %v2857 = vunpack.c.l.b16 %v2598
  %v2858 = vunpack.c.h.b16 %v2598
  %v2859 = vunpack.c.l.b16 %v2599
  %v2860 = vunpack.c.h.b16 %v2599
  %v2861 = vunpack.c.l.b16 %v2600
  %v2862 = vunpack.c.h.b16 %v2600
  %v2863 = vunpack.c.l.b16 %v2601
  %v2864 = vunpack.c.h.b16 %v2601
  %v2865 = vunpack.c.l.b16 %v2602
  %v2866 = vunpack.c.h.b16 %v2602
  %v2867 = vunpack.c.l.b16 %v2603
  %v2868 = vunpack.c.h.b16 %v2603
  %v2869 = vunpack.c.l.b16 %v2604
  %v2870 = vunpack.c.h.b16 %v2604
  %v2871 = vunpack.c.l.b16 %v2605
  %v2872 = vunpack.c.h.b16 %v2605
  %v2873 = vunpack.c.l.b16 %v2606
  %v2874 = vunpack.c.h.b16 %v2606
  %v2875 = vunpack.c.l.b16 %v2607
  %v2876 = vunpack.c.h.b16 %v2607
  %v2877 = vunpack.c.l.b16 %v2608
  %v2878 = vunpack.c.h.b16 %v2608
  %v2879 = vunpack.c.l.b16 %v2609
  %v2880 = vunpack.c.h.b16 %v2609
  %v2881 = vunpack.c.l.b16 %v2610
  %v2882 = vunpack.c.h.b16 %v2610
  %v2883 = vunpack.c.l.b16 %v2611
  %v2884 = vunpack.c.h.b16 %v2611
  %v2885 = vunpack.c.l.b16 %v2612
  %v2886 = vunpack.c.h.b16 %v2612
  %v2887 = vunpack.c.l.b16 %v2613
  %v2888 = vunpack.c.h.b16 %v2613
  %v2889 = vunpack.c.l.b16 %v2614
  %v2890 = vunpack.c.h.b16 %v2614
  %v2891 = vunpack.c.l.b16 %v2615
  %v2892 = vunpack.c.h.b16 %v2615
  %v2893 = vunpack.c.l.b16 %v2616
  %v2894 = vunpack.c.h.b16 %v2616
  %v2895 = vunpack.c.l.b16 %v2617
  %v2896 = vunpack.c.h.b16 %v2617
  %v2897 = vunpack.c.l.b16 %v2618
  %v2898 = vunpack.c.h.b16 %v2618
  %v2899 = vunpack.c.l.b16 %v2619
  %v2900 = vunpack.c.h.b16 %v2619
  %v2901 = vunpack.c.l.b16 %v2620
  %v2902 = vunpack.c.h.b16 %v2620
  %v2903 = vunpack.c.l.b16 %v2621
  %v2904 = vunpack.c.h.b16 %v2621
  %v2905 = vunpack.c.l.b16 %v2622
  %v2906 = vunpack.c.h.b16 %v2622
  %v2907 = vunpack.c.l.b16 %v2623
  %v2908 = vunpack.c.h.b16 %v2623
  %v2909 = vunpack.c.l.b16 %v2624
  %v2910 = vunpack.c.h.b16 %v2624
  %v2911 = vunpack.c.l.b16 %v2625
  %v2912 = vunpack.c.h.b16 %v2625
  %v2913 = vunpack.c.l.b16 %v2626
  %v2914 = vunpack.c.h.b16 %v2626
  %v2915 = vunpack.c.l.b16 %v2627
  %v2916 = vunpack.c.h.b16 %v2627
  %v2917 = vunpack.c.l.b16 %v2628
  %v2918 = vunpack.c.h.b16 %v2628
  %v2919 = vunpack.c.l.b16 %v2629
  %v2920 = vunpack.c.h.b16 %v2629
  %v2921 = vunpack.c.l.b16 %v2630
  %v2922 = vunpack.c.h.b16 %v2630
  %v2923 = vunpack.c.l.b16 %v2631
  %v2924 = vunpack.c.h.b16 %v2631
  %v2925 = vunpack.c.l.b16 %v2632
  %v2926 = vunpack.c.h.b16 %v2632
  %v2927 = vunpack.c.l.b16 %v2633
  %v2928 = vunpack.c.h.b16 %v2633
  %v2929 = vunpack.c.l.b16 %v2634
  %v2930 = vunpack.c.h.b16 %v2634
  %v2931 = vunpack.c.l.b16 %v2635
  %v2932 = vunpack.c.h.b16 %v2635
  %v2933 = vunpack.c.l.b16 %v2636
  %v2934 = vunpack.c.h.b16 %v2636
  %v2935 = vunpack.c.l.b16 %v2637
  %v2936 = vunpack.c.h.b16 %v2637
  %v2937 = vunpack.c.l.b16 %v2638
  %v2938 = vunpack.c.h.b16 %v2638
  %v2939 = vunpack.c.l.b16 %v2639
  %v2940 = vunpack.c.h.b16 %v2639
  %v2941 = vunpack.c.l.b16 %v2640
  %v2942 = vunpack.c.h.b16 %v2640
  %v2943 = vunpack.c.l.b16 %v2641
  %v2944 = vunpack.c.h.b16 %v2641
  %v2945 = vunpack.c.l.b16 %v2642
  %v2946 = vunpack.c.h.b16 %v2642
  %v2947 = vunpack.c.l.b16 %v2643
  %v2948 = vunpack.c.h.b16 %v2643
  %v2949 = vunpack.c.l.b16 %v2644
  %v2950 = vunpack.c.h.b16 %v2644
  %v2951 = vunpack.c.l.b16 %v2645
  %v2952 = vunpack.c.h.b16 %v2645
  %v2953 = vunpack.c.l.b16 %v2646
  %v2954 = vunpack.c.h.b16 %v2646
  %v2955 = vunpack.c.l.b16 %v2647
  %v2956 = vunpack.c.h.b16 %v2647
  %v2957 = vunpack.c.l.b16 %v2648
  %v2958 = vunpack.c.h.b16 %v2648
  %v2959 = vunpack.c.l.b16 %v2649
  %v2960 = vunpack.c.h.b16 %v2649
  %v2961 = vunpack.c.l.b16 %v2650
  %v2962 = vunpack.c.h.b16 %v2650
  %v2963 = vunpack.c.l.b16 %v2651
  %v2964 = vunpack.c.h.b16 %v2651
  %v2965 = vunpack.c.l.b16 %v2652
  %v2966 = vunpack.c.h.b16 %v2652
  %v2967 = vunpack.c.l.b16 %v2653
  %v2968 = vunpack.c.h.b16 %v2653
  %v2969 = vunpack.c.l.b16 %v2654
  %v2970 = vunpack.c.h.b16 %v2654
  %v2971 = vunpack.c.l.b16 %v2655
  %v2972 = vunpack.c.h.b16 %v2655
  %v2973 = vunpack.c.l.b16 %v2656
  %v2974 = vunpack.c.h.b16 %v2656
  %v2975 = vunpack.c.l.b16 %v2657
  %v2976 = vunpack.c.h.b16 %v2657
  %v2977 = vunpack.c.l.b16 %v2658
  %v2978 = vunpack.c.h.b16 %v2658
  %v2979 = vunpack.c.l.b16 %v2659
  %v2980 = vunpack.c.h.b16 %v2659
  %v2981 = vunpack.c.l.b16 %v2660
  %v2982 = vunpack.c.h.b16 %v2660
  %v2983 = vunpack.c.l.b16 %v2661
  %v2984 = vunpack.c.h.b16 %v2661
  %v2985 = vunpack.c.l.b16 %v2662
  %v2986 = vunpack.c.h.b16 %v2662
  %v2987 = vunpack.c.l.b16 %v2663
  %v2988 = vunpack.c.h.b16 %v2663
  %v2989 = vunpack.c.l.b16 %v2664
  %v2990 = vunpack.c.h.b16 %v2664
  %v2991 = vunpack.c.l.b16 %v2665
  %v2992 = vunpack.c.h.b16 %v2665
  %v2993 = vunpack.c.l.b16 %v2666
  %v2994 = vunpack.c.h.b16 %v2666
  %v2995 = vunpack.c.l.b16 %v2667
  %v2996 = vunpack.c.h.b16 %v2667
  %v2997 = vunpack.c.l.b16 %v2668
  %v2998 = vunpack.c.h.b16 %v2668
  %v2999 = vunpack.c.l.b16 %v2669
  %v3000 = vunpack.c.h.b16 %v2669
  %v3001 = vunpack.c.l.b16 %v2670
  %v3002 = vunpack.c.h.b16 %v2670
  %v3003 = vunpack.c.l.b16 %v2671
  %v3004 = vunpack.c.h.b16 %v2671
  %v3005 = vunpack.c.l.b16 %v2672
  %v3006 = vunpack.c.h.b16 %v2672
  %v3007 = vunpack.c.l.b16 %v2673
  %v3008 = vunpack.c.h.b16 %v2673
  %v3009 = vunpack.c.l.b16 %v2674
  %v3010 = vunpack.c.h.b16 %v2674
  %v3011 = vunpack.c.l.b16 %v2675
  %v3012 = vunpack.c.h.b16 %v2675
  %v3013 = vunpack.c.l.b16 %v2676
  %v3014 = vunpack.c.h.b16 %v2676
  %v3015 = vunpack.c.l.b16 %v2677
  %v3016 = vunpack.c.h.b16 %v2677
  %v3017 = vunpack.c.l.b16 %v2678
  %v3018 = vunpack.c.h.b16 %v2678
  %v3019 = vunpack.c.l.b16 %v2679
  %v3020 = vunpack.c.h.b16 %v2679
  %v3021 = vunpack.c.l.b16 %v2680
  %v3022 = vunpack.c.h.b16 %v2680
  %v3023 = vunpack.c.l.b16 %v2681
  %v3024 = vunpack.c.h.b16 %v2681
  %v3025 = vpack.c.b16 %v2803, %v2801
  %v3026 = vpack.c.b16 %v2804, %v2802
  %v3027 = vpack.c.b16 %v2807, %v2805
  %v3028 = vpack.c.b16 %v2808, %v2806
  %v3029 = vpack.c.b16 %v2811, %v2809
  %v3030 = vpack.c.b16 %v2812, %v2810
  %v3031 = vpack.c.b16 %v2815, %v2813
  %v3032 = vpack.c.b16 %v2816, %v2814
  %v3033 = vpack.c.b16 %v2819, %v2817
  %v3034 = vpack.c.b16 %v2820, %v2818
  %v3035 = vpack.c.b16 %v2823, %v2821
  %v3036 = vpack.c.b16 %v2824, %v2822
  %v3037 = vpack.c.b16 %v2827, %v2825
  %v3038 = vpack.c.b16 %v2828, %v2826
  %v3039 = vpack.c.b16 %v2831, %v2829
  %v3040 = vpack.c.b16 %v2832, %v2830
  %v3041 = vpack.c.b16 %v2835, %v2833
  %v3042 = vpack.c.b16 %v2836, %v2834
  %v3043 = vpack.c.b16 %v2839, %v2837
  %v3044 = vpack.c.b16 %v2840, %v2838
  %v3045 = vpack.c.b16 %v2843, %v2841
  %v3046 = vpack.c.b16 %v2844, %v2842
  %v3047 = vpack.c.b16 %v2847, %v2845
  %v3048 = vpack.c.b16 %v2848, %v2846
  %v3049 = vpack.c.b16 %v2851, %v2849
  %v3050 = vpack.c.b16 %v2852, %v2850
  %v3051 = vpack.c.b16 %v2855, %v2853
  %v3052 = vpack.c.b16 %v2856, %v2854
  %v3053 = vpack.c.b16 %v2859, %v2857
  %v3054 = vpack.c.b16 %v2860, %v2858
  %v3055 = vpack.c.b16 %v2863, %v2861
  %v3056 = vpack.c.b16 %v2864, %v2862
  %v3057 = vpack.c.b16 %v2867, %v2865
  %v3058 = vpack.c.b16 %v2868, %v2866
  %v3059 = vpack.c.b16 %v2871, %v2869
  %v3060 = vpack.c.b16 %v2872, %v2870
  %v3061 = vpack.c.b16 %v2875, %v2873
  %v3062 = vpack.c.b16 %v2876, %v2874
  %v3063 = vpack.c.b16 %v2879, %v2877
  %v3064 = vpack.c.b16 %v2880, %v2878
  %v3065 = vpack.c.b16 %v2883, %v2881
  %v3066 = vpack.c.b16 %v2884, %v2882
  %v3067 = vpack.c.b16 %v2887, %v2885
  %v3068 = vpack.c.b16 %v2888, %v2886
  %v3069 = vpack.c.b16 %v2891, %v2889
  %v3070 = vpack.c.b16 %v2892, %v2890
  %v3071 = vpack.c.b16 %v2895, %v2893
  %v3072 = vpack.c.b16 %v2896, %v2894
  %v3073 = vpack.c.b16 %v2899, %v2897
  %v3074 = vpack.c.b16 %v2900, %v2898
  %v3075 = vpack.c.b16 %v2903, %v2901
  %v3076 = vpack.c.b16 %v2904, %v2902
  %v3077 = vpack.c.b16 %v2907, %v2905
  %v3078 = vpack.c.b16 %v2908, %v2906
  %v3079 = vpack.c.b16 %v2911, %v2909
  %v3080 = vpack.c.b16 %v2912, %v2910
  %v3081 = vpack.c.b16 %v2915, %v2913
  %v3082 = vpack.c.b16 %v2916, %v2914
  %v3083 = vpack.c.b16 %v2919, %v2917
  %v3084 = vpack.c.b16 %v2920, %v2918
  %v3085 = vpack.c.b16 %v2923, %v2921
  %v3086 = vpack.c.b16 %v2924, %v2922
  %v3087 = vpack.c.b16 %v2927, %v2925
  %v3088 = vpack.c.b16 %v2928, %v2926
  %v3089 = vpack.c.b16 %v2931, %v2929
  %v3090 = vpack.c.b16 %v2932, %v2930
  %v3091 = vpack.c.b16 %v2935, %v2933
  %v3092 = vpack.c.b16 %v2936, %v2934
  %v3093 = vpack.c.b16 %v2939, %v2937
  %v3094 = vpack.c.b16 %v2940, %v2938
  %v3095 = vpack.c.b16 %v2943, %v2941
  %v3096 = vpack.c.b16 %v2944, %v2942
  %v3097 = vpack.c.b16 %v2947, %v2945
  %v3098 = vpack.c.b16 %v2948, %v2946
  %v3099 = vpack.c.b16 %v2951, %v2949
  %v3100 = vpack.c.b16 %v2952, %v2950
  %v3101 = vpack.c.b16 %v2955, %v2953
  %v3102 = vpack.c.b16 %v2956, %v2954
  %v3103 = vpack.c.b16 %v2959, %v2957
  %v3104 = vpack.c.b16 %v2960, %v2958
  %v3105 = vpack.c.b16 %v2963, %v2961
  %v3106 = vpack.c.b16 %v2964, %v2962
  %v3107 = vpack.c.b16 %v2967, %v2965
  %v3108 = vpack.c.b16 %v2968, %v2966
  %v3109 = vpack.c.b16 %v2971, %v2969
  %v3110 = vpack.c.b16 %v2972, %v2970
  %v3111 = vpack.c.b16 %v2975, %v2973
  %v3112 = vpack.c.b16 %v2976, %v2974
  %v3113 = vpack.c.b16 %v2979, %v2977
  %v3114 = vpack.c.b16 %v2980, %v2978
  %v3115 = vpack.c.b16 %v2983, %v2981
  %v3116 = vpack.c.b16 %v2984, %v2982
  %v3117 = vpack.c.b16 %v2987, %v2985
  %v3118 = vpack.c.b16 %v2988, %v2986
  %v3119 = vpack.c.b16 %v2991, %v2989
  %v3120 = vpack.c.b16 %v2992, %v2990
  %v3121 = vpack.c.b16 %v2995, %v2993
  %v3122 = vpack.c.b16 %v2996, %v2994
  %v3123 = vpack.c.b16 %v2999, %v2997
  %v3124 = vpack.c.b16 %v3000, %v2998
  %v3125 = vpack.c.b16 %v3003, %v3001
  %v3126 = vpack.c.b16 %v3004, %v3002
  %v3127 = vpack.c.b16 %v3007, %v3005
  %v3128 = vpack.c.b16 %v3008, %v3006
  %v3129 = vpack.c.b16 %v3011, %v3009
  %v3130 = vpack.c.b16 %v3012, %v3010
  %v3131 = vpack.c.b16 %v3015, %v3013
  %v3132 = vpack.c.b16 %v3016, %v3014
  %v3133 = vpack.c.b16 %v3019, %v3017
  %v3134 = vpack.c.b16 %v3020, %v3018
  %v3135 = vpack.c.b16 %v3023, %v3021
  %v3136 = vpack.c.b16 %v3024, %v3022
  %3249 = vmatprep.subr.bf16.mxu0 %v3026
  %3250 = vmatpush1.bf16.msra.mxu0 %v3025
  %3251 = vmatprep.subr.bf16.mxu0 %v3028
  %3252 = vmatpush1.bf16.msra.mxu0 %v3027
  %3253 = vmatprep.subr.bf16.mxu0 %v3030
  %3254 = vmatpush1.bf16.msra.mxu0 %v3029
  %3255 = vmatprep.subr.bf16.mxu0 %v3032
  %3256 = vmatpush1.bf16.msra.mxu0 %v3031
  %3257 = vmatprep.subr.bf16.mxu0 %v3034
  %3258 = vmatpush1.bf16.msra.mxu0 %v3033
  %3259 = vmatprep.subr.bf16.mxu0 %v3036
  %3260 = vmatpush1.bf16.msra.mxu0 %v3035
  %3261 = vmatprep.subr.bf16.mxu0 %v3038
  %3262 = vmatpush1.bf16.msra.mxu0 %v3037
  %3263 = vmatprep.subr.bf16.mxu0 %v3040
  %3264 = vmatpush1.bf16.msra.mxu0 %v3039
  %3265 = vmatprep.subr.bf16.mxu0 %v3042
  %3266 = vmatpush1.bf16.msra.mxu0 %v3041
  %3267 = vmatprep.subr.bf16.mxu0 %v3044
  %3268 = vmatpush1.bf16.msra.mxu0 %v3043
  %3269 = vmatprep.subr.bf16.mxu0 %v3046
  %3270 = vmatpush1.bf16.msra.mxu0 %v3045
  %3271 = vmatprep.subr.bf16.mxu0 %v3048
  %3272 = vmatpush1.bf16.msra.mxu0 %v3047
  %3273 = vmatprep.subr.bf16.mxu0 %v3050
  %3274 = vmatpush1.bf16.msra.mxu0 %v3049
  %3275 = vmatprep.subr.bf16.mxu0 %v3052
  %3276 = vmatpush1.bf16.msra.mxu0 %v3051
  %3277 = vmatprep.subr.bf16.mxu0 %v3054
  %3278 = vmatpush1.bf16.msra.mxu0 %v3053
  %3279 = vmatprep.subr.bf16.mxu0 %v3056
  %3280 = vmatpush1.bf16.msra.mxu0 %v3055
  %3281 = vmatprep.mubr.bf16.mxu0 %v2683
  %3282 = vmatmul.mubr.bf16.gmra.mrb[0].mxu0 %v2682
  %v3283 = vpop.f32.mrb[0].mxu0
  %v3284 = vadd.f32 0.0, %v3283
  %v3285 = vpop.f32.mrb[0].mxu0
  %v3286 = vadd.f32 0.0, %v3285
  %v3287 = vpop.f32.mrb[0].mxu0
  %v3288 = vpop.f32.mrb[0].mxu0
  %3289 = vdwg.mxu0
  %3290 = vmatprep.subr.bf16.mxu0 %v3058
  %3291 = vmatpush1.bf16.msra.mxu0 %v3057
  %3292 = vmatprep.subr.bf16.mxu0 %v3060
  %3293 = vmatpush1.bf16.msra.mxu0 %v3059
  %3294 = vmatprep.subr.bf16.mxu0 %v3062
  %3295 = vmatpush1.bf16.msra.mxu0 %v3061
  %3296 = vmatprep.subr.bf16.mxu0 %v3064
  %3297 = vmatpush1.bf16.msra.mxu0 %v3063
  %3298 = vmatprep.subr.bf16.mxu0 %v3066
  %3299 = vmatpush1.bf16.msra.mxu0 %v3065
  %3300 = vmatprep.subr.bf16.mxu0 %v3068
  %3301 = vmatpush1.bf16.msra.mxu0 %v3067
  %3302 = vmatprep.subr.bf16.mxu0 %v3070
  %3303 = vmatpush1.bf16.msra.mxu0 %v3069
  %3304 = vmatprep.subr.bf16.mxu0 %v3072
  %3305 = vmatpush1.bf16.msra.mxu0 %v3071
  %3306 = vmatprep.subr.bf16.mxu0 %v3074
  %3307 = vmatpush1.bf16.msra.mxu0 %v3073
  %3308 = vmatprep.subr.bf16.mxu0 %v3076
  %3309 = vmatpush1.bf16.msra.mxu0 %v3075
  %3310 = vmatprep.subr.bf16.mxu0 %v3078
  %3311 = vmatpush1.bf16.msra.mxu0 %v3077
  %3312 = vmatprep.subr.bf16.mxu0 %v3080
  %3313 = vmatpush1.bf16.msra.mxu0 %v3079
  %3314 = vmatprep.subr.bf16.mxu0 %v3082
  %3315 = vmatpush1.bf16.msra.mxu0 %v3081
  %3316 = vmatprep.subr.bf16.mxu0 %v3084
  %3317 = vmatpush1.bf16.msra.mxu0 %v3083
  %3318 = vmatprep.subr.bf16.mxu0 %v3086
  %3319 = vmatpush1.bf16.msra.mxu0 %v3085
  %3320 = vmatprep.subr.bf16.mxu0 %v3088
  %3321 = vmatpush1.bf16.msra.mxu0 %v3087
  %3322 = vmatprep.mubr.bf16.mxu0 %v2685
  %3323 = vmatmul.mubr.bf16.gmra.mrb[0].mxu0 %v2684
  %v3324 = vpop.f32.mrb[0].mxu0
  %v3325 = vadd.f32 %v3284, %v3324
  %v3326 = vpop.f32.mrb[0].mxu0
  %v3327 = vadd.f32 %v3286, %v3326
  %v3328 = vpop.f32.mrb[0].mxu0
  %v3329 = vpop.f32.mrb[0].mxu0
  %3330 = vdwg.mxu0
  %3331 = vmatprep.subr.bf16.mxu0 %v3090
  %3332 = vmatpush1.bf16.msra.mxu0 %v3089
  %3333 = vmatprep.subr.bf16.mxu0 %v3092
  %3334 = vmatpush1.bf16.msra.mxu0 %v3091
  %3335 = vmatprep.subr.bf16.mxu0 %v3094
  %3336 = vmatpush1.bf16.msra.mxu0 %v3093
  %3337 = vmatprep.subr.bf16.mxu0 %v3096
  %3338 = vmatpush1.bf16.msra.mxu0 %v3095
  %3339 = vmatprep.subr.bf16.mxu0 %v3098
  %3340 = vmatpush1.bf16.msra.mxu0 %v3097
  %3341 = vmatprep.subr.bf16.mxu0 %v3100
  %3342 = vmatpush1.bf16.msra.mxu0 %v3099
  %3343 = vmatprep.subr.bf16.mxu0 %v3102
  %3344 = vmatpush1.bf16.msra.mxu0 %v3101
  %3345 = vmatprep.subr.bf16.mxu0 %v3104
  %3346 = vmatpush1.bf16.msra.mxu0 %v3103
  %3347 = vmatprep.subr.bf16.mxu0 %v3106
  %3348 = vmatpush1.bf16.msra.mxu0 %v3105
  %3349 = vmatprep.subr.bf16.mxu0 %v3108
  %3350 = vmatpush1.bf16.msra.mxu0 %v3107
  %3351 = vmatprep.subr.bf16.mxu0 %v3110
  %3352 = vmatpush1.bf16.msra.mxu0 %v3109
  %3353 = vmatprep.subr.bf16.mxu0 %v3112
  %3354 = vmatpush1.bf16.msra.mxu0 %v3111
  %3355 = vmatprep.subr.bf16.mxu0 %v3114
  %3356 = vmatpush1.bf16.msra.mxu0 %v3113
  %3357 = vmatprep.subr.bf16.mxu0 %v3116
  %3358 = vmatpush1.bf16.msra.mxu0 %v3115
  %3359 = vmatprep.subr.bf16.mxu0 %v3118
  %3360 = vmatpush1.bf16.msra.mxu0 %v3117
  %3361 = vmatprep.subr.bf16.mxu0 %v3120
  %3362 = vmatpush1.bf16.msra.mxu0 %v3119
  %3363 = vmatprep.mubr.bf16.mxu0 %v2687
  %3364 = vmatmul.mubr.bf16.gmra.mrb[0].mxu0 %v2686
  %v3365 = vpop.f32.mrb[0].mxu0
  %v3366 = vadd.f32 %v3325, %v3365
  %v3367 = vpop.f32.mrb[0].mxu0
  %v3368 = vadd.f32 %v3327, %v3367
  %v3369 = vpop.f32.mrb[0].mxu0
  %v3370 = vpop.f32.mrb[0].mxu0
  %3371 = vdwg.mxu0
  %3372 = vmatprep.subr.bf16.mxu0 %v3122
  %3373 = vmatpush1.bf16.msra.mxu0 %v3121
  %3374 = vmatprep.subr.bf16.mxu0 %v3124
  %3375 = vmatpush1.bf16.msra.mxu0 %v3123
  %3376 = vmatprep.subr.bf16.mxu0 %v3126
  %3377 = vmatpush1.bf16.msra.mxu0 %v3125
  %3378 = vmatprep.subr.bf16.mxu0 %v3128
  %3379 = vmatpush1.bf16.msra.mxu0 %v3127
  %3380 = vmatprep.subr.bf16.mxu0 %v3130
  %3381 = vmatpush1.bf16.msra.mxu0 %v3129
  %3382 = vmatprep.subr.bf16.mxu0 %v3132
  %3383 = vmatpush1.bf16.msra.mxu0 %v3131
  %3384 = vmatprep.subr.bf16.mxu0 %v3134
  %3385 = vmatpush1.bf16.msra.mxu0 %v3133
  %3386 = vmatprep.subr.bf16.mxu0 %v3136
  %3387 = vmatpush1.bf16.msra.mxu0 %v3135
  %3388 = vmatprep.subr.bf16.mxu0 0
  %3389 = vmatpush1.bf16.msra.mxu0 0
  %3390 = vmatprep.subr.bf16.mxu0 0
  %3391 = vmatpush1.bf16.msra.mxu0 0
  %3392 = vmatprep.subr.bf16.mxu0 0
  %3393 = vmatpush1.bf16.msra.mxu0 0
  %3394 = vmatprep.subr.bf16.mxu0 0
  %3395 = vmatpush1.bf16.msra.mxu0 0
  %3396 = vmatprep.subr.bf16.mxu0 0
  %3397 = vmatpush1.bf16.msra.mxu0 0
  %3398 = vmatprep.subr.bf16.mxu0 0
  %3399 = vmatpush1.bf16.msra.mxu0 0
  %3400 = vmatprep.subr.bf16.mxu0 0
  %3401 = vmatpush1.bf16.msra.mxu0 0
  %3402 = vmatprep.subr.bf16.mxu0 0
  %3403 = vmatpush1.bf16.msra.mxu0 0
  %3404 = vmatprep.mubr.bf16.mxu0 0
  %3405 = vmatmul.mubr.bf16.gmra.mrb[0].mxu0 %v2688
  %v3406 = vpop.f32.mrb[0].mxu0
  %v3407 = vadd.f32 %v3366, %v3406
  %v3408 = vpop.f32.mrb[0].mxu0
  %v3409 = vadd.f32 %v3368, %v3408
  %v3410 = vpop.f32.mrb[0].mxu0
  %v3411 = vpop.f32.mrb[0].mxu0
  %3412 = vdwg.mxu0
  %v3413 = vpack.c.bf16 %v2563, %v2563
  %v3414 = vpack.c.bf16 %v2564, %v2564
  %v3415 = vpack.c.bf16 %v2565, %v2565
  %v3416 = vpack.c.bf16 %v2566, %v2566
  %v3417 = vpack.c.bf16 %v2567, %v2567
  %v3418 = vpack.c.bf16 %v2568, %v2568
  %v3419 = vpack.c.bf16 %v2569, %v2569
  %3420 = vmatprep.subr.bf16.mxu0 %v3026
  %3421 = vmatpush1.bf16.msra.mxu0 %v3025
  %3422 = vmatprep.subr.bf16.mxu0 %v3028
  %3423 = vmatpush1.bf16.msra.mxu0 %v3027
  %3424 = vmatprep.subr.bf16.mxu0 %v3030
  %3425 = vmatpush1.bf16.msra.mxu0 %v3029
  %3426 = vmatprep.subr.bf16.mxu0 %v3032
  %3427 = vmatpush1.bf16.msra.mxu0 %v3031
  %3428 = vmatprep.subr.bf16.mxu0 %v3034
  %3429 = vmatpush1.bf16.msra.mxu0 %v3033
  %3430 = vmatprep.subr.bf16.mxu0 %v3036
  %3431 = vmatpush1.bf16.msra.mxu0 %v3035
  %3432 = vmatprep.subr.bf16.mxu0 %v3038
  %3433 = vmatpush1.bf16.msra.mxu0 %v3037
  %3434 = vmatprep.subr.bf16.mxu0 %v3040
  %3435 = vmatpush1.bf16.msra.mxu0 %v3039
  %3436 = vmatprep.subr.bf16.mxu0 %v3042
  %3437 = vmatpush1.bf16.msra.mxu0 %v3041
  %3438 = vmatprep.subr.bf16.mxu0 %v3044
  %3439 = vmatpush1.bf16.msra.mxu0 %v3043
  %3440 = vmatprep.subr.bf16.mxu0 %v3046
  %3441 = vmatpush1.bf16.msra.mxu0 %v3045
  %3442 = vmatprep.subr.bf16.mxu0 %v3048
  %3443 = vmatpush1.bf16.msra.mxu0 %v3047
  %3444 = vmatprep.subr.bf16.mxu0 %v3050
  %3445 = vmatpush1.bf16.msra.mxu0 %v3049
  %3446 = vmatprep.subr.bf16.mxu0 %v3052
  %3447 = vmatpush1.bf16.msra.mxu0 %v3051
  %3448 = vmatprep.subr.bf16.mxu0 %v3054
  %3449 = vmatpush1.bf16.msra.mxu0 %v3053
  %3450 = vmatprep.subr.bf16.mxu0 %v3056
  %3451 = vmatpush1.bf16.msra.mxu0 %v3055
  %3452 = vmatprep.mubr.bf16.mxu0 %v3414
  %3453 = vmatmul.mubr.bf16.gmra.mrb[0].mxu0 %v3413
  %v3454 = vpop.f32.mrb[0].mxu0
  %v3455 = vadd.f32 0.0, %v3454
  %v3456 = vpop.f32.mrb[0].mxu0
  %v3457 = vadd.f32 0.0, %v3456
  %v3458 = vpop.f32.mrb[0].mxu0
  %v3459 = vpop.f32.mrb[0].mxu0
  %3460 = vdwg.mxu0
  %3461 = vmatprep.subr.bf16.mxu0 %v3058
  %3462 = vmatpush1.bf16.msra.mxu0 %v3057
  %3463 = vmatprep.subr.bf16.mxu0 %v3060
  %3464 = vmatpush1.bf16.msra.mxu0 %v3059
  %3465 = vmatprep.subr.bf16.mxu0 %v3062
  %3466 = vmatpush1.bf16.msra.mxu0 %v3061
  %3467 = vmatprep.subr.bf16.mxu0 %v3064
  %3468 = vmatpush1.bf16.msra.mxu0 %v3063
  %3469 = vmatprep.subr.bf16.mxu0 %v3066
  %3470 = vmatpush1.bf16.msra.mxu0 %v3065
  %3471 = vmatprep.subr.bf16.mxu0 %v3068
  %3472 = vmatpush1.bf16.msra.mxu0 %v3067
  %3473 = vmatprep.subr.bf16.mxu0 %v3070
  %3474 = vmatpush1.bf16.msra.mxu0 %v3069
  %3475 = vmatprep.subr.bf16.mxu0 %v3072
  %3476 = vmatpush1.bf16.msra.mxu0 %v3071
  %3477 = vmatprep.subr.bf16.mxu0 %v3074
  %3478 = vmatpush1.bf16.msra.mxu0 %v3073
  %3479 = vmatprep.subr.bf16.mxu0 %v3076
  %3480 = vmatpush1.bf16.msra.mxu0 %v3075
  %3481 = vmatprep.subr.bf16.mxu0 %v3078
  %3482 = vmatpush1.bf16.msra.mxu0 %v3077
  %3483 = vmatprep.subr.bf16.mxu0 %v3080
  %3484 = vmatpush1.bf16.msra.mxu0 %v3079
  %3485 = vmatprep.subr.bf16.mxu0 %v3082
  %3486 = vmatpush1.bf16.msra.mxu0 %v3081
  %3487 = vmatprep.subr.bf16.mxu0 %v3084
  %3488 = vmatpush1.bf16.msra.mxu0 %v3083
  %3489 = vmatprep.subr.bf16.mxu0 %v3086
  %3490 = vmatpush1.bf16.msra.mxu0 %v3085
  %3491 = vmatprep.subr.bf16.mxu0 %v3088
  %3492 = vmatpush1.bf16.msra.mxu0 %v3087
  %3493 = vmatprep.mubr.bf16.mxu0 %v3416
  %3494 = vmatmul.mubr.bf16.gmra.mrb[0].mxu0 %v3415
  %v3495 = vpop.f32.mrb[0].mxu0
  %v3496 = vadd.f32 %v3455, %v3495
  %v3497 = vpop.f32.mrb[0].mxu0
  %v3498 = vadd.f32 %v3457, %v3497
  %v3499 = vpop.f32.mrb[0].mxu0
  %v3500 = vpop.f32.mrb[0].mxu0
  %3501 = vdwg.mxu0
  %3502 = vmatprep.subr.bf16.mxu0 %v3090
  %3503 = vmatpush1.bf16.msra.mxu0 %v3089
  %3504 = vmatprep.subr.bf16.mxu0 %v3092
  %3505 = vmatpush1.bf16.msra.mxu0 %v3091
  %3506 = vmatprep.subr.bf16.mxu0 %v3094
  %3507 = vmatpush1.bf16.msra.mxu0 %v3093
  %3508 = vmatprep.subr.bf16.mxu0 %v3096
  %3509 = vmatpush1.bf16.msra.mxu0 %v3095
  %3510 = vmatprep.subr.bf16.mxu0 %v3098
  %3511 = vmatpush1.bf16.msra.mxu0 %v3097
  %3512 = vmatprep.subr.bf16.mxu0 %v3100
  %3513 = vmatpush1.bf16.msra.mxu0 %v3099
  %3514 = vmatprep.subr.bf16.mxu0 %v3102
  %3515 = vmatpush1.bf16.msra.mxu0 %v3101
  %3516 = vmatprep.subr.bf16.mxu0 %v3104
  %3517 = vmatpush1.bf16.msra.mxu0 %v3103
  %3518 = vmatprep.subr.bf16.mxu0 %v3106
  %3519 = vmatpush1.bf16.msra.mxu0 %v3105
  %3520 = vmatprep.subr.bf16.mxu0 %v3108
  %3521 = vmatpush1.bf16.msra.mxu0 %v3107
  %3522 = vmatprep.subr.bf16.mxu0 %v3110
  %3523 = vmatpush1.bf16.msra.mxu0 %v3109
  %3524 = vmatprep.subr.bf16.mxu0 %v3112
  %3525 = vmatpush1.bf16.msra.mxu0 %v3111
  %3526 = vmatprep.subr.bf16.mxu0 %v3114
  %3527 = vmatpush1.bf16.msra.mxu0 %v3113
  %3528 = vmatprep.subr.bf16.mxu0 %v3116
  %3529 = vmatpush1.bf16.msra.mxu0 %v3115
  %3530 = vmatprep.subr.bf16.mxu0 %v3118
  %3531 = vmatpush1.bf16.msra.mxu0 %v3117
  %3532 = vmatprep.subr.bf16.mxu0 %v3120
  %3533 = vmatpush1.bf16.msra.mxu0 %v3119
  %3534 = vmatprep.mubr.bf16.mxu0 %v3418
  %3535 = vmatmul.mubr.bf16.gmra.mrb[0].mxu0 %v3417
  %v3536 = vpop.f32.mrb[0].mxu0
  %v3537 = vadd.f32 %v3496, %v3536
  %v3538 = vpop.f32.mrb[0].mxu0
  %v3539 = vadd.f32 %v3498, %v3538
  %v3540 = vpop.f32.mrb[0].mxu0
  %v3541 = vpop.f32.mrb[0].mxu0
  %3542 = vdwg.mxu0
  %3543 = vmatprep.subr.bf16.mxu0 %v3122
  %3544 = vmatpush1.bf16.msra.mxu0 %v3121
  %3545 = vmatprep.subr.bf16.mxu0 %v3124
  %3546 = vmatpush1.bf16.msra.mxu0 %v3123
  %3547 = vmatprep.subr.bf16.mxu0 %v3126
  %3548 = vmatpush1.bf16.msra.mxu0 %v3125
  %3549 = vmatprep.subr.bf16.mxu0 %v3128
  %3550 = vmatpush1.bf16.msra.mxu0 %v3127
  %3551 = vmatprep.subr.bf16.mxu0 %v3130
  %3552 = vmatpush1.bf16.msra.mxu0 %v3129
  %3553 = vmatprep.subr.bf16.mxu0 %v3132
  %3554 = vmatpush1.bf16.msra.mxu0 %v3131
  %3555 = vmatprep.subr.bf16.mxu0 %v3134
  %3556 = vmatpush1.bf16.msra.mxu0 %v3133
  %3557 = vmatprep.subr.bf16.mxu0 %v3136
  %3558 = vmatpush1.bf16.msra.mxu0 %v3135
  %3559 = vmatprep.subr.bf16.mxu0 0
  %3560 = vmatpush1.bf16.msra.mxu0 0
  %3561 = vmatprep.subr.bf16.mxu0 0
  %3562 = vmatpush1.bf16.msra.mxu0 0
  %3563 = vmatprep.subr.bf16.mxu0 0
  %3564 = vmatpush1.bf16.msra.mxu0 0
  %3565 = vmatprep.subr.bf16.mxu0 0
  %3566 = vmatpush1.bf16.msra.mxu0 0
  %3567 = vmatprep.subr.bf16.mxu0 0
  %3568 = vmatpush1.bf16.msra.mxu0 0
  %3569 = vmatprep.subr.bf16.mxu0 0
  %3570 = vmatpush1.bf16.msra.mxu0 0
  %3571 = vmatprep.subr.bf16.mxu0 0
  %3572 = vmatpush1.bf16.msra.mxu0 0
  %3573 = vmatprep.subr.bf16.mxu0 0
  %3574 = vmatpush1.bf16.msra.mxu0 0
  %3575 = vmatprep.mubr.bf16.mxu0 0
  %3576 = vmatmul.mubr.bf16.gmra.mrb[0].mxu0 %v3419
  %v3577 = vpop.f32.mrb[0].mxu0
  %v3578 = vadd.f32 %v3537, %v3577
  %v3579 = vpop.f32.mrb[0].mxu0
  %v3580 = vadd.f32 %v3539, %v3579
  %v3581 = vpop.f32.mrb[0].mxu0
  %v3582 = vpop.f32.mrb[0].mxu0
  %3583 = vdwg.mxu0
  %3588 = vrot.lane.b32.xlu0 %v3407, 127
  %v3589 = vpop.permute.xlu0 %3588
  %3590 = vrot.lane.b32.xlu0 %v3409, 127
  %v3591 = vpop.permute.xlu0 %3590
  %3592 = vrot.lane.b32.xlu0 %v3578, 127
  %v3593 = vpop.permute.xlu0 %3592
  %3594 = vrot.lane.b32.xlu0 %v3580, 127
  %v3595 = vpop.permute.xlu0 %3594
  %v3596 = vsel %vm280, %v3589, %v3591
  %v3597 = vsel %vm280, %v3591, %v3593
  %v3598 = vsel %vm280, %v3593, %v3595
  %v3599 = vsel %vm280, %v3595, %v1171
  %3604 = vrot.lane.b32.xlu0 %v3407, 126
  %v3605 = vpop.permute.xlu0 %3604
  %3606 = vrot.lane.b32.xlu0 %v3409, 126
  %v3607 = vpop.permute.xlu0 %3606
  %3608 = vrot.lane.b32.xlu0 %v3578, 126
  %v3609 = vpop.permute.xlu0 %3608
  %3610 = vrot.lane.b32.xlu0 %v3580, 126
  %v3611 = vpop.permute.xlu0 %3610
  %v3612 = vsel %vm390, %v3605, %v3607
  %v3613 = vsel %vm390, %v3607, %v3609
  %v3614 = vsel %vm390, %v3609, %v3611
  %v3615 = vsel %vm390, %v3611, %v1229
  %3620 = vrot.lane.b32.xlu0 %v3407, 112
  %v3621 = vpop.permute.xlu0 %3620
  %3622 = vrot.lane.b32.xlu0 %v3409, 112
  %v3623 = vpop.permute.xlu0 %3622
  %3624 = vrot.lane.b32.xlu0 %v3578, 112
  %v3625 = vpop.permute.xlu0 %3624
  %3626 = vrot.lane.b32.xlu0 %v3580, 112
  %v3627 = vpop.permute.xlu0 %3626
  %3628 = vrot.lane.b32.xlu0 0.0, 112
  %v3629 = vpop.permute.xlu0 %3628
  %vm3630 = vcmask 916480
  %v3631 = vsel %vm3630, %v3621, %v3623
  %v3632 = vsel %vm3630, %v3623, %v3625
  %v3633 = vsel %vm3630, %v3625, %v3627
  %v3634 = vsel %vm3630, %v3627, %v3629
  %3639 = vrot.lane.b32.xlu0 %v3407, 111
  %v3640 = vpop.permute.xlu0 %3639
  %3641 = vrot.lane.b32.xlu0 %v3409, 111
  %v3642 = vpop.permute.xlu0 %3641
  %3643 = vrot.lane.b32.xlu0 %v3578, 111
  %v3644 = vpop.permute.xlu0 %3643
  %3645 = vrot.lane.b32.xlu0 %v3580, 111
  %v3646 = vpop.permute.xlu0 %3645
  %3647 = vrot.lane.b32.xlu0 0.0, 111
  %v3648 = vpop.permute.xlu0 %3647
  %vm3649 = vcmask 908288
  %v3650 = vsel %vm3649, %v3640, %v3642
  %v3651 = vsel %vm3649, %v3642, %v3644
  %v3652 = vsel %vm3649, %v3644, %v3646
  %v3653 = vsel %vm3649, %v3646, %v3648
  %3658 = vrot.lane.b32.xlu0 %v3407, 110
  %v3659 = vpop.permute.xlu0 %3658
  %3660 = vrot.lane.b32.xlu0 %v3409, 110
  %v3661 = vpop.permute.xlu0 %3660
  %3662 = vrot.lane.b32.xlu0 %v3578, 110
  %v3663 = vpop.permute.xlu0 %3662
  %3664 = vrot.lane.b32.xlu0 %v3580, 110
  %v3665 = vpop.permute.xlu0 %3664
  %3666 = vrot.lane.b32.xlu0 0.0, 110
  %v3667 = vpop.permute.xlu0 %3666
  %vm3668 = vcmask 900096
  %v3669 = vsel %vm3668, %v3659, %v3661
  %v3670 = vsel %vm3668, %v3661, %v3663
  %v3671 = vsel %vm3668, %v3663, %v3665
  %v3672 = vsel %vm3668, %v3665, %v3667
  %3677 = vrot.lane.b32.xlu0 %v3407, 96
  %v3678 = vpop.permute.xlu0 %3677
  %3679 = vrot.lane.b32.xlu0 %v3409, 96
  %v3680 = vpop.permute.xlu0 %3679
  %3681 = vrot.lane.b32.xlu0 %v3578, 96
  %v3682 = vpop.permute.xlu0 %3681
  %3683 = vrot.lane.b32.xlu0 %v3580, 96
  %v3684 = vpop.permute.xlu0 %3683
  %v3685 = vsel %vm500, %v3678, %v3680
  %v3686 = vsel %vm500, %v3680, %v3682
  %v3687 = vsel %vm500, %v3682, %v3684
  %v3688 = vsel %vm500, %v3684, %v1287
  %3693 = vrot.lane.b32.xlu0 %v3407, 95
  %v3694 = vpop.permute.xlu0 %3693
  %3695 = vrot.lane.b32.xlu0 %v3409, 95
  %v3696 = vpop.permute.xlu0 %3695
  %3697 = vrot.lane.b32.xlu0 %v3578, 95
  %v3698 = vpop.permute.xlu0 %3697
  %3699 = vrot.lane.b32.xlu0 %v3580, 95
  %v3700 = vpop.permute.xlu0 %3699
  %v3701 = vsel %vm610, %v3694, %v3696
  %v3702 = vsel %vm610, %v3696, %v3698
  %v3703 = vsel %vm610, %v3698, %v3700
  %v3704 = vsel %vm610, %v3700, %v1345
  %3709 = vrot.lane.b32.xlu0 %v3407, 94
  %v3710 = vpop.permute.xlu0 %3709
  %3711 = vrot.lane.b32.xlu0 %v3409, 94
  %v3712 = vpop.permute.xlu0 %3711
  %3713 = vrot.lane.b32.xlu0 %v3578, 94
  %v3714 = vpop.permute.xlu0 %3713
  %3715 = vrot.lane.b32.xlu0 %v3580, 94
  %v3716 = vpop.permute.xlu0 %3715
  %v3717 = vsel %vm720, %v3710, %v3712
  %v3718 = vsel %vm720, %v3712, %v3714
  %v3719 = vsel %vm720, %v3714, %v3716
  %v3720 = vsel %vm720, %v3716, %v1403
  %v3725 = vpack.c.bf16 %v3596, %v3407
  %v3726 = vpack.c.bf16 %v3597, %v3409
  %v3727 = vpack.c.bf16 %v3598, %v3578
  %v3728 = vpack.c.bf16 %v3599, %v3580
  %v3729 = vpack.c.bf16 %v3631, %v3612
  %v3730 = vpack.c.bf16 %v3632, %v3613
  %v3731 = vpack.c.bf16 %v3633, %v3614
  %v3732 = vpack.c.bf16 %v3634, %v3615
  %v3733 = vpack.c.bf16 %v3669, %v3650
  %v3734 = vpack.c.bf16 %v3670, %v3651
  %v3735 = vpack.c.bf16 %v3671, %v3652
  %v3736 = vpack.c.bf16 %v3672, %v3653
  %v3737 = vpack.c.bf16 %v3701, %v3685
  %v3738 = vpack.c.bf16 %v3702, %v3686
  %v3739 = vpack.c.bf16 %v3703, %v3687
  %v3740 = vpack.c.bf16 %v3704, %v3688
  %v3741 = vpack.c.bf16 %v3717, %v3717
  %v3742 = vpack.c.bf16 %v3718, %v3718
  %v3743 = vpack.c.bf16 %v3719, %v3719
  %v3744 = vpack.c.bf16 %v3720, %v3720
  %v3745 = vld [vmem:[%s8] sm:$0xf]
  %v3746 = vld [vmem:[%s8 + $0x4] sm:$0xf]
  %v3747 = vld [vmem:[%s9] sm:$0xff]
  %v3748 = vld [vmem:[%s9 + $0x8] sm:$0xff]
  %3750 = vset.pattern.permute.xlu0 0
  %3751 = vperm.xlu0 %3750, %v3747
  %v3752 = vpop.permute.xlu0 %3751
  %3755 = vset.pattern.permute.xlu0 0
  %3756 = vperm.xlu0 %3755, %v3748
  %v3757 = vpop.permute.xlu0 %3756
  %v3761 = vunpack.c.l.b16 %v3745
  %v3762 = vunpack.c.l.b16 %v3746
  %v3763 = vpack.c.b16 %v3762, %v3761
  %v3765 = vsel %vm1695, %v3763, 0
  %v3768 = vsel %vm1699, %v3741, 0
  %v3771 = vsel %vm1699, %v3742, 0
  %v3774 = vsel %vm1699, %v3743, 0
  %v3777 = vsel %vm1699, %v3744, 0
  %3779 = vmatprep.subr.bf16.mxu0 %v3726
  %3780 = vmatpush1.bf16.msra.mxu0 %v3725
  %3781 = vmatprep.subr.bf16.mxu0 %v3730
  %3782 = vmatpush1.bf16.msra.mxu0 %v3729
  %3783 = vmatprep.subr.bf16.mxu0 %v3734
  %3784 = vmatpush1.bf16.msra.mxu0 %v3733
  %3785 = vmatprep.subr.bf16.mxu0 %v3738
  %3786 = vmatpush1.bf16.msra.mxu0 %v3737
  %3787 = vmatprep.subr.bf16.mxu0 %v3771
  %3788 = vmatpush1.bf16.msra.mxu0 %v3768
  %3789 = vmatprep.subr.bf16.mxu0 0
  %3790 = vmatpush1.bf16.msra.mxu0 0
  %3791 = vmatprep.subr.bf16.mxu0 0
  %3792 = vmatpush1.bf16.msra.mxu0 0
  %3793 = vmatprep.subr.bf16.mxu0 0
  %3794 = vmatpush1.bf16.msra.mxu0 0
  %3795 = vmatprep.subr.bf16.mxu0 0
  %3796 = vmatpush1.bf16.msra.mxu0 0
  %3797 = vmatprep.subr.bf16.mxu0 0
  %3798 = vmatpush1.bf16.msra.mxu0 0
  %3799 = vmatprep.subr.bf16.mxu0 0
  %3800 = vmatpush1.bf16.msra.mxu0 0
  %3801 = vmatprep.subr.bf16.mxu0 0
  %3802 = vmatpush1.bf16.msra.mxu0 0
  %3803 = vmatprep.subr.bf16.mxu0 0
  %3804 = vmatpush1.bf16.msra.mxu0 0
  %3805 = vmatprep.subr.bf16.mxu0 0
  %3806 = vmatpush1.bf16.msra.mxu0 0
  %3807 = vmatprep.subr.bf16.mxu0 0
  %3808 = vmatpush1.bf16.msra.mxu0 0
  %3809 = vmatprep.subr.bf16.mxu0 0
  %3810 = vmatpush1.bf16.msra.mxu0 0
  %3811 = vmatprep.mubr.bf16.mxu0 0
  %3812 = vmatmul.mubr.bf16.gmra.mrb[0].mxu0 %v3765
  %v3813 = vpop.f32.mrb[0].mxu0
  %v3814 = vadd.f32 %v3752, %v3813
  %v3815 = vpop.f32.mrb[0].mxu0
  %v3816 = vadd.f32 %v3752, %v3815
  %v3817 = vpop.f32.mrb[0].mxu0
  %v3818 = vadd.f32 %v3757, %v3817
  %v3819 = vpop.f32.mrb[0].mxu0
  %v3820 = vadd.f32 %v3757, %v3819
  %3821 = vdwg.mxu0
  %3822 = vmatprep.subr.bf16.mxu0 %v3728
  %3823 = vmatpush1.bf16.msra.mxu0 %v3727
  %3824 = vmatprep.subr.bf16.mxu0 %v3732
  %3825 = vmatpush1.bf16.msra.mxu0 %v3731
  %3826 = vmatprep.subr.bf16.mxu0 %v3736
  %3827 = vmatpush1.bf16.msra.mxu0 %v3735
  %3828 = vmatprep.subr.bf16.mxu0 %v3740
  %3829 = vmatpush1.bf16.msra.mxu0 %v3739
  %3830 = vmatprep.subr.bf16.mxu0 %v3777
  %3831 = vmatpush1.bf16.msra.mxu0 %v3774
  %3832 = vmatprep.subr.bf16.mxu0 0
  %3833 = vmatpush1.bf16.msra.mxu0 0
  %3834 = vmatprep.subr.bf16.mxu0 0
  %3835 = vmatpush1.bf16.msra.mxu0 0
  %3836 = vmatprep.subr.bf16.mxu0 0
  %3837 = vmatpush1.bf16.msra.mxu0 0
  %3838 = vmatprep.subr.bf16.mxu0 0
  %3839 = vmatpush1.bf16.msra.mxu0 0
  %3840 = vmatprep.subr.bf16.mxu0 0
  %3841 = vmatpush1.bf16.msra.mxu0 0
  %3842 = vmatprep.subr.bf16.mxu0 0
  %3843 = vmatpush1.bf16.msra.mxu0 0
  %3844 = vmatprep.subr.bf16.mxu0 0
  %3845 = vmatpush1.bf16.msra.mxu0 0
  %3846 = vmatprep.subr.bf16.mxu0 0
  %3847 = vmatpush1.bf16.msra.mxu0 0
  %3848 = vmatprep.subr.bf16.mxu0 0
  %3849 = vmatpush1.bf16.msra.mxu0 0
  %3850 = vmatprep.subr.bf16.mxu0 0
  %3851 = vmatpush1.bf16.msra.mxu0 0
  %3852 = vmatprep.subr.bf16.mxu0 0
  %3853 = vmatpush1.bf16.msra.mxu0 0
  %3854 = vmatprep.mubr.bf16.mxu0 0
  %3855 = vmatmul.mubr.bf16.gmra.mrb[0].mxu0 %v3765
  %v3856 = vpop.f32.mrb[0].mxu0
  %v3857 = vadd.f32 %v3752, %v3856
  %v3858 = vpop.f32.mrb[0].mxu0
  %v3859 = vadd.f32 %v3752, %v3858
  %v3860 = vpop.f32.mrb[0].mxu0
  %v3861 = vadd.f32 %v3757, %v3860
  %v3862 = vpop.f32.mrb[0].mxu0
  %v3863 = vadd.f32 %v3757, %v3862
  %3864 = vdwg.mxu0
  %v3865 = vmax.f32 %v3814, 0.0
  %v3866 = vmax.f32 %v3816, 0.0
  %v3867 = vmax.f32 %v3857, 0.0
  %v3868 = vmax.f32 %v3859, 0.0
  %v3869 = vmax.f32 %v3818, 0.0
  %v3870 = vmax.f32 %v3820, 0.0
  %v3871 = vmax.f32 %v3861, 0.0
  %v3872 = vmax.f32 %v3863, 0.0
  %3881 = vrot.lane.b32.xlu0 %v3865, 127
  %v3882 = vpop.permute.xlu0 %3881
  %3883 = vrot.lane.b32.xlu0 %v3866, 127
  %v3884 = vpop.permute.xlu0 %3883
  %3885 = vrot.lane.b32.xlu0 %v3867, 127
  %v3886 = vpop.permute.xlu0 %3885
  %3887 = vrot.lane.b32.xlu0 %v3868, 127
  %v3888 = vpop.permute.xlu0 %3887
  %3889 = vrot.lane.b32.xlu0 %v3869, 127
  %v3890 = vpop.permute.xlu0 %3889
  %3891 = vrot.lane.b32.xlu0 %v3870, 127
  %v3892 = vpop.permute.xlu0 %3891
  %3893 = vrot.lane.b32.xlu0 %v3871, 127
  %v3894 = vpop.permute.xlu0 %3893
  %3895 = vrot.lane.b32.xlu0 %v3872, 127
  %v3896 = vpop.permute.xlu0 %3895
  %v3897 = vsel %vm280, %v3882, %v3884
  %v3898 = vsel %vm280, %v3884, %v3886
  %v3899 = vsel %vm280, %v3886, %v3888
  %v3900 = vsel %vm280, %v3888, %v1171
  %v3901 = vsel %vm280, %v3890, %v3892
  %v3902 = vsel %vm280, %v3892, %v3894
  %v3903 = vsel %vm280, %v3894, %v3896
  %v3904 = vsel %vm280, %v3896, %v1171
  %3913 = vrot.lane.b32.xlu0 %v3865, 126
  %v3914 = vpop.permute.xlu0 %3913
  %3915 = vrot.lane.b32.xlu0 %v3866, 126
  %v3916 = vpop.permute.xlu0 %3915
  %3917 = vrot.lane.b32.xlu0 %v3867, 126
  %v3918 = vpop.permute.xlu0 %3917
  %3919 = vrot.lane.b32.xlu0 %v3868, 126
  %v3920 = vpop.permute.xlu0 %3919
  %3921 = vrot.lane.b32.xlu0 %v3869, 126
  %v3922 = vpop.permute.xlu0 %3921
  %3923 = vrot.lane.b32.xlu0 %v3870, 126
  %v3924 = vpop.permute.xlu0 %3923
  %3925 = vrot.lane.b32.xlu0 %v3871, 126
  %v3926 = vpop.permute.xlu0 %3925
  %3927 = vrot.lane.b32.xlu0 %v3872, 126
  %v3928 = vpop.permute.xlu0 %3927
  %v3929 = vsel %vm390, %v3914, %v3916
  %v3930 = vsel %vm390, %v3916, %v3918
  %v3931 = vsel %vm390, %v3918, %v3920
  %v3932 = vsel %vm390, %v3920, %v1229
  %v3933 = vsel %vm390, %v3922, %v3924
  %v3934 = vsel %vm390, %v3924, %v3926
  %v3935 = vsel %vm390, %v3926, %v3928
  %v3936 = vsel %vm390, %v3928, %v1229
  %3945 = vrot.lane.b32.xlu0 %v3865, 112
  %v3946 = vpop.permute.xlu0 %3945
  %3947 = vrot.lane.b32.xlu0 %v3866, 112
  %v3948 = vpop.permute.xlu0 %3947
  %3949 = vrot.lane.b32.xlu0 %v3867, 112
  %v3950 = vpop.permute.xlu0 %3949
  %3951 = vrot.lane.b32.xlu0 %v3868, 112
  %v3952 = vpop.permute.xlu0 %3951
  %3953 = vrot.lane.b32.xlu0 %v3869, 112
  %v3954 = vpop.permute.xlu0 %3953
  %3955 = vrot.lane.b32.xlu0 %v3870, 112
  %v3956 = vpop.permute.xlu0 %3955
  %3957 = vrot.lane.b32.xlu0 %v3871, 112
  %v3958 = vpop.permute.xlu0 %3957
  %3959 = vrot.lane.b32.xlu0 %v3872, 112
  %v3960 = vpop.permute.xlu0 %3959
  %v3961 = vsel %vm3630, %v3946, %v3948
  %v3962 = vsel %vm3630, %v3948, %v3950
  %v3963 = vsel %vm3630, %v3950, %v3952
  %v3964 = vsel %vm3630, %v3952, %v3629
  %v3965 = vsel %vm3630, %v3954, %v3956
  %v3966 = vsel %vm3630, %v3956, %v3958
  %v3967 = vsel %vm3630, %v3958, %v3960
  %v3968 = vsel %vm3630, %v3960, %v3629
  %3977 = vrot.lane.b32.xlu0 %v3865, 111
  %v3978 = vpop.permute.xlu0 %3977
  %3979 = vrot.lane.b32.xlu0 %v3866, 111
  %v3980 = vpop.permute.xlu0 %3979
  %3981 = vrot.lane.b32.xlu0 %v3867, 111
  %v3982 = vpop.permute.xlu0 %3981
  %3983 = vrot.lane.b32.xlu0 %v3868, 111
  %v3984 = vpop.permute.xlu0 %3983
  %3985 = vrot.lane.b32.xlu0 %v3869, 111
  %v3986 = vpop.permute.xlu0 %3985
  %3987 = vrot.lane.b32.xlu0 %v3870, 111
  %v3988 = vpop.permute.xlu0 %3987
  %3989 = vrot.lane.b32.xlu0 %v3871, 111
  %v3990 = vpop.permute.xlu0 %3989
  %3991 = vrot.lane.b32.xlu0 %v3872, 111
  %v3992 = vpop.permute.xlu0 %3991
  %v3993 = vsel %vm3649, %v3978, %v3980
  %v3994 = vsel %vm3649, %v3980, %v3982
  %v3995 = vsel %vm3649, %v3982, %v3984
  %v3996 = vsel %vm3649, %v3984, %v3648
  %v3997 = vsel %vm3649, %v3986, %v3988
  %v3998 = vsel %vm3649, %v3988, %v3990
  %v3999 = vsel %vm3649, %v3990, %v3992
  %v4000 = vsel %vm3649, %v3992, %v3648
  %4009 = vrot.lane.b32.xlu0 %v3865, 110
  %v4010 = vpop.permute.xlu0 %4009
  %4011 = vrot.lane.b32.xlu0 %v3866, 110
  %v4012 = vpop.permute.xlu0 %4011
  %4013 = vrot.lane.b32.xlu0 %v3867, 110
  %v4014 = vpop.permute.xlu0 %4013
  %4015 = vrot.lane.b32.xlu0 %v3868, 110
  %v4016 = vpop.permute.xlu0 %4015
  %4017 = vrot.lane.b32.xlu0 %v3869, 110
  %v4018 = vpop.permute.xlu0 %4017
  %4019 = vrot.lane.b32.xlu0 %v3870, 110
  %v4020 = vpop.permute.xlu0 %4019
  %4021 = vrot.lane.b32.xlu0 %v3871, 110
  %v4022 = vpop.permute.xlu0 %4021
  %4023 = vrot.lane.b32.xlu0 %v3872, 110
  %v4024 = vpop.permute.xlu0 %4023
  %v4025 = vsel %vm3668, %v4010, %v4012
  %v4026 = vsel %vm3668, %v4012, %v4014
  %v4027 = vsel %vm3668, %v4014, %v4016
  %v4028 = vsel %vm3668, %v4016, %v3667
  %v4029 = vsel %vm3668, %v4018, %v4020
  %v4030 = vsel %vm3668, %v4020, %v4022
  %v4031 = vsel %vm3668, %v4022, %v4024
  %v4032 = vsel %vm3668, %v4024, %v3667
  %4041 = vrot.lane.b32.xlu0 %v3865, 96
  %v4042 = vpop.permute.xlu0 %4041
  %4043 = vrot.lane.b32.xlu0 %v3866, 96
  %v4044 = vpop.permute.xlu0 %4043
  %4045 = vrot.lane.b32.xlu0 %v3867, 96
  %v4046 = vpop.permute.xlu0 %4045
  %4047 = vrot.lane.b32.xlu0 %v3868, 96
  %v4048 = vpop.permute.xlu0 %4047
  %4049 = vrot.lane.b32.xlu0 %v3869, 96
  %v4050 = vpop.permute.xlu0 %4049
  %4051 = vrot.lane.b32.xlu0 %v3870, 96
  %v4052 = vpop.permute.xlu0 %4051
  %4053 = vrot.lane.b32.xlu0 %v3871, 96
  %v4054 = vpop.permute.xlu0 %4053
  %4055 = vrot.lane.b32.xlu0 %v3872, 96
  %v4056 = vpop.permute.xlu0 %4055
  %v4057 = vsel %vm500, %v4042, %v4044
  %v4058 = vsel %vm500, %v4044, %v4046
  %v4059 = vsel %vm500, %v4046, %v4048
  %v4060 = vsel %vm500, %v4048, %v1287
  %v4061 = vsel %vm500, %v4050, %v4052
  %v4062 = vsel %vm500, %v4052, %v4054
  %v4063 = vsel %vm500, %v4054, %v4056
  %v4064 = vsel %vm500, %v4056, %v1287
  %4073 = vrot.lane.b32.xlu0 %v3865, 95
  %v4074 = vpop.permute.xlu0 %4073
  %4075 = vrot.lane.b32.xlu0 %v3866, 95
  %v4076 = vpop.permute.xlu0 %4075
  %4077 = vrot.lane.b32.xlu0 %v3867, 95
  %v4078 = vpop.permute.xlu0 %4077
  %4079 = vrot.lane.b32.xlu0 %v3868, 95
  %v4080 = vpop.permute.xlu0 %4079
  %4081 = vrot.lane.b32.xlu0 %v3869, 95
  %v4082 = vpop.permute.xlu0 %4081
  %4083 = vrot.lane.b32.xlu0 %v3870, 95
  %v4084 = vpop.permute.xlu0 %4083
  %4085 = vrot.lane.b32.xlu0 %v3871, 95
  %v4086 = vpop.permute.xlu0 %4085
  %4087 = vrot.lane.b32.xlu0 %v3872, 95
  %v4088 = vpop.permute.xlu0 %4087
  %v4089 = vsel %vm610, %v4074, %v4076
  %v4090 = vsel %vm610, %v4076, %v4078
  %v4091 = vsel %vm610, %v4078, %v4080
  %v4092 = vsel %vm610, %v4080, %v1345
  %v4093 = vsel %vm610, %v4082, %v4084
  %v4094 = vsel %vm610, %v4084, %v4086
  %v4095 = vsel %vm610, %v4086, %v4088
  %v4096 = vsel %vm610, %v4088, %v1345
  %4105 = vrot.lane.b32.xlu0 %v3865, 94
  %v4106 = vpop.permute.xlu0 %4105
  %4107 = vrot.lane.b32.xlu0 %v3866, 94
  %v4108 = vpop.permute.xlu0 %4107
  %4109 = vrot.lane.b32.xlu0 %v3867, 94
  %v4110 = vpop.permute.xlu0 %4109
  %4111 = vrot.lane.b32.xlu0 %v3868, 94
  %v4112 = vpop.permute.xlu0 %4111
  %4113 = vrot.lane.b32.xlu0 %v3869, 94
  %v4114 = vpop.permute.xlu0 %4113
  %4115 = vrot.lane.b32.xlu0 %v3870, 94
  %v4116 = vpop.permute.xlu0 %4115
  %4117 = vrot.lane.b32.xlu0 %v3871, 94
  %v4118 = vpop.permute.xlu0 %4117
  %4119 = vrot.lane.b32.xlu0 %v3872, 94
  %v4120 = vpop.permute.xlu0 %4119
  %v4121 = vsel %vm720, %v4106, %v4108
  %v4122 = vsel %vm720, %v4108, %v4110
  %v4123 = vsel %vm720, %v4110, %v4112
  %v4124 = vsel %vm720, %v4112, %v1403
  %v4125 = vsel %vm720, %v4114, %v4116
  %v4126 = vsel %vm720, %v4116, %v4118
  %v4127 = vsel %vm720, %v4118, %v4120
  %v4128 = vsel %vm720, %v4120, %v1403
  %v4137 = vpack.c.bf16 %v3869, %v3865
  %v4138 = vpack.c.bf16 %v3870, %v3866
  %v4139 = vpack.c.bf16 %v3871, %v3867
  %v4140 = vpack.c.bf16 %v3872, %v3868
  %v4141 = vpack.c.bf16 %v3901, %v3897
  %v4142 = vpack.c.bf16 %v3902, %v3898
  %v4143 = vpack.c.bf16 %v3903, %v3899
  %v4144 = vpack.c.bf16 %v3904, %v3900
  %v4145 = vpack.c.bf16 %v3933, %v3929
  %v4146 = vpack.c.bf16 %v3934, %v3930
  %v4147 = vpack.c.bf16 %v3935, %v3931
  %v4148 = vpack.c.bf16 %v3936, %v3932
  %v4149 = vpack.c.bf16 %v3965, %v3961
  %v4150 = vpack.c.bf16 %v3966, %v3962
  %v4151 = vpack.c.bf16 %v3967, %v3963
  %v4152 = vpack.c.bf16 %v3968, %v3964
  %v4153 = vpack.c.bf16 %v3997, %v3993
  %v4154 = vpack.c.bf16 %v3998, %v3994
  %v4155 = vpack.c.bf16 %v3999, %v3995
  %v4156 = vpack.c.bf16 %v4000, %v3996
  %v4157 = vpack.c.bf16 %v4029, %v4025
  %v4158 = vpack.c.bf16 %v4030, %v4026
  %v4159 = vpack.c.bf16 %v4031, %v4027
  %v4160 = vpack.c.bf16 %v4032, %v4028
  %v4161 = vpack.c.bf16 %v4061, %v4057
  %v4162 = vpack.c.bf16 %v4062, %v4058
  %v4163 = vpack.c.bf16 %v4063, %v4059
  %v4164 = vpack.c.bf16 %v4064, %v4060
  %v4165 = vpack.c.bf16 %v4093, %v4089
  %v4166 = vpack.c.bf16 %v4094, %v4090
  %v4167 = vpack.c.bf16 %v4095, %v4091
  %v4168 = vpack.c.bf16 %v4096, %v4092
  %v4169 = vpack.c.bf16 %v4125, %v4121
  %v4170 = vpack.c.bf16 %v4126, %v4122
  %v4171 = vpack.c.bf16 %v4127, %v4123
  %v4172 = vpack.c.bf16 %v4128, %v4124
  %v4173 = vld [vmem:[%s10] sm:$0xff]
  %v4174 = vld [vmem:[%s10 + $0x8] sm:$0xff]
  %v4175 = vld [vmem:[%s11] sm:$0xff]
  %v4176 = vld [vmem:[%s11 + $0x8] sm:$0xff]
  %4178 = vset.pattern.permute.xlu0 0
  %4179 = vperm.xlu0 %4178, %v4175
  %v4180 = vpop.permute.xlu0 %4179
  %4183 = vset.pattern.permute.xlu0 0
  %4184 = vperm.xlu0 %4183, %v4176
  %v4185 = vpop.permute.xlu0 %4184
  %v4189 = vunpack.c.l.b16 %v4173
  %v4190 = vunpack.c.h.b16 %v4173
  %v4191 = vunpack.c.l.b16 %v4174
  %v4192 = vunpack.c.h.b16 %v4174
  %v4193 = vpack.c.b16 %v4191, %v4189
  %v4194 = vpack.c.b16 %v4192, %v4190
  %v4197 = vsel %vm2092, %v4194, 0
  %4199 = vmatprep.subr.bf16.mxu0 %v4138
  %4200 = vmatpush1.bf16.msra.mxu0 %v4137
  %4201 = vmatprep.subr.bf16.mxu0 %v4142
  %4202 = vmatpush1.bf16.msra.mxu0 %v4141
  %4203 = vmatprep.subr.bf16.mxu0 %v4146
  %4204 = vmatpush1.bf16.msra.mxu0 %v4145
  %4205 = vmatprep.subr.bf16.mxu0 %v4150
  %4206 = vmatpush1.bf16.msra.mxu0 %v4149
  %4207 = vmatprep.subr.bf16.mxu0 %v4154
  %4208 = vmatpush1.bf16.msra.mxu0 %v4153
  %4209 = vmatprep.subr.bf16.mxu0 %v4158
  %4210 = vmatpush1.bf16.msra.mxu0 %v4157
  %4211 = vmatprep.subr.bf16.mxu0 %v4162
  %4212 = vmatpush1.bf16.msra.mxu0 %v4161
  %4213 = vmatprep.subr.bf16.mxu0 %v4166
  %4214 = vmatpush1.bf16.msra.mxu0 %v4165
  %4215 = vmatprep.subr.bf16.mxu0 %v4170
  %4216 = vmatpush1.bf16.msra.mxu0 %v4169
  %4217 = vmatprep.subr.bf16.mxu0 0
  %4218 = vmatpush1.bf16.msra.mxu0 0
  %4219 = vmatprep.subr.bf16.mxu0 0
  %4220 = vmatpush1.bf16.msra.mxu0 0
  %4221 = vmatprep.subr.bf16.mxu0 0
  %4222 = vmatpush1.bf16.msra.mxu0 0
  %4223 = vmatprep.subr.bf16.mxu0 0
  %4224 = vmatpush1.bf16.msra.mxu0 0
  %4225 = vmatprep.subr.bf16.mxu0 0
  %4226 = vmatpush1.bf16.msra.mxu0 0
  %4227 = vmatprep.subr.bf16.mxu0 0
  %4228 = vmatpush1.bf16.msra.mxu0 0
  %4229 = vmatprep.subr.bf16.mxu0 0
  %4230 = vmatpush1.bf16.msra.mxu0 0
  %4231 = vmatprep.mubr.bf16.mxu0 %v4197
  %4232 = vmatmul.mubr.bf16.gmra.mrb[0].mxu0 %v4193
  %v4233 = vpop.f32.mrb[0].mxu0
  %v4234 = vadd.f32 %v4180, %v4233
  %v4235 = vpop.f32.mrb[0].mxu0
  %v4236 = vadd.f32 %v4180, %v4235
  %v4237 = vpop.f32.mrb[0].mxu0
  %v4238 = vadd.f32 %v4185, %v4237
  %v4239 = vpop.f32.mrb[0].mxu0
  %v4240 = vadd.f32 %v4185, %v4239
  %4241 = vdwg.mxu0
  %4242 = vmatprep.subr.bf16.mxu0 %v4140
  %4243 = vmatpush1.bf16.msra.mxu0 %v4139
  %4244 = vmatprep.subr.bf16.mxu0 %v4144
  %4245 = vmatpush1.bf16.msra.mxu0 %v4143
  %4246 = vmatprep.subr.bf16.mxu0 %v4148
  %4247 = vmatpush1.bf16.msra.mxu0 %v4147
  %4248 = vmatprep.subr.bf16.mxu0 %v4152
  %4249 = vmatpush1.bf16.msra.mxu0 %v4151
  %4250 = vmatprep.subr.bf16.mxu0 %v4156
  %4251 = vmatpush1.bf16.msra.mxu0 %v4155
  %4252 = vmatprep.subr.bf16.mxu0 %v4160
  %4253 = vmatpush1.bf16.msra.mxu0 %v4159
  %4254 = vmatprep.subr.bf16.mxu0 %v4164
  %4255 = vmatpush1.bf16.msra.mxu0 %v4163
  %4256 = vmatprep.subr.bf16.mxu0 %v4168
  %4257 = vmatpush1.bf16.msra.mxu0 %v4167
  %4258 = vmatprep.subr.bf16.mxu0 %v4172
  %4259 = vmatpush1.bf16.msra.mxu0 %v4171
  %4260 = vmatprep.subr.bf16.mxu0 0
  %4261 = vmatpush1.bf16.msra.mxu0 0
  %4262 = vmatprep.subr.bf16.mxu0 0
  %4263 = vmatpush1.bf16.msra.mxu0 0
  %4264 = vmatprep.subr.bf16.mxu0 0
  %4265 = vmatpush1.bf16.msra.mxu0 0
  %4266 = vmatprep.subr.bf16.mxu0 0
  %4267 = vmatpush1.bf16.msra.mxu0 0
  %4268 = vmatprep.subr.bf16.mxu0 0
  %4269 = vmatpush1.bf16.msra.mxu0 0
  %4270 = vmatprep.subr.bf16.mxu0 0
  %4271 = vmatpush1.bf16.msra.mxu0 0
  %4272 = vmatprep.subr.bf16.mxu0 0
  %4273 = vmatpush1.bf16.msra.mxu0 0
  %4274 = vmatprep.mubr.bf16.mxu0 %v4197
  %4275 = vmatmul.mubr.bf16.gmra.mrb[0].mxu0 %v4193
  %v4276 = vpop.f32.mrb[0].mxu0
  %v4277 = vadd.f32 %v4180, %v4276
  %v4278 = vpop.f32.mrb[0].mxu0
  %v4279 = vadd.f32 %v4180, %v4278
  %v4280 = vpop.f32.mrb[0].mxu0
  %v4281 = vadd.f32 %v4185, %v4280
  %v4282 = vpop.f32.mrb[0].mxu0
  %v4283 = vadd.f32 %v4185, %v4282
  %4284 = vdwg.mxu0
  %v4285 = vmax.f32 %v4234, 0.0
  %v4286 = vmax.f32 %v4236, 0.0
  %v4287 = vmax.f32 %v4277, 0.0
  %v4288 = vmax.f32 %v4279, 0.0
  %v4289 = vmax.f32 %v4238, 0.0
  %v4290 = vmax.f32 %v4240, 0.0
  %v4291 = vmax.f32 %v4281, 0.0
  %v4292 = vmax.f32 %v4283, 0.0
  %4301 = vrot.lane.b32.xlu0 %v4285, 127
  %v4302 = vpop.permute.xlu0 %4301
  %4303 = vrot.lane.b32.xlu0 %v4286, 127
  %v4304 = vpop.permute.xlu0 %4303
  %4305 = vrot.lane.b32.xlu0 %v4287, 127
  %v4306 = vpop.permute.xlu0 %4305
  %4307 = vrot.lane.b32.xlu0 %v4288, 127
  %v4308 = vpop.permute.xlu0 %4307
  %4309 = vrot.lane.b32.xlu0 %v4289, 127
  %v4310 = vpop.permute.xlu0 %4309
  %4311 = vrot.lane.b32.xlu0 %v4290, 127
  %v4312 = vpop.permute.xlu0 %4311
  %4313 = vrot.lane.b32.xlu0 %v4291, 127
  %v4314 = vpop.permute.xlu0 %4313
  %4315 = vrot.lane.b32.xlu0 %v4292, 127
  %v4316 = vpop.permute.xlu0 %4315
  %v4317 = vsel %vm280, %v4302, %v4304
  %v4318 = vsel %vm280, %v4304, %v4306
  %v4319 = vsel %vm280, %v4306, %v4308
  %v4320 = vsel %vm280, %v4308, %v1171
  %v4321 = vsel %vm280, %v4310, %v4312
  %v4322 = vsel %vm280, %v4312, %v4314
  %v4323 = vsel %vm280, %v4314, %v4316
  %v4324 = vsel %vm280, %v4316, %v1171
  %4333 = vrot.lane.b32.xlu0 %v4285, 126
  %v4334 = vpop.permute.xlu0 %4333
  %4335 = vrot.lane.b32.xlu0 %v4286, 126
  %v4336 = vpop.permute.xlu0 %4335
  %4337 = vrot.lane.b32.xlu0 %v4287, 126
  %v4338 = vpop.permute.xlu0 %4337
  %4339 = vrot.lane.b32.xlu0 %v4288, 126
  %v4340 = vpop.permute.xlu0 %4339
  %4341 = vrot.lane.b32.xlu0 %v4289, 126
  %v4342 = vpop.permute.xlu0 %4341
  %4343 = vrot.lane.b32.xlu0 %v4290, 126
  %v4344 = vpop.permute.xlu0 %4343
  %4345 = vrot.lane.b32.xlu0 %v4291, 126
  %v4346 = vpop.permute.xlu0 %4345
  %4347 = vrot.lane.b32.xlu0 %v4292, 126
  %v4348 = vpop.permute.xlu0 %4347
  %v4349 = vsel %vm390, %v4334, %v4336
  %v4350 = vsel %vm390, %v4336, %v4338
  %v4351 = vsel %vm390, %v4338, %v4340
  %v4352 = vsel %vm390, %v4340, %v1229
  %v4353 = vsel %vm390, %v4342, %v4344
  %v4354 = vsel %vm390, %v4344, %v4346
  %v4355 = vsel %vm390, %v4346, %v4348
  %v4356 = vsel %vm390, %v4348, %v1229
  %4365 = vrot.lane.b32.xlu0 %v4285, 112
  %v4366 = vpop.permute.xlu0 %4365
  %4367 = vrot.lane.b32.xlu0 %v4286, 112
  %v4368 = vpop.permute.xlu0 %4367
  %4369 = vrot.lane.b32.xlu0 %v4287, 112
  %v4370 = vpop.permute.xlu0 %4369
  %4371 = vrot.lane.b32.xlu0 %v4288, 112
  %v4372 = vpop.permute.xlu0 %4371
  %4373 = vrot.lane.b32.xlu0 %v4289, 112
  %v4374 = vpop.permute.xlu0 %4373
  %4375 = vrot.lane.b32.xlu0 %v4290, 112
  %v4376 = vpop.permute.xlu0 %4375
  %4377 = vrot.lane.b32.xlu0 %v4291, 112
  %v4378 = vpop.permute.xlu0 %4377
  %4379 = vrot.lane.b32.xlu0 %v4292, 112
  %v4380 = vpop.permute.xlu0 %4379
  %v4381 = vsel %vm3630, %v4366, %v4368
  %v4382 = vsel %vm3630, %v4368, %v4370
  %v4383 = vsel %vm3630, %v4370, %v4372
  %v4384 = vsel %vm3630, %v4372, %v3629
  %v4385 = vsel %vm3630, %v4374, %v4376
  %v4386 = vsel %vm3630, %v4376, %v4378
  %v4387 = vsel %vm3630, %v4378, %v4380
  %v4388 = vsel %vm3630, %v4380, %v3629
  %4397 = vrot.lane.b32.xlu0 %v4285, 111
  %v4398 = vpop.permute.xlu0 %4397
  %4399 = vrot.lane.b32.xlu0 %v4286, 111
  %v4400 = vpop.permute.xlu0 %4399
  %4401 = vrot.lane.b32.xlu0 %v4287, 111
  %v4402 = vpop.permute.xlu0 %4401
  %4403 = vrot.lane.b32.xlu0 %v4288, 111
  %v4404 = vpop.permute.xlu0 %4403
  %4405 = vrot.lane.b32.xlu0 %v4289, 111
  %v4406 = vpop.permute.xlu0 %4405
  %4407 = vrot.lane.b32.xlu0 %v4290, 111
  %v4408 = vpop.permute.xlu0 %4407
  %4409 = vrot.lane.b32.xlu0 %v4291, 111
  %v4410 = vpop.permute.xlu0 %4409
  %4411 = vrot.lane.b32.xlu0 %v4292, 111
  %v4412 = vpop.permute.xlu0 %4411
  %v4413 = vsel %vm3649, %v4398, %v4400
  %v4414 = vsel %vm3649, %v4400, %v4402
  %v4415 = vsel %vm3649, %v4402, %v4404
  %v4416 = vsel %vm3649, %v4404, %v3648
  %v4417 = vsel %vm3649, %v4406, %v4408
  %v4418 = vsel %vm3649, %v4408, %v4410
  %v4419 = vsel %vm3649, %v4410, %v4412
  %v4420 = vsel %vm3649, %v4412, %v3648
  %4429 = vrot.lane.b32.xlu0 %v4285, 110
  %v4430 = vpop.permute.xlu0 %4429
  %4431 = vrot.lane.b32.xlu0 %v4286, 110
  %v4432 = vpop.permute.xlu0 %4431
  %4433 = vrot.lane.b32.xlu0 %v4287, 110
  %v4434 = vpop.permute.xlu0 %4433
  %4435 = vrot.lane.b32.xlu0 %v4288, 110
  %v4436 = vpop.permute.xlu0 %4435
  %4437 = vrot.lane.b32.xlu0 %v4289, 110
  %v4438 = vpop.permute.xlu0 %4437
  %4439 = vrot.lane.b32.xlu0 %v4290, 110
  %v4440 = vpop.permute.xlu0 %4439
  %4441 = vrot.lane.b32.xlu0 %v4291, 110
  %v4442 = vpop.permute.xlu0 %4441
  %4443 = vrot.lane.b32.xlu0 %v4292, 110
  %v4444 = vpop.permute.xlu0 %4443
  %v4445 = vsel %vm3668, %v4430, %v4432
  %v4446 = vsel %vm3668, %v4432, %v4434
  %v4447 = vsel %vm3668, %v4434, %v4436
  %v4448 = vsel %vm3668, %v4436, %v3667
  %v4449 = vsel %vm3668, %v4438, %v4440
  %v4450 = vsel %vm3668, %v4440, %v4442
  %v4451 = vsel %vm3668, %v4442, %v4444
  %v4452 = vsel %vm3668, %v4444, %v3667
  %4461 = vrot.lane.b32.xlu0 %v4285, 96
  %v4462 = vpop.permute.xlu0 %4461
  %4463 = vrot.lane.b32.xlu0 %v4286, 96
  %v4464 = vpop.permute.xlu0 %4463
  %4465 = vrot.lane.b32.xlu0 %v4287, 96
  %v4466 = vpop.permute.xlu0 %4465
  %4467 = vrot.lane.b32.xlu0 %v4288, 96
  %v4468 = vpop.permute.xlu0 %4467
  %4469 = vrot.lane.b32.xlu0 %v4289, 96
  %v4470 = vpop.permute.xlu0 %4469
  %4471 = vrot.lane.b32.xlu0 %v4290, 96
  %v4472 = vpop.permute.xlu0 %4471
  %4473 = vrot.lane.b32.xlu0 %v4291, 96
  %v4474 = vpop.permute.xlu0 %4473
  %4475 = vrot.lane.b32.xlu0 %v4292, 96
  %v4476 = vpop.permute.xlu0 %4475
  %v4477 = vsel %vm500, %v4462, %v4464
  %v4478 = vsel %vm500, %v4464, %v4466
  %v4479 = vsel %vm500, %v4466, %v4468
  %v4480 = vsel %vm500, %v4468, %v1287
  %v4481 = vsel %vm500, %v4470, %v4472
  %v4482 = vsel %vm500, %v4472, %v4474
  %v4483 = vsel %vm500, %v4474, %v4476
  %v4484 = vsel %vm500, %v4476, %v1287
  %4493 = vrot.lane.b32.xlu0 %v4285, 95
  %v4494 = vpop.permute.xlu0 %4493
  %4495 = vrot.lane.b32.xlu0 %v4286, 95
  %v4496 = vpop.permute.xlu0 %4495
  %4497 = vrot.lane.b32.xlu0 %v4287, 95
  %v4498 = vpop.permute.xlu0 %4497
  %4499 = vrot.lane.b32.xlu0 %v4288, 95
  %v4500 = vpop.permute.xlu0 %4499
  %4501 = vrot.lane.b32.xlu0 %v4289, 95
  %v4502 = vpop.permute.xlu0 %4501
  %4503 = vrot.lane.b32.xlu0 %v4290, 95
  %v4504 = vpop.permute.xlu0 %4503
  %4505 = vrot.lane.b32.xlu0 %v4291, 95
  %v4506 = vpop.permute.xlu0 %4505
  %4507 = vrot.lane.b32.xlu0 %v4292, 95
  %v4508 = vpop.permute.xlu0 %4507
  %v4509 = vsel %vm610, %v4494, %v4496
  %v4510 = vsel %vm610, %v4496, %v4498
  %v4511 = vsel %vm610, %v4498, %v4500
  %v4512 = vsel %vm610, %v4500, %v1345
  %v4513 = vsel %vm610, %v4502, %v4504
  %v4514 = vsel %vm610, %v4504, %v4506
  %v4515 = vsel %vm610, %v4506, %v4508
  %v4516 = vsel %vm610, %v4508, %v1345
  %4525 = vrot.lane.b32.xlu0 %v4285, 94
  %v4526 = vpop.permute.xlu0 %4525
  %4527 = vrot.lane.b32.xlu0 %v4286, 94
  %v4528 = vpop.permute.xlu0 %4527
  %4529 = vrot.lane.b32.xlu0 %v4287, 94
  %v4530 = vpop.permute.xlu0 %4529
  %4531 = vrot.lane.b32.xlu0 %v4288, 94
  %v4532 = vpop.permute.xlu0 %4531
  %4533 = vrot.lane.b32.xlu0 %v4289, 94
  %v4534 = vpop.permute.xlu0 %4533
  %4535 = vrot.lane.b32.xlu0 %v4290, 94
  %v4536 = vpop.permute.xlu0 %4535
  %4537 = vrot.lane.b32.xlu0 %v4291, 94
  %v4538 = vpop.permute.xlu0 %4537
  %4539 = vrot.lane.b32.xlu0 %v4292, 94
  %v4540 = vpop.permute.xlu0 %4539
  %v4541 = vsel %vm720, %v4526, %v4528
  %v4542 = vsel %vm720, %v4528, %v4530
  %v4543 = vsel %vm720, %v4530, %v4532
  %v4544 = vsel %vm720, %v4532, %v1403
  %v4545 = vsel %vm720, %v4534, %v4536
  %v4546 = vsel %vm720, %v4536, %v4538
  %v4547 = vsel %vm720, %v4538, %v4540
  %v4548 = vsel %vm720, %v4540, %v1403
  %v4557 = vpack.c.bf16 %v4289, %v4285
  %v4558 = vpack.c.bf16 %v4290, %v4286
  %v4559 = vpack.c.bf16 %v4291, %v4287
  %v4560 = vpack.c.bf16 %v4292, %v4288
  %v4561 = vpack.c.bf16 %v4321, %v4317
  %v4562 = vpack.c.bf16 %v4322, %v4318
  %v4563 = vpack.c.bf16 %v4323, %v4319
  %v4564 = vpack.c.bf16 %v4324, %v4320
  %v4565 = vpack.c.bf16 %v4353, %v4349
  %v4566 = vpack.c.bf16 %v4354, %v4350
  %v4567 = vpack.c.bf16 %v4355, %v4351
  %v4568 = vpack.c.bf16 %v4356, %v4352
  %v4569 = vpack.c.bf16 %v4385, %v4381
  %v4570 = vpack.c.bf16 %v4386, %v4382
  %v4571 = vpack.c.bf16 %v4387, %v4383
  %v4572 = vpack.c.bf16 %v4388, %v4384
  %v4573 = vpack.c.bf16 %v4417, %v4413
  %v4574 = vpack.c.bf16 %v4418, %v4414
  %v4575 = vpack.c.bf16 %v4419, %v4415
  %v4576 = vpack.c.bf16 %v4420, %v4416
  %v4577 = vpack.c.bf16 %v4449, %v4445
  %v4578 = vpack.c.bf16 %v4450, %v4446
  %v4579 = vpack.c.bf16 %v4451, %v4447
  %v4580 = vpack.c.bf16 %v4452, %v4448
  %v4581 = vpack.c.bf16 %v4481, %v4477
  %v4582 = vpack.c.bf16 %v4482, %v4478
  %v4583 = vpack.c.bf16 %v4483, %v4479
  %v4584 = vpack.c.bf16 %v4484, %v4480
  %v4585 = vpack.c.bf16 %v4513, %v4509
  %v4586 = vpack.c.bf16 %v4514, %v4510
  %v4587 = vpack.c.bf16 %v4515, %v4511
  %v4588 = vpack.c.bf16 %v4516, %v4512
  %v4589 = vpack.c.bf16 %v4545, %v4541
  %v4590 = vpack.c.bf16 %v4546, %v4542
  %v4591 = vpack.c.bf16 %v4547, %v4543
  %v4592 = vpack.c.bf16 %v4548, %v4544
  %v4593 = vld [vmem:[%s12] sm:$0xff]
  %v4594 = vld [vmem:[%s12 + $0x8] sm:$0xff]
  %v4595 = vld [vmem:[%s13] sm:$0xff]
  %v4596 = vld [vmem:[%s13 + $0x8] sm:$0xff]
  %4598 = vset.pattern.permute.xlu0 0
  %4599 = vperm.xlu0 %4598, %v4595
  %v4600 = vpop.permute.xlu0 %4599
  %4603 = vset.pattern.permute.xlu0 0
  %4604 = vperm.xlu0 %4603, %v4596
  %v4605 = vpop.permute.xlu0 %4604
  %v4609 = vunpack.c.l.b16 %v4593
  %v4610 = vunpack.c.h.b16 %v4593
  %v4611 = vunpack.c.l.b16 %v4594
  %v4612 = vunpack.c.h.b16 %v4594
  %v4613 = vpack.c.b16 %v4611, %v4609
  %v4614 = vpack.c.b16 %v4612, %v4610
  %v4617 = vsel %vm2092, %v4614, 0
  %4619 = vmatprep.subr.bf16.mxu0 %v4558
  %4620 = vmatpush1.bf16.msra.mxu0 %v4557
  %4621 = vmatprep.subr.bf16.mxu0 %v4562
  %4622 = vmatpush1.bf16.msra.mxu0 %v4561
  %4623 = vmatprep.subr.bf16.mxu0 %v4566
  %4624 = vmatpush1.bf16.msra.mxu0 %v4565
  %4625 = vmatprep.subr.bf16.mxu0 %v4570
  %4626 = vmatpush1.bf16.msra.mxu0 %v4569
  %4627 = vmatprep.subr.bf16.mxu0 %v4574
  %4628 = vmatpush1.bf16.msra.mxu0 %v4573
  %4629 = vmatprep.subr.bf16.mxu0 %v4578
  %4630 = vmatpush1.bf16.msra.mxu0 %v4577
  %4631 = vmatprep.subr.bf16.mxu0 %v4582
  %4632 = vmatpush1.bf16.msra.mxu0 %v4581
  %4633 = vmatprep.subr.bf16.mxu0 %v4586
  %4634 = vmatpush1.bf16.msra.mxu0 %v4585
  %4635 = vmatprep.subr.bf16.mxu0 %v4590
  %4636 = vmatpush1.bf16.msra.mxu0 %v4589
  %4637 = vmatprep.subr.bf16.mxu0 0
  %4638 = vmatpush1.bf16.msra.mxu0 0
  %4639 = vmatprep.subr.bf16.mxu0 0
  %4640 = vmatpush1.bf16.msra.mxu0 0
  %4641 = vmatprep.subr.bf16.mxu0 0
  %4642 = vmatpush1.bf16.msra.mxu0 0
  %4643 = vmatprep.subr.bf16.mxu0 0
  %4644 = vmatpush1.bf16.msra.mxu0 0
  %4645 = vmatprep.subr.bf16.mxu0 0
  %4646 = vmatpush1.bf16.msra.mxu0 0
  %4647 = vmatprep.subr.bf16.mxu0 0
  %4648 = vmatpush1.bf16.msra.mxu0 0
  %4649 = vmatprep.subr.bf16.mxu0 0
  %4650 = vmatpush1.bf16.msra.mxu0 0
  %4651 = vmatprep.mubr.bf16.mxu0 %v4617
  %4652 = vmatmul.mubr.bf16.gmra.mrb[0].mxu0 %v4613
  %v4653 = vpop.f32.mrb[0].mxu0
  %v4654 = vadd.f32 %v4600, %v4653
  %v4655 = vpop.f32.mrb[0].mxu0
  %v4656 = vadd.f32 %v4600, %v4655
  %v4657 = vpop.f32.mrb[0].mxu0
  %v4658 = vadd.f32 %v4605, %v4657
  %v4659 = vpop.f32.mrb[0].mxu0
  %v4660 = vadd.f32 %v4605, %v4659
  %4661 = vdwg.mxu0
  %4662 = vmatprep.subr.bf16.mxu0 %v4560
  %4663 = vmatpush1.bf16.msra.mxu0 %v4559
  %4664 = vmatprep.subr.bf16.mxu0 %v4564
  %4665 = vmatpush1.bf16.msra.mxu0 %v4563
  %4666 = vmatprep.subr.bf16.mxu0 %v4568
  %4667 = vmatpush1.bf16.msra.mxu0 %v4567
  %4668 = vmatprep.subr.bf16.mxu0 %v4572
  %4669 = vmatpush1.bf16.msra.mxu0 %v4571
  %4670 = vmatprep.subr.bf16.mxu0 %v4576
  %4671 = vmatpush1.bf16.msra.mxu0 %v4575
  %4672 = vmatprep.subr.bf16.mxu0 %v4580
  %4673 = vmatpush1.bf16.msra.mxu0 %v4579
  %4674 = vmatprep.subr.bf16.mxu0 %v4584
  %4675 = vmatpush1.bf16.msra.mxu0 %v4583
  %4676 = vmatprep.subr.bf16.mxu0 %v4588
  %4677 = vmatpush1.bf16.msra.mxu0 %v4587
  %4678 = vmatprep.subr.bf16.mxu0 %v4592
  %4679 = vmatpush1.bf16.msra.mxu0 %v4591
  %4680 = vmatprep.subr.bf16.mxu0 0
  %4681 = vmatpush1.bf16.msra.mxu0 0
  %4682 = vmatprep.subr.bf16.mxu0 0
  %4683 = vmatpush1.bf16.msra.mxu0 0
  %4684 = vmatprep.subr.bf16.mxu0 0
  %4685 = vmatpush1.bf16.msra.mxu0 0
  %4686 = vmatprep.subr.bf16.mxu0 0
  %4687 = vmatpush1.bf16.msra.mxu0 0
  %4688 = vmatprep.subr.bf16.mxu0 0
  %4689 = vmatpush1.bf16.msra.mxu0 0
  %4690 = vmatprep.subr.bf16.mxu0 0
  %4691 = vmatpush1.bf16.msra.mxu0 0
  %4692 = vmatprep.subr.bf16.mxu0 0
  %4693 = vmatpush1.bf16.msra.mxu0 0
  %4694 = vmatprep.mubr.bf16.mxu0 %v4617
  %4695 = vmatmul.mubr.bf16.gmra.mrb[0].mxu0 %v4613
  %v4696 = vpop.f32.mrb[0].mxu0
  %v4697 = vadd.f32 %v4600, %v4696
  %v4698 = vpop.f32.mrb[0].mxu0
  %v4699 = vadd.f32 %v4600, %v4698
  %v4700 = vpop.f32.mrb[0].mxu0
  %v4701 = vadd.f32 %v4605, %v4700
  %v4702 = vpop.f32.mrb[0].mxu0
  %v4703 = vadd.f32 %v4605, %v4702
  %4704 = vdwg.mxu0
  %v4705 = vmax.f32 %v4654, 0.0
  %v4706 = vmax.f32 %v4656, 0.0
  %v4707 = vmax.f32 %v4697, 0.0
  %v4708 = vmax.f32 %v4699, 0.0
  %v4709 = vmax.f32 %v4658, 0.0
  %v4710 = vmax.f32 %v4660, 0.0
  %v4711 = vmax.f32 %v4701, 0.0
  %v4712 = vmax.f32 %v4703, 0.0
  %v4713 = vld [vmem:[%s14] sm:$0xf]
  %v4714 = vld [vmem:[%s14 + $0x4] sm:$0xf]
  %v4715 = vpack.c.bf16 %v4709, %v4705
  %v4716 = vpack.c.bf16 %v4710, %v4706
  %v4717 = vpack.c.bf16 %v4711, %v4707
  %v4718 = vpack.c.bf16 %v4712, %v4708
  %v4719 = vld [vmem:[%s15] sm:$0xff]
  %v4720 = vld [vmem:[%s15 + $0x8] sm:$0xff]
  %4722 = vset.pattern.permute.xlu0 0
  %4723 = vperm.xlu0 %4722, %v4719
  %v4724 = vpop.permute.xlu0 %4723
  %4727 = vset.pattern.permute.xlu0 0
  %4728 = vperm.xlu0 %4727, %v4720
  %v4729 = vpop.permute.xlu0 %4728
  %v4733 = vunpack.c.l.b16 %v4713
  %v4734 = vunpack.c.l.b16 %v4714
  %v4735 = vpack.c.b16 %v4734, %v4733
  %v4737 = vsel %vm2092, %v4735, 0
  %4739 = vmatprep.subr.bf16.mxu0 %v4716
  %4740 = vmatpush1.bf16.msra.mxu0 %v4715
  %4741 = vmatprep.subr.bf16.mxu0 0
  %4742 = vmatpush1.bf16.msra.mxu0 0
  %4743 = vmatprep.subr.bf16.mxu0 0
  %4744 = vmatpush1.bf16.msra.mxu0 0
  %4745 = vmatprep.subr.bf16.mxu0 0
  %4746 = vmatpush1.bf16.msra.mxu0 0
  %4747 = vmatprep.subr.bf16.mxu0 0
  %4748 = vmatpush1.bf16.msra.mxu0 0
  %4749 = vmatprep.subr.bf16.mxu0 0
  %4750 = vmatpush1.bf16.msra.mxu0 0
  %4751 = vmatprep.subr.bf16.mxu0 0
  %4752 = vmatpush1.bf16.msra.mxu0 0
  %4753 = vmatprep.subr.bf16.mxu0 0
  %4754 = vmatpush1.bf16.msra.mxu0 0
  %4755 = vmatprep.subr.bf16.mxu0 0
  %4756 = vmatpush1.bf16.msra.mxu0 0
  %4757 = vmatprep.subr.bf16.mxu0 0
  %4758 = vmatpush1.bf16.msra.mxu0 0
  %4759 = vmatprep.subr.bf16.mxu0 0
  %4760 = vmatpush1.bf16.msra.mxu0 0
  %4761 = vmatprep.subr.bf16.mxu0 0
  %4762 = vmatpush1.bf16.msra.mxu0 0
  %4763 = vmatprep.subr.bf16.mxu0 0
  %4764 = vmatpush1.bf16.msra.mxu0 0
  %4765 = vmatprep.subr.bf16.mxu0 0
  %4766 = vmatpush1.bf16.msra.mxu0 0
  %4767 = vmatprep.subr.bf16.mxu0 0
  %4768 = vmatpush1.bf16.msra.mxu0 0
  %4769 = vmatprep.subr.bf16.mxu0 0
  %4770 = vmatpush1.bf16.msra.mxu0 0
  %4771 = vmatprep.mubr.bf16.mxu0 0
  %4772 = vmatmul.mubr.bf16.gmra.mrb[0].mxu0 %v4737
  %v4773 = vpop.f32.mrb[0].mxu0
  %v4774 = vadd.f32 %v4724, %v4773
  %v4775 = vpop.f32.mrb[0].mxu0
  %v4776 = vadd.f32 %v4724, %v4775
  %v4777 = vpop.f32.mrb[0].mxu0
  %v4778 = vadd.f32 %v4729, %v4777
  %v4779 = vpop.f32.mrb[0].mxu0
  %v4780 = vadd.f32 %v4729, %v4779
  %4781 = vdwg.mxu0
  %4782 = vmatprep.subr.bf16.mxu0 %v4718
  %4783 = vmatpush1.bf16.msra.mxu0 %v4717
  %4784 = vmatprep.subr.bf16.mxu0 0
  %4785 = vmatpush1.bf16.msra.mxu0 0
  %4786 = vmatprep.subr.bf16.mxu0 0
  %4787 = vmatpush1.bf16.msra.mxu0 0
  %4788 = vmatprep.subr.bf16.mxu0 0
  %4789 = vmatpush1.bf16.msra.mxu0 0
  %4790 = vmatprep.subr.bf16.mxu0 0
  %4791 = vmatpush1.bf16.msra.mxu0 0
  %4792 = vmatprep.subr.bf16.mxu0 0
  %4793 = vmatpush1.bf16.msra.mxu0 0
  %4794 = vmatprep.subr.bf16.mxu0 0
  %4795 = vmatpush1.bf16.msra.mxu0 0
  %4796 = vmatprep.subr.bf16.mxu0 0
  %4797 = vmatpush1.bf16.msra.mxu0 0
  %4798 = vmatprep.subr.bf16.mxu0 0
  %4799 = vmatpush1.bf16.msra.mxu0 0
  %4800 = vmatprep.subr.bf16.mxu0 0
  %4801 = vmatpush1.bf16.msra.mxu0 0
  %4802 = vmatprep.subr.bf16.mxu0 0
  %4803 = vmatpush1.bf16.msra.mxu0 0
  %4804 = vmatprep.subr.bf16.mxu0 0
  %4805 = vmatpush1.bf16.msra.mxu0 0
  %4806 = vmatprep.subr.bf16.mxu0 0
  %4807 = vmatpush1.bf16.msra.mxu0 0
  %4808 = vmatprep.subr.bf16.mxu0 0
  %4809 = vmatpush1.bf16.msra.mxu0 0
  %4810 = vmatprep.subr.bf16.mxu0 0
  %4811 = vmatpush1.bf16.msra.mxu0 0
  %4812 = vmatprep.subr.bf16.mxu0 0
  %4813 = vmatpush1.bf16.msra.mxu0 0
  %4814 = vmatprep.mubr.bf16.mxu0 0
  %4815 = vmatmul.mubr.bf16.gmra.mrb[0].mxu0 %v4737
  %v4816 = vpop.f32.mrb[0].mxu0
  %v4817 = vadd.f32 %v4724, %v4816
  %v4818 = vpop.f32.mrb[0].mxu0
  %v4819 = vadd.f32 %v4724, %v4818
  %v4820 = vpop.f32.mrb[0].mxu0
  %v4821 = vadd.f32 %v4729, %v4820
  %v4822 = vpop.f32.mrb[0].mxu0
  %v4823 = vadd.f32 %v4729, %v4822
  %4824 = vdwg.mxu0
  %v4825 = vmax.f32 %v4774, 0.0
  %v4826 = vmax.f32 %v4776, 0.0
  %v4827 = vmax.f32 %v4817, 0.0
  %v4828 = vmax.f32 %v4819, 0.0
  %v4829 = vmax.f32 %v4778, 0.0
  %v4830 = vmax.f32 %v4780, 0.0
  %v4831 = vmax.f32 %v4821, 0.0
  %v4832 = vmax.f32 %v4823, 0.0
  %v4833 = vld [vmem:[%s16] sm:$0xff]
  %v4834 = vld [vmem:[%s16 + $0x8] sm:$0xff]
  %v4835 = vld [vmem:[%s16 + $0x10] sm:$0xff]
  %v4836 = vld [vmem:[%s16 + $0x18] sm:$0xff]
  %v4837 = vld [vmem:[%s16 + $0x20] sm:$0xff]
  %v4838 = vld [vmem:[%s16 + $0x28] sm:$0xff]
  %v4839 = vld [vmem:[%s16 + $0x30] sm:$0xff]
  %v4840 = vld [vmem:[%s16 + $0x38] sm:$0xff]
  %v4841 = vld [vmem:[%s16 + $0x40] sm:$0xff]
  %v4842 = vld [vmem:[%s16 + $0x48] sm:$0xff]
  %v4843 = vld [vmem:[%s16 + $0x50] sm:$0xff]
  %v4844 = vld [vmem:[%s16 + $0x58] sm:$0xff]
  %v4845 = vld [vmem:[%s16 + $0x60] sm:$0xff]
  %v4846 = vld [vmem:[%s16 + $0x68] sm:$0xff]
  %v4847 = vld [vmem:[%s16 + $0x70] sm:$0xff]
  %v4848 = vld [vmem:[%s16 + $0x78] sm:$0xff]
  %v4849 = vld [vmem:[%s16 + $0x80] sm:$0xff]
  %v4850 = vld [vmem:[%s16 + $0x88] sm:$0xff]
  %v4851 = vld [vmem:[%s16 + $0x90] sm:$0xff]
  %v4852 = vld [vmem:[%s16 + $0x98] sm:$0xff]
  %v4853 = vld [vmem:[%s16 + $0xa0] sm:$0xff]
  %v4854 = vld [vmem:[%s16 + $0xa8] sm:$0xff]
  %v4855 = vld [vmem:[%s16 + $0xb0] sm:$0xff]
  %v4856 = vld [vmem:[%s16 + $0xb8] sm:$0xff]
  %v4857 = vld [vmem:[%s16 + $0xc0] sm:$0xff]
  %v4858 = vld [vmem:[%s16 + $0xc8] sm:$0xff]
  %v4859 = vld [vmem:[%s16 + $0xd0] sm:$0xff]
  %v4860 = vld [vmem:[%s16 + $0xd8] sm:$0xff]
  %v4861 = vld [vmem:[%s16 + $0xe0] sm:$0xff]
  %v4862 = vld [vmem:[%s16 + $0xe8] sm:$0xff]
  %v4863 = vld [vmem:[%s16 + $0xf0] sm:$0xff]
  %v4864 = vld [vmem:[%s16 + $0xf8] sm:$0xff]
  %v4865 = vld [vmem:[%s16 + $0x100] sm:$0xff]
  %v4866 = vld [vmem:[%s16 + $0x108] sm:$0xff]
  %v4867 = vld [vmem:[%s16 + $0x110] sm:$0xff]
  %v4868 = vld [vmem:[%s16 + $0x118] sm:$0xff]
  %v4869 = vld [vmem:[%s16 + $0x120] sm:$0xff]
  %v4870 = vld [vmem:[%s16 + $0x128] sm:$0xff]
  %v4871 = vld [vmem:[%s16 + $0x130] sm:$0xff]
  %v4872 = vld [vmem:[%s16 + $0x138] sm:$0xff]
  %v4873 = vld [vmem:[%s16 + $0x140] sm:$0xff]
  %v4874 = vld [vmem:[%s16 + $0x148] sm:$0xff]
  %v4875 = vld [vmem:[%s16 + $0x150] sm:$0xff]
  %v4876 = vld [vmem:[%s16 + $0x158] sm:$0xff]
  %v4877 = vld [vmem:[%s16 + $0x160] sm:$0xff]
  %v4878 = vld [vmem:[%s16 + $0x168] sm:$0xff]
  %v4879 = vld [vmem:[%s16 + $0x170] sm:$0xff]
  %v4880 = vld [vmem:[%s16 + $0x178] sm:$0xff]
  %v4881 = vld [vmem:[%s16 + $0x180] sm:$0xff]
  %v4882 = vld [vmem:[%s16 + $0x188] sm:$0xff]
  %v4883 = vld [vmem:[%s16 + $0x190] sm:$0xff]
  %v4884 = vld [vmem:[%s16 + $0x198] sm:$0xff]
  %v4885 = vld [vmem:[%s16 + $0x1a0] sm:$0xff]
  %v4886 = vld [vmem:[%s16 + $0x1a8] sm:$0xff]
  %v4887 = vld [vmem:[%s16 + $0x1b0] sm:$0xff]
  %v4888 = vld [vmem:[%s16 + $0x1b8] sm:$0xff]
  %v4889 = vld [vmem:[%s16 + $0x1c0] sm:$0xff]
  %v4890 = vld [vmem:[%s16 + $0x1c8] sm:$0xff]
  %v4891 = vld [vmem:[%s16 + $0x1d0] sm:$0xff]
  %v4892 = vld [vmem:[%s16 + $0x1d8] sm:$0xff]
  %v4893 = vld [vmem:[%s16 + $0x1e0] sm:$0xff]
  %v4894 = vld [vmem:[%s16 + $0x1e8] sm:$0xff]
  %v4895 = vld [vmem:[%s16 + $0x1f0] sm:$0xff]
  %v4896 = vld [vmem:[%s16 + $0x1f8] sm:$0xff]
  %4897 = vmatprep.subr.mxu0 0.0
  %4898 = vmatpush1.msra.mxu0 %v4833
  %4899 = vmatprep.subr.mxu0 0.0
  %4900 = vmatpush1.msra.mxu0 %v4834
  %4901 = vmatprep.subr.mxu0 0.0
  %4902 = vmatpush1.msra.mxu0 %v4835
  %4903 = vmatprep.subr.mxu0 0.0
  %4904 = vmatpush1.msra.mxu0 %v4836
  %4905 = vmatprep.subr.mxu0 0.0
  %4906 = vmatpush1.msra.mxu0 %v4837
  %4907 = vmatprep.subr.mxu0 0.0
  %4908 = vmatpush1.msra.mxu0 %v4838
  %4909 = vmatprep.subr.mxu0 0.0
  %4910 = vmatpush1.msra.mxu0 %v4839
  %4911 = vmatprep.subr.mxu0 0.0
  %4912 = vmatpush1.msra.mxu0 %v4840
  %4913 = vmatprep.subr.mxu0 0.0
  %4914 = vmatpush1.msra.mxu0 %v4841
  %4915 = vmatprep.subr.mxu0 0.0
  %4916 = vmatpush1.msra.mxu0 %v4842
  %4917 = vmatprep.subr.mxu0 0.0
  %4918 = vmatpush1.msra.mxu0 %v4843
  %4919 = vmatprep.subr.mxu0 0.0
  %4920 = vmatpush1.msra.mxu0 %v4844
  %4921 = vmatprep.subr.mxu0 0.0
  %4922 = vmatpush1.msra.mxu0 %v4845
  %4923 = vmatprep.subr.mxu0 0.0
  %4924 = vmatpush1.msra.mxu0 %v4846
  %4925 = vmatprep.subr.mxu0 0.0
  %4926 = vmatpush1.msra.mxu0 %v4847
  %4927 = vmatprep.subr.mxu0 0.0
  %4928 = vmatpush1.msra.mxu0 %v4848
  %4929 = vmatprep.subr.mxu0 0.0
  %4930 = vmatpush1.msra.mxu0 %v4849
  %4931 = vmatprep.subr.mxu0 0.0
  %4932 = vmatpush1.msra.mxu0 %v4850
  %4933 = vmatprep.subr.mxu0 0.0
  %4934 = vmatpush1.msra.mxu0 %v4851
  %4935 = vmatprep.subr.mxu0 0.0
  %4936 = vmatpush1.msra.mxu0 %v4852
  %4937 = vmatprep.subr.mxu0 0.0
  %4938 = vmatpush1.msra.mxu0 %v4853
  %4939 = vmatprep.subr.mxu0 0.0
  %4940 = vmatpush1.msra.mxu0 %v4854
  %4941 = vmatprep.subr.mxu0 0.0
  %4942 = vmatpush1.msra.mxu0 %v4855
  %4943 = vmatprep.subr.mxu0 0.0
  %4944 = vmatpush1.msra.mxu0 %v4856
  %4945 = vmatprep.subr.mxu0 0.0
  %4946 = vmatpush1.msra.mxu0 %v4857
  %4947 = vmatprep.subr.mxu0 0.0
  %4948 = vmatpush1.msra.mxu0 %v4858
  %4949 = vmatprep.subr.mxu0 0.0
  %4950 = vmatpush1.msra.mxu0 %v4859
  %4951 = vmatprep.subr.mxu0 0.0
  %4952 = vmatpush1.msra.mxu0 %v4860
  %4953 = vmatprep.subr.mxu0 0.0
  %4954 = vmatpush1.msra.mxu0 %v4861
  %4955 = vmatprep.subr.mxu0 0.0
  %4956 = vmatpush1.msra.mxu0 %v4862
  %4957 = vmatprep.subr.mxu0 0.0
  %4958 = vmatpush1.msra.mxu0 %v4863
  %4959 = vmatprep.subr.mxu0 0.0
  %4960 = vmatpush1.msra.mxu0 %v4864
  %4961 = vmatprep.mubr.f32.mxu0 %v4826
  %4962 = vmatmul.mubr.f32.gmra.mrb[0].mxu0 %v4825
  %v4963 = vpop.f32.mrb[0].mxu0
  %v4964 = vadd.f32 0.0, %v4963
  %v4965 = vpop.f32.mrb[0].mxu0
  %4966 = vmatprep.mubr.f32.mxu0 %v4830
  %4967 = vmatmul.mubr.f32.gmra.mrb[0].mxu0 %v4829
  %v4968 = vpop.f32.mrb[0].mxu0
  %v4969 = vadd.f32 0.0, %v4968
  %v4970 = vpop.f32.mrb[0].mxu0
  %4971 = vdwg.mxu0
  %4972 = vmatprep.subr.mxu0 0.0
  %4973 = vmatpush1.msra.mxu0 %v4865
  %4974 = vmatprep.subr.mxu0 0.0
  %4975 = vmatpush1.msra.mxu0 %v4866
  %4976 = vmatprep.subr.mxu0 0.0
  %4977 = vmatpush1.msra.mxu0 %v4867
  %4978 = vmatprep.subr.mxu0 0.0
  %4979 = vmatpush1.msra.mxu0 %v4868
  %4980 = vmatprep.subr.mxu0 0.0
  %4981 = vmatpush1.msra.mxu0 %v4869
  %4982 = vmatprep.subr.mxu0 0.0
  %4983 = vmatpush1.msra.mxu0 %v4870
  %4984 = vmatprep.subr.mxu0 0.0
  %4985 = vmatpush1.msra.mxu0 %v4871
  %4986 = vmatprep.subr.mxu0 0.0
  %4987 = vmatpush1.msra.mxu0 %v4872
  %4988 = vmatprep.subr.mxu0 0.0
  %4989 = vmatpush1.msra.mxu0 %v4873
  %4990 = vmatprep.subr.mxu0 0.0
  %4991 = vmatpush1.msra.mxu0 %v4874
  %4992 = vmatprep.subr.mxu0 0.0
  %4993 = vmatpush1.msra.mxu0 %v4875
  %4994 = vmatprep.subr.mxu0 0.0
  %4995 = vmatpush1.msra.mxu0 %v4876
  %4996 = vmatprep.subr.mxu0 0.0
  %4997 = vmatpush1.msra.mxu0 %v4877
  %4998 = vmatprep.subr.mxu0 0.0
  %4999 = vmatpush1.msra.mxu0 %v4878
  %5000 = vmatprep.subr.mxu0 0.0
  %5001 = vmatpush1.msra.mxu0 %v4879
  %5002 = vmatprep.subr.mxu0 0.0
  %5003 = vmatpush1.msra.mxu0 %v4880
  %5004 = vmatprep.subr.mxu0 0.0
  %5005 = vmatpush1.msra.mxu0 %v4881
  %5006 = vmatprep.subr.mxu0 0.0
  %5007 = vmatpush1.msra.mxu0 %v4882
  %5008 = vmatprep.subr.mxu0 0.0
  %5009 = vmatpush1.msra.mxu0 %v4883
  %5010 = vmatprep.subr.mxu0 0.0
  %5011 = vmatpush1.msra.mxu0 %v4884
  %5012 = vmatprep.subr.mxu0 0.0
  %5013 = vmatpush1.msra.mxu0 %v4885
  %5014 = vmatprep.subr.mxu0 0.0
  %5015 = vmatpush1.msra.mxu0 %v4886
  %5016 = vmatprep.subr.mxu0 0.0
  %5017 = vmatpush1.msra.mxu0 %v4887
  %5018 = vmatprep.subr.mxu0 0.0
  %5019 = vmatpush1.msra.mxu0 %v4888
  %5020 = vmatprep.subr.mxu0 0.0
  %5021 = vmatpush1.msra.mxu0 %v4889
  %5022 = vmatprep.subr.mxu0 0.0
  %5023 = vmatpush1.msra.mxu0 %v4890
  %5024 = vmatprep.subr.mxu0 0.0
  %5025 = vmatpush1.msra.mxu0 %v4891
  %5026 = vmatprep.subr.mxu0 0.0
  %5027 = vmatpush1.msra.mxu0 %v4892
  %5028 = vmatprep.subr.mxu0 0.0
  %5029 = vmatpush1.msra.mxu0 %v4893
  %5030 = vmatprep.subr.mxu0 0.0
  %5031 = vmatpush1.msra.mxu0 %v4894
  %5032 = vmatprep.subr.mxu0 0.0
  %5033 = vmatpush1.msra.mxu0 %v4895
  %5034 = vmatprep.subr.mxu0 0.0
  %5035 = vmatpush1.msra.mxu0 %v4896
  %5036 = vmatprep.mubr.f32.mxu0 %v4828
  %5037 = vmatmul.mubr.f32.gmra.mrb[0].mxu0 %v4827
  %v5038 = vpop.f32.mrb[0].mxu0
  %v5039 = vadd.f32 %v4964, %v5038
  %v5040 = vpop.f32.mrb[0].mxu0
  %5041 = vmatprep.mubr.f32.mxu0 %v4832
  %5042 = vmatmul.mubr.f32.gmra.mrb[0].mxu0 %v4831
  %v5043 = vpop.f32.mrb[0].mxu0
  %v5044 = vadd.f32 %v4969, %v5043
  %v5045 = vpop.f32.mrb[0].mxu0
  %5046 = vdwg.mxu0
  %v5047 = vld [vmem:[%s17] sm:$0xff]
  %v5048 = vld [vmem:[%s17 + $0x8] sm:$0x3]
  %v5050 = vsel %vm2092, %v5047, 0
  %v5053 = vsel %vm2092, %v5048, 0
  %5055 = vmatprep.subr.mxu0 0.0
  %5056 = vmatpush1.msra.mxu0 %v5039
  %5057 = vmatprep.subr.mxu0 0.0
  %5058 = vmatpush1.msra.mxu0 %v5044
  %5059 = vmatprep.subr.mxu0 0.0
  %5060 = vmatpush1.msra.mxu0 0.0
  %5061 = vmatprep.subr.mxu0 0.0
  %5062 = vmatpush1.msra.mxu0 0.0
  %5063 = vmatprep.subr.mxu0 0.0
  %5064 = vmatpush1.msra.mxu0 0.0
  %5065 = vmatprep.subr.mxu0 0.0
  %5066 = vmatpush1.msra.mxu0 0.0
  %5067 = vmatprep.subr.mxu0 0.0
  %5068 = vmatpush1.msra.mxu0 0.0
  %5069 = vmatprep.subr.mxu0 0.0
  %5070 = vmatpush1.msra.mxu0 0.0
  %5071 = vmatprep.subr.mxu0 0.0
  %5072 = vmatpush1.msra.mxu0 0.0
  %5073 = vmatprep.subr.mxu0 0.0
  %5074 = vmatpush1.msra.mxu0 0.0
  %5075 = vmatprep.subr.mxu0 0.0
  %5076 = vmatpush1.msra.mxu0 0.0
  %5077 = vmatprep.subr.mxu0 0.0
  %5078 = vmatpush1.msra.mxu0 0.0
  %5079 = vmatprep.subr.mxu0 0.0
  %5080 = vmatpush1.msra.mxu0 0.0
  %5081 = vmatprep.subr.mxu0 0.0
  %5082 = vmatpush1.msra.mxu0 0.0
  %5083 = vmatprep.subr.mxu0 0.0
  %5084 = vmatpush1.msra.mxu0 0.0
  %5085 = vmatprep.subr.mxu0 0.0
  %5086 = vmatpush1.msra.mxu0 0.0
  %5087 = vmatprep.subr.mxu0 0.0
  %5088 = vmatpush1.msra.mxu0 0.0
  %5089 = vmatprep.subr.mxu0 0.0
  %5090 = vmatpush1.msra.mxu0 0.0
  %5091 = vmatprep.subr.mxu0 0.0
  %5092 = vmatpush1.msra.mxu0 0.0
  %5093 = vmatprep.subr.mxu0 0.0
  %5094 = vmatpush1.msra.mxu0 0.0
  %5095 = vmatprep.subr.mxu0 0.0
  %5096 = vmatpush1.msra.mxu0 0.0
  %5097 = vmatprep.subr.mxu0 0.0
  %5098 = vmatpush1.msra.mxu0 0.0
  %5099 = vmatprep.subr.mxu0 0.0
  %5100 = vmatpush1.msra.mxu0 0.0
  %5101 = vmatprep.subr.mxu0 0.0
  %5102 = vmatpush1.msra.mxu0 0.0
  %5103 = vmatprep.subr.mxu0 0.0
  %5104 = vmatpush1.msra.mxu0 0.0
  %5105 = vmatprep.subr.mxu0 0.0
  %5106 = vmatpush1.msra.mxu0 0.0
  %5107 = vmatprep.subr.mxu0 0.0
  %5108 = vmatpush1.msra.mxu0 0.0
  %5109 = vmatprep.subr.mxu0 0.0
  %5110 = vmatpush1.msra.mxu0 0.0
  %5111 = vmatprep.subr.mxu0 0.0
  %5112 = vmatpush1.msra.mxu0 0.0
  %5113 = vmatprep.subr.mxu0 0.0
  %5114 = vmatpush1.msra.mxu0 0.0
  %5115 = vmatprep.subr.mxu0 0.0
  %5116 = vmatpush1.msra.mxu0 0.0
  %5117 = vmatprep.subr.mxu0 0.0
  %5118 = vmatpush1.msra.mxu0 0.0
  %5119 = vmatprep.mubr.f32.mxu0 0.0
  %5120 = vmatmul.mubr.f32.gmra.mrb[0].mxu0 %v5050
  %v5121 = vpop.f32.mrb[0].mxu0
  %v5122 = vadd.f32 0.0, %v5121
  %v5123 = vpop.f32.mrb[0].mxu0
  %5124 = vmatprep.mubr.f32.mxu0 0.0
  %5125 = vmatmul.mubr.f32.gmra.mrb[0].mxu0 %v5053
  %v5126 = vpop.f32.mrb[0].mxu0
  %v5127 = vadd.f32 0.0, %v5126
  %v5128 = vpop.f32.mrb[0].mxu0
  %5129 = vdwg.mxu0
  %vm5130 = vcmask 15360
  %v5131 = vsel %vm5130, %v5122, -inf
  %vm5132 = vcmask 9216
  %v5133 = vsel %vm5132, %v5127, -inf
  %v5134 = vmax.f32 %v5131, %v5133
  %v5135 = vrot.slane %v5134, 4
  %v5136 = vmax.f32 %v5134, %v5135
  %v5137 = vrot.slane %v5136, 2
  %v5138 = vmax.f32 %v5136, %v5137
  %v5139 = vrot.slane %v5138, 1
  %v5140 = vmax.f32 %v5138, %v5139
  %v5141 = vsub.f32 %v5122, %v5140
  %v5142 = vsub.f32 %v5127, %v5140
  %v5143 = vmul.f32 %v5141, 1.442695
  %v5144 = vpow.pop %v5143
  %v5145 = vmul.f32 %v5142, 1.442695
  %v5146 = vpow.pop %v5145
  %v5147 = vsel %vm5130, %v5144, 0.0
  %v5148 = vsel %vm5132, %v5146, 0.0
  %v5149 = vadd.f32 %v5147, %v5148
  %v5150 = vrot.slane %v5149, 4
  %v5151 = vadd.f32 %v5149, %v5150
  %v5152 = vrot.slane %v5151, 2
  %v5153 = vadd.f32 %v5151, %v5152
  %v5154 = vrot.slane %v5153, 1
  %v5155 = vadd.f32 %v5153, %v5154
  %v5156 = vlog2.pop %v5155
  %v5157 = vmul.f32 %v5156, 0.6931472
  %v5158 = vsub.f32 %v5141, %v5157
  %v5159 = vsub.f32 %v5142, %v5157
  %5160 = vst.msk [vmem:[%s18] sm:$0xff] %vm5130, %v5158
  %5161 = vst.msk [vmem:[%s18 + $0x8] sm:$0x3] %vm5132, %v5159
  // Predicated region
  $region74: #{model3_forward.1} parent=0 // pred_check
    _
  $region75: #{model3_forward.1} parent=0 // pred_check_branch
    %5163 = sbr.rel (0) target = $region77
  $region76: #{model3_forward.1} parent=0 // pred_region
    _
  $region77: #{model3_forward.1} parent=0 // pred_fallthru
    _
  // Predicated region
  $region78: #{model3_forward.1} parent=0 // pred_check
    _
  $region79: #{model3_forward.1} parent=0 // pred_check_branch
    %5165 = sbr.rel (0) target = $region81
  $region80: #{model3_forward.1} parent=0 // pred_region
    _
  $region81: #{model3_forward.1} parent=0 // pred_fallthru
    _

</llo_original>
